<compile_context>
chip_gen: v6e
topology: v6e:2x2x1
jax: 0.10.0
libtpu: 0.0.40
codegen_flags: <defaults>
</compile_context>

<pallas_src>
import functools

import numpy as np
import jax
import jax.numpy as jnp
from jax.experimental import pallas as pl
from jax.experimental.pallas import tpu as pltpu


# --------------------------------------------------------------------------
# Model config (small synthetic Qwen3-style model)
# --------------------------------------------------------------------------
class Cfg:
    vocab_size = 512
    hidden_size = 128
    intermediate_size = 256
    num_hidden_layers = 2
    num_attention_heads = 4
    num_key_value_heads = 2
    head_dim = 32
    rms_norm_eps = 1e-6
    rope_theta = 1_000_000.0
    num_classes = 6
    cls_pad = 128            # lane-dense padded classifier width


# --------------------------------------------------------------------------
# Fused whole-model kernel: per grid step = (batch element b, layer l)
#   RMSNorm -> packed QKV -> segmented q/k-norm -> RoPE (rolls) ->
#   per-head masked softmax attention -> packed o-proj -> residual ->
#   RMSNorm -> gate/up -> SiLU -> down -> residual
#   at l == L-1: gather last valid token -> final RMSNorm -> classifier
# --------------------------------------------------------------------------
def _qwen3_fused_kernel(
    sl_ref,                                   # scalar prefetch (B,) int32 lengths
    x_ref,                                    # (1, S, H) bf16 embeddings
    ln1_ref, wqkv_ref, qn_ref, kn_ref, wo_ref,    # attention weights (layer block)
    ln2_ref, wgu_ref, wd_ref,                     # MLP weights (layer block)
    cos_ref, sina_ref, sinb_ref, seg_ref,         # RoPE / segmented-norm tables
    fln_ref, cw_ref, cb_ref,                      # final norm + classifier
    o_ref,                                    # (1, 1, CP) f32 logits output
    resid_ref,                                # VMEM scratch (S, H) f32 residual
    *, eps, num_heads, head_dim, inter,
):
    b = pl.program_id(0)
    l = pl.program_id(1)
    n_layers = pl.num_programs(1)
    D = head_dim
    ND = num_heads * D

    # ---- residual stream carried across layers in VMEM scratch ----
    @pl.when(l == 0)
    def _():
        resid_ref[...] = x_ref[0].astype(jnp.float32)

    x = resid_ref[...]                         # (S, H) f32
    S = x.shape[0]

    # ================= attention block =================
    ln1 = ln1_ref[0].astype(jnp.float32)       # (1, H)
    h = x * jax.lax.rsqrt(jnp.mean(x * x, axis=-1, keepdims=True) + eps)
    h = (h * ln1).astype(jnp.bfloat16)         # (S, H) bf16 -> MXU

    # single lane-dense QKV projection (bf16 in, f32 accumulate)
    qkv = jnp.dot(h, wqkv_ref[0], preferred_element_type=jnp.float32)   # (S, 3*ND)
    q = qkv[:, :ND]
    k = qkv[:, ND:2 * ND]
    v = qkv[:, 2 * ND:]

    # per-head RMSNorm on the packed arrays: segmented mean-of-squares via one
    # block-diagonal matmul (broadcast within each 32-lane head segment).
    seg = seg_ref[...]                         # (ND, ND) f32, blockdiag of 1/D
    q_ms = jnp.dot(q * q, seg, preferred_element_type=jnp.float32)
    k_ms = jnp.dot(k * k, seg, preferred_element_type=jnp.float32)
    qn = qn_ref[0]                             # (1, ND) f32 (1/sqrt(D) folded in)
    kn = kn_ref[0]                             # (1, ND) f32
    q = q * jax.lax.rsqrt(q_ms + eps) * qn
    k = k * jax.lax.rsqrt(k_ms + eps) * kn

    # RoPE on packed heads: rotate_half via two lane rolls (XLU) + masked sin
    # tables (VPU).  q_rope = q*cos + roll(q,+16)*(-sin on first half lanes)
    #                       + roll(q,-16)*(+sin on second half lanes)
    cos_t = cos_ref[...]                       # (S, ND)
    sin_a = sina_ref[...]                      # -sin on first-half lanes, 0 else
    sin_b = sinb_ref[...]                      # +sin on second-half lanes, 0 else
    q = q * cos_t + pltpu.roll(q, ND - D // 2, 1) * sin_a + pltpu.roll(q, D // 2, 1) * sin_b
    k = k * cos_t + pltpu.roll(k, ND - D // 2, 1) * sin_a + pltpu.roll(k, D // 2, 1) * sin_b

    q = q.astype(jnp.bfloat16)
    k = k.astype(jnp.bfloat16)
    v = v.astype(jnp.bfloat16)

    # causal + key-padding bias built in-kernel from the prefetched length
    sl = sl_ref[b]
    q_idx = jax.lax.broadcasted_iota(jnp.int32, (S, S), 0)
    k_idx = jax.lax.broadcasted_iota(jnp.int32, (S, S), 1)
    bias = jnp.where((k_idx <= q_idx) & (k_idx < sl), 0.0, -1e9).astype(jnp.float32)

    # per-head scores / softmax / PV (inherently per-head; bf16 MXU, f32 acc)
    outs = []
    for hh in range(num_heads):
        qh = q[:, hh * D:(hh + 1) * D]
        kh = k[:, hh * D:(hh + 1) * D]
        vh = v[:, hh * D:(hh + 1) * D]
        s = jax.lax.dot_general(qh, kh, (((1,), (1,)), ((), ())),
                                preferred_element_type=jnp.float32) + bias
        s = s - jnp.max(s, axis=-1, keepdims=True)
        p = jnp.exp(s)
        p = p * pl.reciprocal(jnp.sum(p, axis=-1, keepdims=True), approx=True)
        outs.append(jnp.dot(p.astype(jnp.bfloat16), vh,
                            preferred_element_type=jnp.float32))
    attn_p = jnp.concatenate(outs, axis=-1).astype(jnp.bfloat16)       # (S, ND)

    # single packed o-projection + residual add
    x = x + jnp.dot(attn_p, wo_ref[0], preferred_element_type=jnp.float32)

    # ================= MLP block =================
    ln2 = ln2_ref[0].astype(jnp.float32)
    hm = x * jax.lax.rsqrt(jnp.mean(x * x, axis=-1, keepdims=True) + eps)
    hm = (hm * ln2).astype(jnp.bfloat16)
    gu = jnp.dot(hm, wgu_ref[0], preferred_element_type=jnp.float32)    # (S, 2I)
    g = gu[:, :inter]
    u = gu[:, inter:]
    act = (g * jax.nn.sigmoid(g) * u).astype(jnp.bfloat16)              # SiLU*up
    x = x + jnp.dot(act, wd_ref[0], preferred_element_type=jnp.float32)

    resid_ref[...] = x

    # ============ final norm + classifier on the last valid token ============
    @pl.when(l == n_layers - 1)
    def _():
        row = jax.lax.broadcasted_iota(jnp.int32, (S, 1), 0)
        sel = (row == sl - 1).astype(jnp.float32)                       # (S, 1)
        last = jnp.sum(x * sel, axis=0, keepdims=True)                  # (1, H)
        hn = last * jax.lax.rsqrt(jnp.mean(last * last, axis=-1, keepdims=True) + eps)
        hn = (hn * fln_ref[...]).astype(jnp.bfloat16)
        logits = jnp.dot(hn, cw_ref[...], preferred_element_type=jnp.float32) + cb_ref[...]
        o_ref[0] = logits                                               # (1, CP) f32


def _fused_pallas_call(seq_len, x_emb, p, cos_t, sin_a, sin_b, seg, cfg):
    B, S, H = x_emb.shape
    NH, D = cfg.num_attention_heads, cfg.head_dim
    I, L = cfg.intermediate_size, cfg.num_hidden_layers
    ND = NH * D
    CP = cfg.cls_pad

    kernel = functools.partial(
        _qwen3_fused_kernel, eps=cfg.rms_norm_eps,
        num_heads=NH, head_dim=D, inter=I)

    def per_layer(*shape):      # layer-stacked weight, indexed by grid l
        zeros = (0,) * len(shape)
        return pl.BlockSpec((1,) + shape, lambda b, l, sl, _z=zeros: (l,) + _z)

    def shared(*shape):         # grid-invariant table (fetched once per core)
        zeros = (0,) * len(shape)
        return pl.BlockSpec(shape, lambda b, l, sl, _z=zeros: _z)

    grid_spec = pltpu.PrefetchScalarGridSpec(
        num_scalar_prefetch=1,
        grid=(B, L),
        in_specs=[
            pl.BlockSpec((1, S, H), lambda b, l, sl: (b, 0, 0)),   # embeddings
            per_layer(1, H),          # input_ln
            per_layer(H, 3 * ND),     # packed [q|k|v] projection
            per_layer(1, ND),         # q_norm (tiled, scale folded)
            per_layer(1, ND),         # k_norm (tiled)
            per_layer(ND, H),         # packed o-proj
            per_layer(1, H),          # post_ln
            per_layer(H, 2 * I),      # fused [gate|up]
            per_layer(I, H),          # down
            shared(S, ND),            # cos table (tiled per head)
            shared(S, ND),            # masked -sin table (first halves)
            shared(S, ND),            # masked +sin table (second halves)
            shared(ND, ND),           # block-diagonal segment-mean matrix
            shared(1, H),             # final RMSNorm weight
            shared(H, CP),            # classifier weight (padded to 128 lanes)
            shared(1, CP),            # classifier bias (padded)
        ],
        out_specs=pl.BlockSpec((1, 1, CP), lambda b, l, sl: (b, 0, 0)),
        scratch_shapes=[pltpu.VMEM((S, H), jnp.float32)],
    )
    return pl.pallas_call(
        kernel,
        grid_spec=grid_spec,
        out_shape=jax.ShapeDtypeStruct((B, 1, CP), jnp.float32),
        compiler_params=pltpu.CompilerParams(
            dimension_semantics=("parallel", "arbitrary")),
    )(seq_len, x_emb,
      p["ln1"], p["wqkv"], p["qn"], p["kn"], p["wo"],
      p["ln2"], p["wgu"], p["wd"],
      cos_t, sin_a, sin_b, seg,
      p["final_norm"], p["cls_w"], p["cls_b"])


# --------------------------------------------------------------------------
# Host-side constant tables (numpy -> compile-time constants)
# --------------------------------------------------------------------------
def rope_tables_packed(S, D, NH, theta):
    inv = 1.0 / (theta ** (np.arange(0, D, 2, dtype=np.float64) / D))
    t = np.arange(S, dtype=np.float64)
    freqs = np.outer(t, inv)                                 # (S, D/2)
    emb = np.concatenate([freqs, freqs], axis=-1)            # (S, D)
    cos = np.tile(np.cos(emb), (1, NH)).astype(np.float32)   # (S, NH*D)
    sin = np.tile(np.sin(emb), (1, NH)).astype(np.float32)
    lane = np.arange(NH * D) % D
    first = lane < (D // 2)
    sin_a = np.where(first[None, :], -sin, 0.0).astype(np.float32)
    sin_b = np.where(first[None, :], 0.0, sin).astype(np.float32)
    return jnp.asarray(cos), jnp.asarray(sin_a), jnp.asarray(sin_b)


def segment_mean_matrix(NH, D):
    ids = np.arange(NH * D) // D
    m = (ids[:, None] == ids[None, :]).astype(np.float32) / float(D)
    return jnp.asarray(m)


# --------------------------------------------------------------------------
# JAX glue: loss + full forward
# --------------------------------------------------------------------------
def cross_entropy(logits, labels):
    logp = jax.nn.log_softmax(logits, axis=-1)
    nll = -jnp.take_along_axis(logp, labels[:, None], axis=-1)[:, 0]
    return jnp.mean(nll)


def qwen3_forward(packed, input_ids, attention_mask, labels=None, cfg=Cfg):
    B, S = input_ids.shape
    NH, D = cfg.num_attention_heads, cfg.head_dim

    x = packed["embed"][input_ids]                              # (B, S, H) bf16 gather
    seq_len = attention_mask.sum(axis=1).astype(jnp.int32)      # (B,) right padding

    cos_t, sin_a, sin_b = rope_tables_packed(S, D, NH, cfg.rope_theta)
    seg = segment_mean_matrix(NH, D)

    logits_pad = _fused_pallas_call(seq_len, x, packed, cos_t, sin_a, sin_b, seg, cfg)
    logits = logits_pad.reshape(B, cfg.cls_pad)[:, :cfg.num_classes]   # (B, 6) f32

    loss = None
    if labels is not None:
        loss = cross_entropy(logits, labels)                    # CrossEntropyLoss (mean)
    return logits, loss


# --------------------------------------------------------------------------
# Parameter init (HF-like per-head layout) + one-time packing to kernel layout
# --------------------------------------------------------------------------
def init_params(key, cfg=Cfg):
    H, I = cfg.hidden_size, cfg.intermediate_size
    nh, nkv, hd = cfg.num_attention_heads, cfg.num_key_value_heads, cfg.head_dim

    def nrm(k, shape, dtype=jnp.bfloat16, scale=0.02):
        return (jax.random.normal(k, shape, jnp.float32) * scale).astype(dtype)

    n_keys = 3 + 6 * cfg.num_hidden_layers
    keys = jax.random.split(key, n_keys)
    ki = iter(range(n_keys))

    params = {
        "embed": nrm(keys[next(ki)], (cfg.vocab_size, H)),
        "final_norm": jnp.ones((H,), jnp.bfloat16),
        "cls_w": nrm(keys[next(ki)], (H, cfg.num_classes), jnp.float32, 0.05),
        "cls_b": jax.random.normal(keys[next(ki)], (cfg.num_classes,), jnp.float32) * 0.01,
        "layers": [],
    }
    for _ in range(cfg.num_hidden_layers):
        params["layers"].append({
            "input_ln": jnp.ones((H,), jnp.bfloat16),
            "post_ln": jnp.ones((H,), jnp.bfloat16),
            "q_norm": jnp.ones((hd,), jnp.bfloat16),
            "k_norm": jnp.ones((hd,), jnp.bfloat16),
            "wq": nrm(keys[next(ki)], (nh, H, hd)),
            "wk": nrm(keys[next(ki)], (nkv, H, hd)),
            "wv": nrm(keys[next(ki)], (nkv, H, hd)),
            "wo": nrm(keys[next(ki)], (nh, hd, H)),
            "wgu": nrm(keys[next(ki)], (H, 2 * I)),
            "wd": nrm(keys[next(ki)], (I, H)),
        })
    return params


def pack_params(params, cfg=Cfg):
    """One-time repacking into the lane-dense layouts the kernel expects."""
    H = cfg.hidden_size
    NH, NKV, D = cfg.num_attention_heads, cfg.num_key_value_heads, cfg.head_dim
    ND = NH * D
    group = NH // NKV
    scale = float(D) ** -0.5

    def stack(fn):
        return jnp.stack([fn(lp) for lp in params["layers"]], axis=0)

    def pack_heads(w):                      # (nheads, H, D) -> (H, nheads*D)
        return jnp.transpose(w, (1, 0, 2)).reshape(H, -1)

    def pack_qkv(lp):
        wq = pack_heads(lp["wq"])
        wk = pack_heads(jnp.repeat(lp["wk"], group, axis=0))   # GQA broadcast
        wv = pack_heads(jnp.repeat(lp["wv"], group, axis=0))
        return jnp.concatenate([wq, wk, wv], axis=1)           # (H, 3*ND)

    cls_w = jnp.zeros((H, cfg.cls_pad), jnp.bfloat16)
    cls_w = cls_w.at[:, :cfg.num_classes].set(params["cls_w"].astype(jnp.bfloat16))
    cls_b = jnp.zeros((1, cfg.cls_pad), jnp.float32)
    cls_b = cls_b.at[0, :cfg.num_classes].set(params["cls_b"])

    return {
        "embed": params["embed"],
        "ln1": stack(lambda lp: lp["input_ln"].reshape(1, H)),
        "ln2": stack(lambda lp: lp["post_ln"].reshape(1, H)),
        "wqkv": stack(pack_qkv),
        # 1/sqrt(head_dim) folded into the (tiled) q_norm weights
        "qn": stack(lambda lp: (jnp.tile(lp["q_norm"].astype(jnp.float32), NH)
                                * scale).reshape(1, ND)),
        "kn": stack(lambda lp: jnp.tile(lp["k_norm"].astype(jnp.float32), NH)
                    .reshape(1, ND)),
        "wo": stack(lambda lp: lp["wo"].reshape(ND, H)),
        "wgu": stack(lambda lp: lp["wgu"]),
        "wd": stack(lambda lp: lp["wd"]),
        "final_norm": params["final_norm"].astype(jnp.float32).reshape(1, H),
        "cls_w": cls_w,
        "cls_b": cls_b,
    }


# --------------------------------------------------------------------------
# Main
# --------------------------------------------------------------------------
if __name__ == "__main__":
    key = jax.random.PRNGKey(0)
    pkey, ikey = jax.random.split(key)

    cfg = Cfg
    B, S = 2, 8

    params = init_params(pkey, cfg)
    packed = pack_params(params, cfg)

    input_ids = jax.random.randint(ikey, (B, S), 0, cfg.vocab_size, dtype=jnp.int32)
    # second sequence has 3 padding tokens at the end (right padding)
    attention_mask = jnp.array(
        [[1, 1, 1, 1, 1, 1, 1, 1],
         [1, 1, 1, 1, 1, 0, 0, 0]], dtype=jnp.int32
    )
    labels = jnp.array([1, 4], dtype=jnp.int32)

    fwd = jax.jit(qwen3_forward)
    logits, loss = fwd(packed, input_ids, attention_mask, labels)
    jax.block_until_ready((logits, loss))

    assert logits.shape == (B, cfg.num_classes) and logits.dtype == jnp.float32
    assert loss.shape == () and bool(jnp.isfinite(loss))
    # TODO(synk): HF checkpoint loading / tokenizer path (and returning the full
    # per-layer hidden_states tuple) has no Pallas equivalent; weights are
    # synthetic deterministic bf16 Qwen3-style parameters and only logits/loss
    # are produced.
    print("KERNEL_OK")
</pallas_src>

<mosaic_0001>
module attributes {stable_mosaic.version = 11 : i64} {
  func.func @_qwen3_fused_kernel(%arg0: i32, %arg1: i32, %arg2: memref<2xi32, #tpu.memory_space<smem>>, %arg3: memref<1x8x128xbf16, #tpu.memory_space<vmem>>, %arg4: memref<1x1x128xbf16, #tpu.memory_space<vmem>>, %arg5: memref<1x128x384xbf16, #tpu.memory_space<vmem>>, %arg6: memref<1x1x128xf32, #tpu.memory_space<vmem>>, %arg7: memref<1x1x128xf32, #tpu.memory_space<vmem>>, %arg8: memref<1x128x128xbf16, #tpu.memory_space<vmem>>, %arg9: memref<1x1x128xbf16, #tpu.memory_space<vmem>>, %arg10: memref<1x128x512xbf16, #tpu.memory_space<vmem>>, %arg11: memref<1x256x128xbf16, #tpu.memory_space<vmem>>, %arg12: memref<8x128xf32, #tpu.memory_space<vmem>>, %arg13: memref<8x128xf32, #tpu.memory_space<vmem>>, %arg14: memref<8x128xf32, #tpu.memory_space<vmem>>, %arg15: memref<128x128xf32, #tpu.memory_space<vmem>>, %arg16: memref<1x128xf32, #tpu.memory_space<vmem>>, %arg17: memref<128x128xbf16, #tpu.memory_space<vmem>>, %arg18: memref<1x128xf32, #tpu.memory_space<vmem>>, %arg19: memref<1x1x128xf32, #tpu.memory_space<vmem>>, %arg20: memref<8x128xf32, #tpu.memory_space<vmem>>) attributes {dimension_semantics = [#tpu.dimension_semantics<parallel>, #tpu.dimension_semantics<arbitrary>], iteration_bounds = array<i64: 2, 2>, scalar_prefetch = 1 : i64, scratch_operands = 1 : i64, tpu.core_type = #tpu.core_type<tc>, window_params = [{transform_indices = @transform_0, window_bounds = array<i64: 1, 8, 128>}, {transform_indices = @transform_1, window_bounds = array<i64: 1, 1, 128>}, {transform_indices = @transform_2, window_bounds = array<i64: 1, 128, 384>}, {transform_indices = @transform_3, window_bounds = array<i64: 1, 1, 128>}, {transform_indices = @transform_4, window_bounds = array<i64: 1, 1, 128>}, {transform_indices = @transform_5, window_bounds = array<i64: 1, 128, 128>}, {transform_indices = @transform_6, window_bounds = array<i64: 1, 1, 128>}, {transform_indices = @transform_7, window_bounds = array<i64: 1, 128, 512>}, {transform_indices = @transform_8, window_bounds = array<i64: 1, 256, 128>}, {pipeline_mode = #tpu.pipeline_mode<synchronous>, transform_indices = @transform_9, window_bounds = array<i64: 8, 128>}, {pipeline_mode = #tpu.pipeline_mode<synchronous>, transform_indices = @transform_10, window_bounds = array<i64: 8, 128>}, {pipeline_mode = #tpu.pipeline_mode<synchronous>, transform_indices = @transform_11, window_bounds = array<i64: 8, 128>}, {pipeline_mode = #tpu.pipeline_mode<synchronous>, transform_indices = @transform_12, window_bounds = array<i64: 128, 128>}, {pipeline_mode = #tpu.pipeline_mode<synchronous>, transform_indices = @transform_13, window_bounds = array<i64: 1, 128>}, {pipeline_mode = #tpu.pipeline_mode<synchronous>, transform_indices = @transform_14, window_bounds = array<i64: 128, 128>}, {pipeline_mode = #tpu.pipeline_mode<synchronous>, transform_indices = @transform_15, window_bounds = array<i64: 1, 128>}, {transform_indices = @transform_16, window_bounds = array<i64: 1, 1, 128>}]} {
    %c0_i32 = arith.constant 0 : i32
    %0 = arith.cmpi eq, %arg1, %c0_i32 : i32
    %1 = arith.extui %0 : i1 to i32
    %c0_i32_0 = arith.constant 0 : i32
    %2 = arith.cmpi ne, %1, %c0_i32_0 : i32
    scf.if %2 {
      %c0_71 = arith.constant 0 : index
      %c0_72 = arith.constant 0 : index
      %c0_73 = arith.constant 0 : index
      %189 = vector.load %arg3[%c0_71, %c0_72, %c0_73] : memref<1x8x128xbf16, #tpu.memory_space<vmem>>, vector<1x8x128xbf16>
      %190 = vector.shape_cast %189 : vector<1x8x128xbf16> to vector<8x128xbf16>
      %191 = arith.extf %190 : vector<8x128xbf16> to vector<8x128xf32>
      %c0_74 = arith.constant 0 : index
      %c0_75 = arith.constant 0 : index
      %192 = vector.load %arg20[%c0_74, %c0_75] : memref<8x128xf32, #tpu.memory_space<vmem>>, vector<8x128xf32>
      tpu.vector_store %arg20[%c0_74, %c0_75], %191 {strides = array<i32>} : memref<8x128xf32, #tpu.memory_space<vmem>>, vector<8x128xf32>,
    } else {
    }
    %c0 = arith.constant 0 : index
    %c0_1 = arith.constant 0 : index
    %3 = vector.load %arg20[%c0, %c0_1] : memref<8x128xf32, #tpu.memory_space<vmem>>, vector<8x128xf32>
    %c0_2 = arith.constant 0 : index
    %c0_3 = arith.constant 0 : index
    %c0_4 = arith.constant 0 : index
    %4 = vector.load %arg4[%c0_2, %c0_3, %c0_4] : memref<1x1x128xbf16, #tpu.memory_space<vmem>>, vector<1x1x128xbf16>
    %5 = vector.shape_cast %4 : vector<1x1x128xbf16> to vector<1x128xbf16>
    %6 = arith.extf %5 : vector<1x128xbf16> to vector<1x128xf32>
    %7 = arith.mulf %3, %3 : vector<8x128xf32>
    %cst = arith.constant dense<0.000000e+00> : vector<8xf32>
    %8 = vector.multi_reduction <add>, %7, %cst [1] : vector<8x128xf32> to vector<8xf32>
    %9 = vector.shape_cast %8 : vector<8xf32> to vector<8x1xf32>
    %cst_5 = arith.constant 1.280000e+02 : f32
    %10 = vector.broadcast %cst_5 : f32 to vector<8x1xf32>
    %11 = arith.divf %9, %10 : vector<8x1xf32>
    %cst_6 = arith.constant 9.99999997E-7 : f32
    %12 = vector.broadcast %cst_6 : f32 to vector<8x1xf32>
    %13 = arith.addf %11, %12 : vector<8x1xf32>
    %14 = math.rsqrt %13 : vector<8x1xf32>
    %15 = vector.broadcast %14 : vector<8x1xf32> to vector<8x128xf32>
    %16 = arith.mulf %3, %15 : vector<8x128xf32>
    %17 = vector.broadcast %6 : vector<1x128xf32> to vector<8x128xf32>
    %18 = arith.mulf %16, %17 : vector<8x128xf32>
    %19 = arith.truncf %18 : vector<8x128xf32> to vector<8x128xbf16>
    %c0_7 = arith.constant 0 : index
    %c0_8 = arith.constant 0 : index
    %c0_9 = arith.constant 0 : index
    %20 = vector.load %arg5[%c0_7, %c0_8, %c0_9] : memref<1x128x384xbf16, #tpu.memory_space<vmem>>, vector<1x128x384xbf16>
    %21 = vector.shape_cast %20 : vector<1x128x384xbf16> to vector<128x384xbf16>
    %cst_10 = arith.constant dense<0.000000e+00> : vector<8x384xf32>
    %22 = tpu.matmul %19, %21, %cst_10 {dimension_numbers = #tpu.dot_dimension_numbers<[1], [0], [0], [1], [0, 0, 1, 1], [], []>} : vector<8x128xbf16>, vector<128x384xbf16>, vector<8x384xf32> -> vector<8x384xf32>
    %23 = vector.extract_strided_slice %22 {offsets = [0, 0], sizes = [8, 128], strides = [1, 1]} : vector<8x384xf32> to vector<8x128xf32>
    %24 = vector.extract_strided_slice %22 {offsets = [0, 128], sizes = [8, 128], strides = [1, 1]} : vector<8x384xf32> to vector<8x128xf32>
    %25 = vector.extract_strided_slice %22 {offsets = [0, 256], sizes = [8, 128], strides = [1, 1]} : vector<8x384xf32> to vector<8x128xf32>
    %c0_11 = arith.constant 0 : index
    %c0_12 = arith.constant 0 : index
    %26 = vector.load %arg15[%c0_11, %c0_12] : memref<128x128xf32, #tpu.memory_space<vmem>>, vector<128x128xf32>
    %27 = arith.mulf %23, %23 : vector<8x128xf32>
    %cst_13 = arith.constant dense<0.000000e+00> : vector<8x128xf32>
    %28 = tpu.matmul %27, %26, %cst_13 {dimension_numbers = #tpu.dot_dimension_numbers<[1], [0], [0], [1], [0, 0, 1, 1], [], []>} : vector<8x128xf32>, vector<128x128xf32>, vector<8x128xf32> -> vector<8x128xf32>
    %29 = arith.mulf %24, %24 : vector<8x128xf32>
    %cst_14 = arith.constant dense<0.000000e+00> : vector<8x128xf32>
    %30 = tpu.matmul %29, %26, %cst_14 {dimension_numbers = #tpu.dot_dimension_numbers<[1], [0], [0], [1], [0, 0, 1, 1], [], []>} : vector<8x128xf32>, vector<128x128xf32>, vector<8x128xf32> -> vector<8x128xf32>
    %c0_15 = arith.constant 0 : index
    %c0_16 = arith.constant 0 : index
    %c0_17 = arith.constant 0 : index
    %31 = vector.load %arg6[%c0_15, %c0_16, %c0_17] : memref<1x1x128xf32, #tpu.memory_space<vmem>>, vector<1x1x128xf32>
    %32 = vector.shape_cast %31 : vector<1x1x128xf32> to vector<1x128xf32>
    %c0_18 = arith.constant 0 : index
    %c0_19 = arith.constant 0 : index
    %c0_20 = arith.constant 0 : index
    %33 = vector.load %arg7[%c0_18, %c0_19, %c0_20] : memref<1x1x128xf32, #tpu.memory_space<vmem>>, vector<1x1x128xf32>
    %34 = vector.shape_cast %33 : vector<1x1x128xf32> to vector<1x128xf32>
    %cst_21 = arith.constant 9.99999997E-7 : f32
    %35 = vector.broadcast %cst_21 : f32 to vector<8x128xf32>
    %36 = arith.addf %28, %35 : vector<8x128xf32>
    %37 = math.rsqrt %36 : vector<8x128xf32>
    %38 = arith.mulf %23, %37 : vector<8x128xf32>
    %39 = vector.broadcast %32 : vector<1x128xf32> to vector<8x128xf32>
    %40 = arith.mulf %38, %39 : vector<8x128xf32>
    %cst_22 = arith.constant 9.99999997E-7 : f32
    %41 = vector.broadcast %cst_22 : f32 to vector<8x128xf32>
    %42 = arith.addf %30, %41 : vector<8x128xf32>
    %43 = math.rsqrt %42 : vector<8x128xf32>
    %44 = arith.mulf %24, %43 : vector<8x128xf32>
    %45 = vector.broadcast %34 : vector<1x128xf32> to vector<8x128xf32>
    %46 = arith.mulf %44, %45 : vector<8x128xf32>
    %c0_23 = arith.constant 0 : index
    %c0_24 = arith.constant 0 : index
    %47 = vector.load %arg12[%c0_23, %c0_24] : memref<8x128xf32, #tpu.memory_space<vmem>>, vector<8x128xf32>
    %c0_25 = arith.constant 0 : index
    %c0_26 = arith.constant 0 : index
    %48 = vector.load %arg13[%c0_25, %c0_26] : memref<8x128xf32, #tpu.memory_space<vmem>>, vector<8x128xf32>
    %c0_27 = arith.constant 0 : index
    %c0_28 = arith.constant 0 : index
    %49 = vector.load %arg14[%c0_27, %c0_28] : memref<8x128xf32, #tpu.memory_space<vmem>>, vector<8x128xf32>
    %50 = arith.mulf %40, %47 : vector<8x128xf32>
    %c112_i32 = arith.constant 112 : i32
    %51 = tpu.dynamic_rotate %40 by %c112_i32 dim 1 : vector<8x128xf32>, i32 -> vector<8x128xf32>
    %52 = arith.mulf %51, %48 : vector<8x128xf32>
    %53 = arith.addf %50, %52 : vector<8x128xf32>
    %c16_i32 = arith.constant 16 : i32
    %54 = tpu.dynamic_rotate %40 by %c16_i32 dim 1 : vector<8x128xf32>, i32 -> vector<8x128xf32>
    %55 = arith.mulf %54, %49 : vector<8x128xf32>
    %56 = arith.addf %53, %55 : vector<8x128xf32>
    %57 = arith.mulf %46, %47 : vector<8x128xf32>
    %c112_i32_29 = arith.constant 112 : i32
    %58 = tpu.dynamic_rotate %46 by %c112_i32_29 dim 1 : vector<8x128xf32>, i32 -> vector<8x128xf32>
    %59 = arith.mulf %58, %48 : vector<8x128xf32>
    %60 = arith.addf %57, %59 : vector<8x128xf32>
    %c16_i32_30 = arith.constant 16 : i32
    %61 = tpu.dynamic_rotate %46 by %c16_i32_30 dim 1 : vector<8x128xf32>, i32 -> vector<8x128xf32>
    %62 = arith.mulf %61, %49 : vector<8x128xf32>
    %63 = arith.addf %60, %62 : vector<8x128xf32>
    %64 = arith.truncf %56 : vector<8x128xf32> to vector<8x128xbf16>
    %65 = arith.truncf %63 : vector<8x128xf32> to vector<8x128xbf16>
    %66 = arith.truncf %25 : vector<8x128xf32> to vector<8x128xbf16>
    %67 = arith.index_cast %arg0 : i32 to index
    %68 = memref.load %arg2[%67] : memref<2xi32, #tpu.memory_space<smem>>
    %69 = tpu.iota {dimensions = array<i32: 0>} : vector<8x8xi32>
    %70 = tpu.iota {dimensions = array<i32: 1>} : vector<8x8xi32>
    %71 = arith.cmpi sle, %70, %69 : vector<8x8xi32>
    %72 = vector.broadcast %68 : i32 to vector<8x8xi32>
    %73 = arith.cmpi slt, %70, %72 : vector<8x8xi32>
    %74 = arith.andi %71, %73 : vector<8x8xi1>
    %cst_31 = arith.constant 0.000000e+00 : f32
    %cst_32 = arith.constant -1.000000e+09 : f32
    %75 = vector.broadcast %cst_31 : f32 to vector<8x8xf32>
    %76 = vector.broadcast %cst_32 : f32 to vector<8x8xf32>
    %77 = arith.select %74, %75, %76 : vector<8x8xi1>, vector<8x8xf32>
    %78 = vector.extract_strided_slice %64 {offsets = [0, 0], sizes = [8, 32], strides = [1, 1]} : vector<8x128xbf16> to vector<8x32xbf16>
    %79 = vector.extract_strided_slice %65 {offsets = [0, 0], sizes = [8, 32], strides = [1, 1]} : vector<8x128xbf16> to vector<8x32xbf16>
    %80 = vector.extract_strided_slice %66 {offsets = [0, 0], sizes = [8, 32], strides = [1, 1]} : vector<8x128xbf16> to vector<8x32xbf16>
    %cst_33 = arith.constant dense<0.000000e+00> : vector<8x8xf32>
    %81 = tpu.matmul %78, %79, %cst_33 {dimension_numbers = #tpu.dot_dimension_numbers<[1], [1], [0], [0], [0, 0, 1, 0], [], []>} : vector<8x32xbf16>, vector<8x32xbf16>, vector<8x8xf32> -> vector<8x8xf32>
    %82 = arith.addf %81, %77 : vector<8x8xf32>
    %cst_34 = arith.constant dense<0xFF800000> : vector<8xf32>
    %83 = vector.multi_reduction <maximumf>, %82, %cst_34 [1] : vector<8x8xf32> to vector<8xf32>
    %84 = vector.shape_cast %83 : vector<8xf32> to vector<8x1xf32>
    %85 = vector.broadcast %84 : vector<8x1xf32> to vector<8x8xf32>
    %86 = arith.subf %82, %85 : vector<8x8xf32>
    %87 = math.exp %86 : vector<8x8xf32>
    %cst_35 = arith.constant dense<0.000000e+00> : vector<8xf32>
    %88 = vector.multi_reduction <add>, %87, %cst_35 [1] : vector<8x8xf32> to vector<8xf32>
    %89 = vector.shape_cast %88 : vector<8xf32> to vector<8x1xf32>
    %90 = tpu.reciprocal %89 {approx = true} : vector<8x1xf32> -> vector<8x1xf32>
    %91 = vector.broadcast %90 : vector<8x1xf32> to vector<8x8xf32>
    %92 = arith.mulf %87, %91 : vector<8x8xf32>
    %93 = arith.truncf %92 : vector<8x8xf32> to vector<8x8xbf16>
    %cst_36 = arith.constant dense<0.000000e+00> : vector<8x32xf32>
    %94 = tpu.matmul %93, %80, %cst_36 {dimension_numbers = #tpu.dot_dimension_numbers<[1], [0], [0], [1], [0, 0, 1, 1], [], []>} : vector<8x8xbf16>, vector<8x32xbf16>, vector<8x32xf32> -> vector<8x32xf32>
    %95 = vector.extract_strided_slice %64 {offsets = [0, 32], sizes = [8, 32], strides = [1, 1]} : vector<8x128xbf16> to vector<8x32xbf16>
    %96 = vector.extract_strided_slice %65 {offsets = [0, 32], sizes = [8, 32], strides = [1, 1]} : vector<8x128xbf16> to vector<8x32xbf16>
    %97 = vector.extract_strided_slice %66 {offsets = [0, 32], sizes = [8, 32], strides = [1, 1]} : vector<8x128xbf16> to vector<8x32xbf16>
    %cst_37 = arith.constant dense<0.000000e+00> : vector<8x8xf32>
    %98 = tpu.matmul %95, %96, %cst_37 {dimension_numbers = #tpu.dot_dimension_numbers<[1], [1], [0], [0], [0, 0, 1, 0], [], []>} : vector<8x32xbf16>, vector<8x32xbf16>, vector<8x8xf32> -> vector<8x8xf32>
    %99 = arith.addf %98, %77 : vector<8x8xf32>
    %cst_38 = arith.constant dense<0xFF800000> : vector<8xf32>
    %100 = vector.multi_reduction <maximumf>, %99, %cst_38 [1] : vector<8x8xf32> to vector<8xf32>
    %101 = vector.shape_cast %100 : vector<8xf32> to vector<8x1xf32>
    %102 = vector.broadcast %101 : vector<8x1xf32> to vector<8x8xf32>
    %103 = arith.subf %99, %102 : vector<8x8xf32>
    %104 = math.exp %103 : vector<8x8xf32>
    %cst_39 = arith.constant dense<0.000000e+00> : vector<8xf32>
    %105 = vector.multi_reduction <add>, %104, %cst_39 [1] : vector<8x8xf32> to vector<8xf32>
    %106 = vector.shape_cast %105 : vector<8xf32> to vector<8x1xf32>
    %107 = tpu.reciprocal %106 {approx = true} : vector<8x1xf32> -> vector<8x1xf32>
    %108 = vector.broadcast %107 : vector<8x1xf32> to vector<8x8xf32>
    %109 = arith.mulf %104, %108 : vector<8x8xf32>
    %110 = arith.truncf %109 : vector<8x8xf32> to vector<8x8xbf16>
    %cst_40 = arith.constant dense<0.000000e+00> : vector<8x32xf32>
    %111 = tpu.matmul %110, %97, %cst_40 {dimension_numbers = #tpu.dot_dimension_numbers<[1], [0], [0], [1], [0, 0, 1, 1], [], []>} : vector<8x8xbf16>, vector<8x32xbf16>, vector<8x32xf32> -> vector<8x32xf32>
    %112 = vector.extract_strided_slice %64 {offsets = [0, 64], sizes = [8, 32], strides = [1, 1]} : vector<8x128xbf16> to vector<8x32xbf16>
    %113 = vector.extract_strided_slice %65 {offsets = [0, 64], sizes = [8, 32], strides = [1, 1]} : vector<8x128xbf16> to vector<8x32xbf16>
    %114 = vector.extract_strided_slice %66 {offsets = [0, 64], sizes = [8, 32], strides = [1, 1]} : vector<8x128xbf16> to vector<8x32xbf16>
    %cst_41 = arith.constant dense<0.000000e+00> : vector<8x8xf32>
    %115 = tpu.matmul %112, %113, %cst_41 {dimension_numbers = #tpu.dot_dimension_numbers<[1], [1], [0], [0], [0, 0, 1, 0], [], []>} : vector<8x32xbf16>, vector<8x32xbf16>, vector<8x8xf32> -> vector<8x8xf32>
    %116 = arith.addf %115, %77 : vector<8x8xf32>
    %cst_42 = arith.constant dense<0xFF800000> : vector<8xf32>
    %117 = vector.multi_reduction <maximumf>, %116, %cst_42 [1] : vector<8x8xf32> to vector<8xf32>
    %118 = vector.shape_cast %117 : vector<8xf32> to vector<8x1xf32>
    %119 = vector.broadcast %118 : vector<8x1xf32> to vector<8x8xf32>
    %120 = arith.subf %116, %119 : vector<8x8xf32>
    %121 = math.exp %120 : vector<8x8xf32>
    %cst_43 = arith.constant dense<0.000000e+00> : vector<8xf32>
    %122 = vector.multi_reduction <add>, %121, %cst_43 [1] : vector<8x8xf32> to vector<8xf32>
    %123 = vector.shape_cast %122 : vector<8xf32> to vector<8x1xf32>
    %124 = tpu.reciprocal %123 {approx = true} : vector<8x1xf32> -> vector<8x1xf32>
    %125 = vector.broadcast %124 : vector<8x1xf32> to vector<8x8xf32>
    %126 = arith.mulf %121, %125 : vector<8x8xf32>
    %127 = arith.truncf %126 : vector<8x8xf32> to vector<8x8xbf16>
    %cst_44 = arith.constant dense<0.000000e+00> : vector<8x32xf32>
    %128 = tpu.matmul %127, %114, %cst_44 {dimension_numbers = #tpu.dot_dimension_numbers<[1], [0], [0], [1], [0, 0, 1, 1], [], []>} : vector<8x8xbf16>, vector<8x32xbf16>, vector<8x32xf32> -> vector<8x32xf32>
    %129 = vector.extract_strided_slice %64 {offsets = [0, 96], sizes = [8, 32], strides = [1, 1]} : vector<8x128xbf16> to vector<8x32xbf16>
    %130 = vector.extract_strided_slice %65 {offsets = [0, 96], sizes = [8, 32], strides = [1, 1]} : vector<8x128xbf16> to vector<8x32xbf16>
    %131 = vector.extract_strided_slice %66 {offsets = [0, 96], sizes = [8, 32], strides = [1, 1]} : vector<8x128xbf16> to vector<8x32xbf16>
    %cst_45 = arith.constant dense<0.000000e+00> : vector<8x8xf32>
    %132 = tpu.matmul %129, %130, %cst_45 {dimension_numbers = #tpu.dot_dimension_numbers<[1], [1], [0], [0], [0, 0, 1, 0], [], []>} : vector<8x32xbf16>, vector<8x32xbf16>, vector<8x8xf32> -> vector<8x8xf32>
    %133 = arith.addf %132, %77 : vector<8x8xf32>
    %cst_46 = arith.constant dense<0xFF800000> : vector<8xf32>
    %134 = vector.multi_reduction <maximumf>, %133, %cst_46 [1] : vector<8x8xf32> to vector<8xf32>
    %135 = vector.shape_cast %134 : vector<8xf32> to vector<8x1xf32>
    %136 = vector.broadcast %135 : vector<8x1xf32> to vector<8x8xf32>
    %137 = arith.subf %133, %136 : vector<8x8xf32>
    %138 = math.exp %137 : vector<8x8xf32>
    %cst_47 = arith.constant dense<0.000000e+00> : vector<8xf32>
    %139 = vector.multi_reduction <add>, %138, %cst_47 [1] : vector<8x8xf32> to vector<8xf32>
    %140 = vector.shape_cast %139 : vector<8xf32> to vector<8x1xf32>
    %141 = tpu.reciprocal %140 {approx = true} : vector<8x1xf32> -> vector<8x1xf32>
    %142 = vector.broadcast %141 : vector<8x1xf32> to vector<8x8xf32>
    %143 = arith.mulf %138, %142 : vector<8x8xf32>
    %144 = arith.truncf %143 : vector<8x8xf32> to vector<8x8xbf16>
    %cst_48 = arith.constant dense<0.000000e+00> : vector<8x32xf32>
    %145 = tpu.matmul %144, %131, %cst_48 {dimension_numbers = #tpu.dot_dimension_numbers<[1], [0], [0], [1], [0, 0, 1, 1], [], []>} : vector<8x8xbf16>, vector<8x32xbf16>, vector<8x32xf32> -> vector<8x32xf32>
    %146 = tpu.concatenate %94, %111, %128, %145 in 1 : vector<8x32xf32>, vector<8x32xf32>, vector<8x32xf32>, vector<8x32xf32> -> vector<8x128xf32>
    %147 = arith.truncf %146 : vector<8x128xf32> to vector<8x128xbf16>
    %c0_49 = arith.constant 0 : index
    %c0_50 = arith.constant 0 : index
    %c0_51 = arith.constant 0 : index
    %148 = vector.load %arg8[%c0_49, %c0_50, %c0_51] : memref<1x128x128xbf16, #tpu.memory_space<vmem>>, vector<1x128x128xbf16>
    %149 = vector.shape_cast %148 : vector<1x128x128xbf16> to vector<128x128xbf16>
    %cst_52 = arith.constant dense<0.000000e+00> : vector<8x128xf32>
    %150 = tpu.matmul %147, %149, %cst_52 {dimension_numbers = #tpu.dot_dimension_numbers<[1], [0], [0], [1], [0, 0, 1, 1], [], []>} : vector<8x128xbf16>, vector<128x128xbf16>, vector<8x128xf32> -> vector<8x128xf32>
    %151 = arith.addf %3, %150 : vector<8x128xf32>
    %c0_53 = arith.constant 0 : index
    %c0_54 = arith.constant 0 : index
    %c0_55 = arith.constant 0 : index
    %152 = vector.load %arg9[%c0_53, %c0_54, %c0_55] : memref<1x1x128xbf16, #tpu.memory_space<vmem>>, vector<1x1x128xbf16>
    %153 = vector.shape_cast %152 : vector<1x1x128xbf16> to vector<1x128xbf16>
    %154 = arith.extf %153 : vector<1x128xbf16> to vector<1x128xf32>
    %155 = arith.mulf %151, %151 : vector<8x128xf32>
    %cst_56 = arith.constant dense<0.000000e+00> : vector<8xf32>
    %156 = vector.multi_reduction <add>, %155, %cst_56 [1] : vector<8x128xf32> to vector<8xf32>
    %157 = vector.shape_cast %156 : vector<8xf32> to vector<8x1xf32>
    %cst_57 = arith.constant 1.280000e+02 : f32
    %158 = vector.broadcast %cst_57 : f32 to vector<8x1xf32>
    %159 = arith.divf %157, %158 : vector<8x1xf32>
    %cst_58 = arith.constant 9.99999997E-7 : f32
    %160 = vector.broadcast %cst_58 : f32 to vector<8x1xf32>
    %161 = arith.addf %159, %160 : vector<8x1xf32>
    %162 = math.rsqrt %161 : vector<8x1xf32>
    %163 = vector.broadcast %162 : vector<8x1xf32> to vector<8x128xf32>
    %164 = arith.mulf %151, %163 : vector<8x128xf32>
    %165 = vector.broadcast %154 : vector<1x128xf32> to vector<8x128xf32>
    %166 = arith.mulf %164, %165 : vector<8x128xf32>
    %167 = arith.truncf %166 : vector<8x128xf32> to vector<8x128xbf16>
    %c0_59 = arith.constant 0 : index
    %c0_60 = arith.constant 0 : index
    %c0_61 = arith.constant 0 : index
    %168 = vector.load %arg10[%c0_59, %c0_60, %c0_61] : memref<1x128x512xbf16, #tpu.memory_space<vmem>>, vector<1x128x512xbf16>
    %169 = vector.shape_cast %168 : vector<1x128x512xbf16> to vector<128x512xbf16>
    %cst_62 = arith.constant dense<0.000000e+00> : vector<8x512xf32>
    %170 = tpu.matmul %167, %169, %cst_62 {dimension_numbers = #tpu.dot_dimension_numbers<[1], [0], [0], [1], [0, 0, 1, 1], [], []>} : vector<8x128xbf16>, vector<128x512xbf16>, vector<8x512xf32> -> vector<8x512xf32>
    %171 = vector.extract_strided_slice %170 {offsets = [0, 0], sizes = [8, 256], strides = [1, 1]} : vector<8x512xf32> to vector<8x256xf32>
    %172 = vector.extract_strided_slice %170 {offsets = [0, 256], sizes = [8, 256], strides = [1, 1]} : vector<8x512xf32> to vector<8x256xf32>
    %173 = arith.negf %171 : vector<8x256xf32>
    %174 = math.exp %173 : vector<8x256xf32>
    %cst_63 = arith.constant 1.000000e+00 : f32
    %175 = vector.broadcast %cst_63 : f32 to vector<8x256xf32>
    %176 = arith.addf %175, %174 : vector<8x256xf32>
    %177 = arith.divf %175, %176 : vector<8x256xf32>
    %178 = arith.mulf %171, %177 : vector<8x256xf32>
    %179 = arith.mulf %178, %172 : vector<8x256xf32>
    %180 = arith.truncf %179 : vector<8x256xf32> to vector<8x256xbf16>
    %c0_64 = arith.constant 0 : index
    %c0_65 = arith.constant 0 : index
    %c0_66 = arith.constant 0 : index
    %181 = vector.load %arg11[%c0_64, %c0_65, %c0_66] : memref<1x256x128xbf16, #tpu.memory_space<vmem>>, vector<1x256x128xbf16>
    %182 = vector.shape_cast %181 : vector<1x256x128xbf16> to vector<256x128xbf16>
    %cst_67 = arith.constant dense<0.000000e+00> : vector<8x128xf32>
    %183 = tpu.matmul %180, %182, %cst_67 {dimension_numbers = #tpu.dot_dimension_numbers<[1], [0], [0], [1], [0, 0, 1, 1], [], []>} : vector<8x256xbf16>, vector<256x128xbf16>, vector<8x128xf32> -> vector<8x128xf32>
    %184 = arith.addf %151, %183 : vector<8x128xf32>
    %c0_68 = arith.constant 0 : index
    %c0_69 = arith.constant 0 : index
    %185 = vector.load %arg20[%c0_68, %c0_69] : memref<8x128xf32, #tpu.memory_space<vmem>>, vector<8x128xf32>
    tpu.vector_store %arg20[%c0_68, %c0_69], %184 {strides = array<i32>} : memref<8x128xf32, #tpu.memory_space<vmem>>, vector<8x128xf32>,
    %c1_i32 = arith.constant 1 : i32
    %186 = arith.cmpi eq, %arg1, %c1_i32 : i32
    %187 = arith.extui %186 : i1 to i32
    %c0_i32_70 = arith.constant 0 : i32
    %188 = arith.cmpi ne, %187, %c0_i32_70 : i32
    scf.if %188 {
      %189 = tpu.iota {dimensions = array<i32: 0>} : vector<8x1xi32>
      %c1_i32_71 = arith.constant 1 : i32
      %190 = arith.subi %68, %c1_i32_71 : i32
      %191 = vector.broadcast %190 : i32 to vector<8x1xi32>
      %192 = arith.cmpi eq, %189, %191 : vector<8x1xi32>
      %193 = arith.extui %192 : vector<8x1xi1> to vector<8x1xi32>
      %194 = arith.sitofp %193 : vector<8x1xi32> to vector<8x1xf32>
      %195 = vector.broadcast %194 : vector<8x1xf32> to vector<8x128xf32>
      %196 = arith.mulf %184, %195 : vector<8x128xf32>
      %cst_72 = arith.constant dense<0.000000e+00> : vector<128xf32>
      %197 = vector.multi_reduction <add>, %196, %cst_72 [0] : vector<8x128xf32> to vector<128xf32>
      %198 = vector.shape_cast %197 : vector<128xf32> to vector<1x128xf32>
      %199 = arith.mulf %198, %198 : vector<1x128xf32>
      %cst_73 = arith.constant dense<0.000000e+00> : vector<1xf32>
      %200 = vector.multi_reduction <add>, %199, %cst_73 [1] : vector<1x128xf32> to vector<1xf32>
      %201 = vector.shape_cast %200 : vector<1xf32> to vector<1x1xf32>
      %cst_74 = arith.constant 1.280000e+02 : f32
      %202 = vector.broadcast %cst_74 : f32 to vector<1x1xf32>
      %203 = arith.divf %201, %202 : vector<1x1xf32>
      %cst_75 = arith.constant 9.99999997E-7 : f32
      %204 = vector.broadcast %cst_75 : f32 to vector<1x1xf32>
      %205 = arith.addf %203, %204 : vector<1x1xf32>
      %206 = math.rsqrt %205 : vector<1x1xf32>
      %207 = vector.broadcast %206 : vector<1x1xf32> to vector<1x128xf32>
      %208 = arith.mulf %198, %207 : vector<1x128xf32>
      %c0_76 = arith.constant 0 : index
      %c0_77 = arith.constant 0 : index
      %209 = vector.load %arg16[%c0_76, %c0_77] : memref<1x128xf32, #tpu.memory_space<vmem>>, vector<1x128xf32>
      %210 = arith.mulf %208, %209 : vector<1x128xf32>
      %211 = arith.truncf %210 : vector<1x128xf32> to vector<1x128xbf16>
      %c0_78 = arith.constant 0 : index
      %c0_79 = arith.constant 0 : index
      %212 = vector.load %arg17[%c0_78, %c0_79] : memref<128x128xbf16, #tpu.memory_space<vmem>>, vector<128x128xbf16>
      %cst_80 = arith.constant dense<0.000000e+00> : vector<1x128xf32>
      %213 = tpu.matmul %211, %212, %cst_80 {dimension_numbers = #tpu.dot_dimension_numbers<[1], [0], [0], [1], [0, 0, 1, 1], [], []>} : vector<1x128xbf16>, vector<128x128xbf16>, vector<1x128xf32> -> vector<1x128xf32>
      %c0_81 = arith.constant 0 : index
      %c0_82 = arith.constant 0 : index
      %214 = vector.load %arg18[%c0_81, %c0_82] : memref<1x128xf32, #tpu.memory_space<vmem>>, vector<1x128xf32>
      %215 = arith.addf %213, %214 : vector<1x128xf32>
      %c0_83 = arith.constant 0 : index
      %c0_84 = arith.constant 0 : index
      %c0_85 = arith.constant 0 : index
      %216 = vector.load %arg19[%c0_83, %c0_84, %c0_85] : memref<1x1x128xf32, #tpu.memory_space<vmem>>, vector<1x1x128xf32>
      %217 = vector.shape_cast %216 : vector<1x1x128xf32> to vector<1x128xf32>
      %218 = vector.shape_cast %215 : vector<1x128xf32> to vector<1x1x128xf32>
      tpu.vector_store %arg19[%c0_83, %c0_84, %c0_85], %218 {strides = array<i32>} : memref<1x1x128xf32, #tpu.memory_space<vmem>>, vector<1x1x128xf32>,
    } else {
    }
    return
  }
  func.func @transform_0(%arg0: i32, %arg1: i32, %arg2: memref<2xi32, #tpu.memory_space<smem>>) -> (i32, i32, i32) {
    %c0_i32 = arith.constant 0 : i32
    %c0_i32_0 = arith.constant 0 : i32
    %c0_i32_1 = arith.constant 0 : i32
    return %arg0, %c0_i32, %c0_i32_0 : i32, i32, i32
  }
  func.func @transform_1(%arg0: i32, %arg1: i32, %arg2: memref<2xi32, #tpu.memory_space<smem>>) -> (i32, i32, i32) {
    %c0_i32 = arith.constant 0 : i32
    %c0_i32_0 = arith.constant 0 : i32
    %c0_i32_1 = arith.constant 0 : i32
    return %arg1, %c0_i32, %c0_i32_0 : i32, i32, i32
  }
  func.func @transform_2(%arg0: i32, %arg1: i32, %arg2: memref<2xi32, #tpu.memory_space<smem>>) -> (i32, i32, i32) {
    %c0_i32 = arith.constant 0 : i32
    %c0_i32_0 = arith.constant 0 : i32
    %c0_i32_1 = arith.constant 0 : i32
    return %arg1, %c0_i32, %c0_i32_0 : i32, i32, i32
  }
  func.func @transform_3(%arg0: i32, %arg1: i32, %arg2: memref<2xi32, #tpu.memory_space<smem>>) -> (i32, i32, i32) {
    %c0_i32 = arith.constant 0 : i32
    %c0_i32_0 = arith.constant 0 : i32
    %c0_i32_1 = arith.constant 0 : i32
    return %arg1, %c0_i32, %c0_i32_0 : i32, i32, i32
  }
  func.func @transform_4(%arg0: i32, %arg1: i32, %arg2: memref<2xi32, #tpu.memory_space<smem>>) -> (i32, i32, i32) {
    %c0_i32 = arith.constant 0 : i32
    %c0_i32_0 = arith.constant 0 : i32
    %c0_i32_1 = arith.constant 0 : i32
    return %arg1, %c0_i32, %c0_i32_0 : i32, i32, i32
  }
  func.func @transform_5(%arg0: i32, %arg1: i32, %arg2: memref<2xi32, #tpu.memory_space<smem>>) -> (i32, i32, i32) {
    %c0_i32 = arith.constant 0 : i32
    %c0_i32_0 = arith.constant 0 : i32
    %c0_i32_1 = arith.constant 0 : i32
    return %arg1, %c0_i32, %c0_i32_0 : i32, i32, i32
  }
  func.func @transform_6(%arg0: i32, %arg1: i32, %arg2: memref<2xi32, #tpu.memory_space<smem>>) -> (i32, i32, i32) {
    %c0_i32 = arith.constant 0 : i32
    %c0_i32_0 = arith.constant 0 : i32
    %c0_i32_1 = arith.constant 0 : i32
    return %arg1, %c0_i32, %c0_i32_0 : i32, i32, i32
  }
  func.func @transform_7(%arg0: i32, %arg1: i32, %arg2: memref<2xi32, #tpu.memory_space<smem>>) -> (i32, i32, i32) {
    %c0_i32 = arith.constant 0 : i32
    %c0_i32_0 = arith.constant 0 : i32
    %c0_i32_1 = arith.constant 0 : i32
    return %arg1, %c0_i32, %c0_i32_0 : i32, i32, i32
  }
  func.func @transform_8(%arg0: i32, %arg1: i32, %arg2: memref<2xi32, #tpu.memory_space<smem>>) -> (i32, i32, i32) {
    %c0_i32 = arith.constant 0 : i32
    %c0_i32_0 = arith.constant 0 : i32
    %c0_i32_1 = arith.constant 0 : i32
    return %arg1, %c0_i32, %c0_i32_0 : i32, i32, i32
  }
  func.func @transform_9(%arg0: i32, %arg1: i32, %arg2: memref<2xi32, #tpu.memory_space<smem>>) -> (i32, i32) {
    %c0_i32 = arith.constant 0 : i32
    %c0_i32_0 = arith.constant 0 : i32
    %c0_i32_1 = arith.constant 0 : i32
    return %c0_i32, %c0_i32_0 : i32, i32
  }
  func.func @transform_10(%arg0: i32, %arg1: i32, %arg2: memref<2xi32, #tpu.memory_space<smem>>) -> (i32, i32) {
    %c0_i32 = arith.constant 0 : i32
    %c0_i32_0 = arith.constant 0 : i32
    %c0_i32_1 = arith.constant 0 : i32
    return %c0_i32, %c0_i32_0 : i32, i32
  }
  func.func @transform_11(%arg0: i32, %arg1: i32, %arg2: memref<2xi32, #tpu.memory_space<smem>>) -> (i32, i32) {
    %c0_i32 = arith.constant 0 : i32
    %c0_i32_0 = arith.constant 0 : i32
    %c0_i32_1 = arith.constant 0 : i32
    return %c0_i32, %c0_i32_0 : i32, i32
  }
  func.func @transform_12(%arg0: i32, %arg1: i32, %arg2: memref<2xi32, #tpu.memory_space<smem>>) -> (i32, i32) {
    %c0_i32 = arith.constant 0 : i32
    %c0_i32_0 = arith.constant 0 : i32
    %c0_i32_1 = arith.constant 0 : i32
    return %c0_i32, %c0_i32_0 : i32, i32
  }
  func.func @transform_13(%arg0: i32, %arg1: i32, %arg2: memref<2xi32, #tpu.memory_space<smem>>) -> (i32, i32) {
    %c0_i32 = arith.constant 0 : i32
    %c0_i32_0 = arith.constant 0 : i32
    %c0_i32_1 = arith.constant 0 : i32
    return %c0_i32, %c0_i32_0 : i32, i32
  }
  func.func @transform_14(%arg0: i32, %arg1: i32, %arg2: memref<2xi32, #tpu.memory_space<smem>>) -> (i32, i32) {
    %c0_i32 = arith.constant 0 : i32
    %c0_i32_0 = arith.constant 0 : i32
    %c0_i32_1 = arith.constant 0 : i32
    return %c0_i32, %c0_i32_0 : i32, i32
  }
  func.func @transform_15(%arg0: i32, %arg1: i32, %arg2: memref<2xi32, #tpu.memory_space<smem>>) -> (i32, i32) {
    %c0_i32 = arith.constant 0 : i32
    %c0_i32_0 = arith.constant 0 : i32
    %c0_i32_1 = arith.constant 0 : i32
    return %c0_i32, %c0_i32_0 : i32, i32
  }
  func.func @transform_16(%arg0: i32, %arg1: i32, %arg2: memref<2xi32, #tpu.memory_space<smem>>) -> (i32, i32, i32) {
    %c0_i32 = arith.constant 0 : i32
    %c0_i32_0 = arith.constant 0 : i32
    %c0_i32_1 = arith.constant 0 : i32
    return %arg0, %c0_i32, %c0_i32_0 : i32, i32, i32
  }
}

</mosaic_0001>

<llo_original>
// kernel: qwen3_forward.1
$region0: #{qwen3_forward.1}
  #allocation0 [shape = 'u32[]', space=smem, size = 0x4, offset = 0x4, fixed_abs, tag = 'smem constant byte address 0x4 - core index']
  #allocation1 [shape = 'u32[144,128]{1,0:T(1,128)}', space=vmem, size = 0x12000, scoped, tag = 'internal scratch']
  #allocation2 [shape = 'f32[8,128]{1,0:T(8,128)}', space=vmem, size = 0x1000, scoped, tag = 'scratch operand']
  #allocation3 [shape = 's32[1]{0}', space=sflag, size = 0x4, scoped, tag = 'scoped memory for qwen3_forward.1']
  #allocation4 [shape = 'u8[512]{0}', space=smem, size = 0x200, scoped, tag = 'prefetched SMEM operand 0']
  %s0 = inlined_call_operand.vmem [shape: s32[2], index: 0, kind: input, shape index: {}]
  %s1 = inlined_call_operand.vmem [shape: bf16[2,8,128], index: 1, kind: input, shape index: {}]
  %s2 = inlined_call_operand.vmem [shape: bf16[2,1,128], index: 2, kind: input, shape index: {}]
  %s3 = inlined_call_operand.hbm [shape: bf16[2,128,384], index: 3, kind: input, shape index: {}]
  %s4 = inlined_call_operand.hbm [shape: f32[2,1,128], index: 4, kind: input, shape index: {}]
  %s5 = inlined_call_operand.hbm [shape: f32[2,1,128], index: 5, kind: input, shape index: {}]
  %s6 = inlined_call_operand.hbm [shape: bf16[2,128,128], index: 6, kind: input, shape index: {}]
  %s7 = inlined_call_operand.vmem [shape: bf16[2,1,128], index: 7, kind: input, shape index: {}]
  %s8 = inlined_call_operand.hbm [shape: bf16[2,128,512], index: 8, kind: input, shape index: {}]
  %s9 = inlined_call_operand.hbm [shape: bf16[2,256,128], index: 9, kind: input, shape index: {}]
  %s10 = inlined_call_operand.vmem [shape: f32[8,128], index: 10, kind: input, shape index: {}]
  %s11 = inlined_call_operand.hbm [shape: f32[8,128], index: 11, kind: input, shape index: {}]
  %s12 = inlined_call_operand.hbm [shape: f32[8,128], index: 12, kind: input, shape index: {}]
  %s13 = inlined_call_operand.vmem [shape: f32[128,128], index: 13, kind: input, shape index: {}]
  %s14 = inlined_call_operand.hbm [shape: f32[1,128], index: 14, kind: input, shape index: {}]
  %s15 = inlined_call_operand.hbm [shape: bf16[128,128], index: 15, kind: input, shape index: {}]
  %s16 = inlined_call_operand.hbm [shape: f32[1,128], index: 16, kind: input, shape index: {}]
  %s17 = inlined_call_operand.vmem [shape: f32[2,1,128], index: 17, kind: output, shape index: {}]
  %s18 = sld [smem:[#allocation0]]
  $region149: #{qwen3_forward.1} parent=0
    _
  %s20 = ssub.s32 1, %s18
  %s21 = scalar_select 0, %s20, %s18
  %s22 = sshll.u32 %s0, 4
  %s23 = int_to_ptr.vmem [resolvable:$true] %s22
  %25 = dma.vmem_to_smem %s23, 16, [#allocation4], [#allocation3]
  %26 = dma.done [#allocation3], 16
  %27 = sfence
  $region1: #{qwen3_forward.1} parent=0
    #allocation5 [shape = 'u8[196608]{0}', space=vmem, size = 0x30000, scoped, tag = 'input window, operand 3']
    #allocation6 [shape = 's32[2]{0}', space=sflag, size = 0x8, scoped, tag = 'scoped memory for qwen3_forward.1']
    #allocation7 [shape = 'u8[1024]{0}', space=vmem, size = 0x400, scoped, tag = 'input window, operand 4']
    #allocation8 [shape = 's32[2]{0}', space=sflag, size = 0x8, scoped, tag = 'scoped memory for qwen3_forward.1']
    #allocation9 [shape = 'u8[1024]{0}', space=vmem, size = 0x400, scoped, tag = 'input window, operand 5']
    #allocation10 [shape = 'u8[65536]{0}', space=vmem, size = 0x10000, scoped, tag = 'input window, operand 6']
    #allocation11 [shape = 's32[2]{0}', space=sflag, size = 0x8, scoped, tag = 'scoped memory for qwen3_forward.1']
    #allocation12 [shape = 'u8[262144]{0}', space=vmem, size = 0x40000, scoped, tag = 'input window, operand 8']
    #allocation13 [shape = 'u8[131072]{0}', space=vmem, size = 0x20000, scoped, tag = 'input window, operand 9']
    #allocation14 [shape = 's32[2]{0}', space=sflag, size = 0x8, scoped, tag = 'scoped memory for qwen3_forward.1']
    #allocation15 [shape = 'u8[4096]{0}', space=vmem, size = 0x1000, scoped, tag = 'input window, operand 11, single buffered']
    #allocation16 [shape = 'u8[4096]{0}', space=vmem, size = 0x1000, scoped, tag = 'input window, operand 12, single buffered']
    #allocation17 [shape = 's32[1]{0}', space=sflag, size = 0x4, scoped, tag = 'scoped memory for qwen3_forward.1']
    #allocation18 [shape = 'u8[512]{0}', space=vmem, size = 0x400, scoped, tag = 'input window, operand 14, single buffered']
    #allocation19 [shape = 'u8[32768]{0}', space=vmem, size = 0x8000, scoped, tag = 'input window, operand 15, single buffered']
    #allocation20 [shape = 's32[1]{0}', space=sflag, size = 0x4, scoped, tag = 'scoped memory for qwen3_forward.1']
    #allocation21 [shape = 'u8[512]{0}', space=vmem, size = 0x400, scoped, tag = 'input window, operand 16, single buffered']
    %28 = vsyncpa [#allocation6], 0
    %s29 = scalar_lea.sflag [#allocation6], 1
    %30 = vsyncpa %s29, 0
    %31 = vsyncpa [#allocation8], 0
    %s32 = scalar_lea.sflag [#allocation8], 1
    %33 = vsyncpa %s32, 0
    %34 = vsyncpa [#allocation11], 0
    %s35 = scalar_lea.sflag [#allocation11], 1
    %36 = vsyncpa %s35, 0
    %37 = vsyncpa [#allocation14], 0
    %s38 = scalar_lea.sflag [#allocation14], 1
    %39 = vsyncpa %s38, 0
    %40 = vsyncpa [#allocation17], 0
    %41 = vsyncpa [#allocation20], 0
    loop: start=0, step=1, limit=6
    $region2: #{qwen3_forward.1} parent=1 // loop_pre_header
      _
    $region3: #{qwen3_forward.1} parent=1 // loop_header
      %s43 = sphi 0, %s47
      %p44 = scmp.ge.s32.totalorder %s43, 6
      %s50 = sphi 0, %s62
      %s51 = sphi 0, %s58
      %s52 = sphi 0, %s50
      %s53 = sphi 0, %s51
      %s54 = sphi 0, %s52
      %s55 = sphi 0, %s53
      %s65 = sphi 0, %s67
      %s68 = sphi 0, %s65
      %s69 = sphi 0, %s68
      %s85 = sphi 0, %s69
      %s91 = sphi 0, %s93
      %s94 = sphi 0, %s91
      %s95 = sphi 0, %s94
      %s111 = sphi 0, %s95
      %s117 = sphi 0, %s119
      %s120 = sphi 0, %s117
      %s121 = sphi 0, %s120
      %s137 = sphi 0, %s121
      %s143 = sphi 0, %s145
      %s146 = sphi 0, %s143
      %s147 = sphi 0, %s146
      %s163 = sphi 0, %s147
      %s169 = sphi 0, %s171
      %s172 = sphi 0, %s169
      %s173 = sphi 0, %s172
      %s189 = sphi 0, %s173
      %s195 = sphi 0, %s197
      %s198 = sphi 0, %s195
      %s199 = sphi 0, %s198
      %s215 = sphi 0, %s199
      %s221 = sphi 0, %s223
      %s224 = sphi 0, %s221
      %s225 = sphi 0, %s224
      %s241 = sphi 0, %s225
      %s247 = sphi 0, %s249
      %s250 = sphi 0, %s247
      %s251 = sphi 0, %s250
      %s267 = sphi 0, %s251
      %s273 = sphi 0, %s275
      %s276 = sphi 0, %s273
      %s277 = sphi 0, %s276
      %s293 = sphi 0, %s277
      %s297 = sphi 0, %s297
      %s299 = sphi 0, %s297
      %s300 = sphi 0, %s299
      %s314 = sphi 0, %s300
      %s318 = sphi 0, %s318
      %s320 = sphi 0, %s318
      %s321 = sphi 0, %s320
      %s335 = sphi 0, %s321
      %s339 = sphi 0, %s339
      %s341 = sphi 0, %s339
      %s342 = sphi 0, %s341
      %s356 = sphi 0, %s342
      %s360 = sphi 0, %s360
      %s362 = sphi 0, %s360
      %s363 = sphi 0, %s362
      %s377 = sphi 0, %s363
      %s381 = sphi 0, %s381
      %s383 = sphi 0, %s381
      %s384 = sphi 0, %s383
      %s398 = sphi 0, %s384
      %s402 = sphi 0, %s402
      %s404 = sphi 0, %s402
      %s405 = sphi 0, %s404
      %s419 = sphi 0, %s405
      %s423 = sphi 0, %s423
      %s425 = sphi 0, %s423
      %s426 = sphi 0, %s425
      %s440 = sphi 0, %s426
      %s446 = sphi 0, %s448
      %s449 = sphi 0, %s446
      %s450 = sphi 0, %s449
      %s466 = sphi 0, %s450
    $region4: #{qwen3_forward.1} parent=1 // loop_header_branch
      %46 = sbr.rel (%p44) target = $region8
    $region5: #{qwen3_forward.1} parent=1 // loop_body
      %s48 = ssub.s32 %s43, 1
      %s49 = ssub.s32 %s43, 2
      %s56 = sadd.s32 1, %s51
      %p57 = scmp.ge.s32.totalorder %s56, 2
      %s58 = scalar_select %p57, 0, %s56
      %s59 = sadd.s32 1, %s50
      %s60 = scalar_select %p57, %s59, %s50
      %p61 = scmp.ge.s32.totalorder %s60, 2
      %s62 = scalar_select %p61, 0, %s60
      %s63 = ssub.s32 %s50, %s62
      %p64 = scmp.eq.s32.totalorder %s63, 0
      %s66 = sadd.s32 %s65, 1
      %s67 = scalar_select %p64, %s65, %s66
      %p70 = pneg %p64
      %p71 = scmp.eq.s32.totalorder %s43, 3
      %p72 = por %p70, %p71
      %p73 = scmp.ne.s32.totalorder %s65, %s68
      %p74 = scmp.eq.s32.totalorder %s43, 0
      %p75 = por %p73, %p74
      %p76 = scmp.ne.s32.totalorder %s65, %s68
      %p77 = scmp.eq.s32.totalorder %s48, 3
      %p78 = por %p76, %p77
      %p79 = scmp.ne.s32.totalorder %s68, %s69
      %p80 = scmp.eq.s32.totalorder %s48, 0
      %p81 = por %p79, %p80
      %p82 = scmp.ne.s32.totalorder %s68, %s69
      %p83 = scmp.eq.s32.totalorder %s49, 3
      %p84 = por %p82, %p83
      %p86 = scmp.ne.s32.totalorder %s69, %s85
      %p87 = scmp.eq.s32.totalorder %s49, 0
      %p88 = por %p86, %p87
      %s89 = ssub.s32 %s51, %s58
      %p90 = scmp.eq.s32.totalorder %s89, 0
      %s92 = sadd.s32 %s91, 1
      %s93 = scalar_select %p90, %s91, %s92
      %p96 = pneg %p90
      %p97 = scmp.eq.s32.totalorder %s43, 3
      %p98 = por %p96, %p97
      %p99 = scmp.ne.s32.totalorder %s91, %s94
      %p100 = scmp.eq.s32.totalorder %s43, 0
      %p101 = por %p99, %p100
      %p102 = scmp.ne.s32.totalorder %s91, %s94
      %p103 = scmp.eq.s32.totalorder %s48, 3
      %p104 = por %p102, %p103
      %p105 = scmp.ne.s32.totalorder %s94, %s95
      %p106 = scmp.eq.s32.totalorder %s48, 0
      %p107 = por %p105, %p106
      %p108 = scmp.ne.s32.totalorder %s94, %s95
      %p109 = scmp.eq.s32.totalorder %s49, 3
      %p110 = por %p108, %p109
      %p112 = scmp.ne.s32.totalorder %s95, %s111
      %p113 = scmp.eq.s32.totalorder %s49, 0
      %p114 = por %p112, %p113
      %s115 = ssub.s32 %s51, %s58
      %p116 = scmp.eq.s32.totalorder %s115, 0
      %s118 = sadd.s32 %s117, 1
      %s119 = scalar_select %p116, %s117, %s118
      %p122 = pneg %p116
      %p123 = scmp.eq.s32.totalorder %s43, 3
      %p124 = por %p122, %p123
      %p125 = scmp.ne.s32.totalorder %s117, %s120
      %p126 = scmp.eq.s32.totalorder %s43, 0
      %p127 = por %p125, %p126
      %p128 = scmp.ne.s32.totalorder %s117, %s120
      %p129 = scmp.eq.s32.totalorder %s48, 3
      %p130 = por %p128, %p129
      %p131 = scmp.ne.s32.totalorder %s120, %s121
      %p132 = scmp.eq.s32.totalorder %s48, 0
      %p133 = por %p131, %p132
      %p134 = scmp.ne.s32.totalorder %s120, %s121
      %p135 = scmp.eq.s32.totalorder %s49, 3
      %p136 = por %p134, %p135
      %p138 = scmp.ne.s32.totalorder %s121, %s137
      %p139 = scmp.eq.s32.totalorder %s49, 0
      %p140 = por %p138, %p139
      %s141 = ssub.s32 %s51, %s58
      %p142 = scmp.eq.s32.totalorder %s141, 0
      %s144 = sadd.s32 %s143, 1
      %s145 = scalar_select %p142, %s143, %s144
      %p148 = pneg %p142
      %p149 = scmp.eq.s32.totalorder %s43, 3
      %p150 = por %p148, %p149
      %p151 = scmp.ne.s32.totalorder %s143, %s146
      %p152 = scmp.eq.s32.totalorder %s43, 0
      %p153 = por %p151, %p152
      %p154 = scmp.ne.s32.totalorder %s143, %s146
      %p155 = scmp.eq.s32.totalorder %s48, 3
      %p156 = por %p154, %p155
      %p157 = scmp.ne.s32.totalorder %s146, %s147
      %p158 = scmp.eq.s32.totalorder %s48, 0
      %p159 = por %p157, %p158
      %p160 = scmp.ne.s32.totalorder %s146, %s147
      %p161 = scmp.eq.s32.totalorder %s49, 3
      %p162 = por %p160, %p161
      %p164 = scmp.ne.s32.totalorder %s147, %s163
      %p165 = scmp.eq.s32.totalorder %s49, 0
      %p166 = por %p164, %p165
      %s167 = ssub.s32 %s51, %s58
      %p168 = scmp.eq.s32.totalorder %s167, 0
      %s170 = sadd.s32 %s169, 1
      %s171 = scalar_select %p168, %s169, %s170
      %p174 = pneg %p168
      %p175 = scmp.eq.s32.totalorder %s43, 3
      %p176 = por %p174, %p175
      %p177 = scmp.ne.s32.totalorder %s169, %s172
      %p178 = scmp.eq.s32.totalorder %s43, 0
      %p179 = por %p177, %p178
      %p180 = scmp.ne.s32.totalorder %s169, %s172
      %p181 = scmp.eq.s32.totalorder %s48, 3
      %p182 = por %p180, %p181
      %p183 = scmp.ne.s32.totalorder %s172, %s173
      %p184 = scmp.eq.s32.totalorder %s48, 0
      %p185 = por %p183, %p184
      %p186 = scmp.ne.s32.totalorder %s172, %s173
      %p187 = scmp.eq.s32.totalorder %s49, 3
      %p188 = por %p186, %p187
      %p190 = scmp.ne.s32.totalorder %s173, %s189
      %p191 = scmp.eq.s32.totalorder %s49, 0
      %p192 = por %p190, %p191
      %s193 = ssub.s32 %s51, %s58
      %p194 = scmp.eq.s32.totalorder %s193, 0
      %s196 = sadd.s32 %s195, 1
      %s197 = scalar_select %p194, %s195, %s196
      %p200 = pneg %p194
      %p201 = scmp.eq.s32.totalorder %s43, 3
      %p202 = por %p200, %p201
      %p203 = scmp.ne.s32.totalorder %s195, %s198
      %p204 = scmp.eq.s32.totalorder %s43, 0
      %p205 = por %p203, %p204
      %p206 = scmp.ne.s32.totalorder %s195, %s198
      %p207 = scmp.eq.s32.totalorder %s48, 3
      %p208 = por %p206, %p207
      %p209 = scmp.ne.s32.totalorder %s198, %s199
      %p210 = scmp.eq.s32.totalorder %s48, 0
      %p211 = por %p209, %p210
      %p212 = scmp.ne.s32.totalorder %s198, %s199
      %p213 = scmp.eq.s32.totalorder %s49, 3
      %p214 = por %p212, %p213
      %p216 = scmp.ne.s32.totalorder %s199, %s215
      %p217 = scmp.eq.s32.totalorder %s49, 0
      %p218 = por %p216, %p217
      %s219 = ssub.s32 %s51, %s58
      %p220 = scmp.eq.s32.totalorder %s219, 0
      %s222 = sadd.s32 %s221, 1
      %s223 = scalar_select %p220, %s221, %s222
      %p226 = pneg %p220
      %p227 = scmp.eq.s32.totalorder %s43, 3
      %p228 = por %p226, %p227
      %p229 = scmp.ne.s32.totalorder %s221, %s224
      %p230 = scmp.eq.s32.totalorder %s43, 0
      %p231 = por %p229, %p230
      %p232 = scmp.ne.s32.totalorder %s221, %s224
      %p233 = scmp.eq.s32.totalorder %s48, 3
      %p234 = por %p232, %p233
      %p235 = scmp.ne.s32.totalorder %s224, %s225
      %p236 = scmp.eq.s32.totalorder %s48, 0
      %p237 = por %p235, %p236
      %p238 = scmp.ne.s32.totalorder %s224, %s225
      %p239 = scmp.eq.s32.totalorder %s49, 3
      %p240 = por %p238, %p239
      %p242 = scmp.ne.s32.totalorder %s225, %s241
      %p243 = scmp.eq.s32.totalorder %s49, 0
      %p244 = por %p242, %p243
      %s245 = ssub.s32 %s51, %s58
      %p246 = scmp.eq.s32.totalorder %s245, 0
      %s248 = sadd.s32 %s247, 1
      %s249 = scalar_select %p246, %s247, %s248
      %p252 = pneg %p246
      %p253 = scmp.eq.s32.totalorder %s43, 3
      %p254 = por %p252, %p253
      %p255 = scmp.ne.s32.totalorder %s247, %s250
      %p256 = scmp.eq.s32.totalorder %s43, 0
      %p257 = por %p255, %p256
      %p258 = scmp.ne.s32.totalorder %s247, %s250
      %p259 = scmp.eq.s32.totalorder %s48, 3
      %p260 = por %p258, %p259
      %p261 = scmp.ne.s32.totalorder %s250, %s251
      %p262 = scmp.eq.s32.totalorder %s48, 0
      %p263 = por %p261, %p262
      %p264 = scmp.ne.s32.totalorder %s250, %s251
      %p265 = scmp.eq.s32.totalorder %s49, 3
      %p266 = por %p264, %p265
      %p268 = scmp.ne.s32.totalorder %s251, %s267
      %p269 = scmp.eq.s32.totalorder %s49, 0
      %p270 = por %p268, %p269
      %s271 = ssub.s32 %s51, %s58
      %p272 = scmp.eq.s32.totalorder %s271, 0
      %s274 = sadd.s32 %s273, 1
      %s275 = scalar_select %p272, %s273, %s274
      %p278 = pneg %p272
      %p279 = scmp.eq.s32.totalorder %s43, 3
      %p280 = por %p278, %p279
      %p281 = scmp.ne.s32.totalorder %s273, %s276
      %p282 = scmp.eq.s32.totalorder %s43, 0
      %p283 = por %p281, %p282
      %p284 = scmp.ne.s32.totalorder %s273, %s276
      %p285 = scmp.eq.s32.totalorder %s48, 3
      %p286 = por %p284, %p285
      %p287 = scmp.ne.s32.totalorder %s276, %s277
      %p288 = scmp.eq.s32.totalorder %s48, 0
      %p289 = por %p287, %p288
      %p290 = scmp.ne.s32.totalorder %s276, %s277
      %p291 = scmp.eq.s32.totalorder %s49, 3
      %p292 = por %p290, %p291
      %p294 = scmp.ne.s32.totalorder %s277, %s293
      %p295 = scmp.eq.s32.totalorder %s49, 0
      %p296 = por %p294, %p295
      %s298 = sadd.s32 %s297, 1
      %p301 = scmp.eq.s32.totalorder %s43, 3
      %p302 = scmp.ne.s32.totalorder %s297, %s299
      %p303 = scmp.eq.s32.totalorder %s43, 0
      %p304 = por %p302, %p303
      %p305 = scmp.ne.s32.totalorder %s297, %s299
      %p306 = scmp.eq.s32.totalorder %s48, 3
      %p307 = por %p305, %p306
      %p308 = scmp.ne.s32.totalorder %s299, %s300
      %p309 = scmp.eq.s32.totalorder %s48, 0
      %p310 = por %p308, %p309
      %p311 = scmp.ne.s32.totalorder %s299, %s300
      %p312 = scmp.eq.s32.totalorder %s49, 3
      %p313 = por %p311, %p312
      %p315 = scmp.ne.s32.totalorder %s300, %s314
      %p316 = scmp.eq.s32.totalorder %s49, 0
      %p317 = por %p315, %p316
      %s319 = sadd.s32 %s318, 1
      %p322 = scmp.eq.s32.totalorder %s43, 3
      %p323 = scmp.ne.s32.totalorder %s318, %s320
      %p324 = scmp.eq.s32.totalorder %s43, 0
      %p325 = por %p323, %p324
      %p326 = scmp.ne.s32.totalorder %s318, %s320
      %p327 = scmp.eq.s32.totalorder %s48, 3
      %p328 = por %p326, %p327
      %p329 = scmp.ne.s32.totalorder %s320, %s321
      %p330 = scmp.eq.s32.totalorder %s48, 0
      %p331 = por %p329, %p330
      %p332 = scmp.ne.s32.totalorder %s320, %s321
      %p333 = scmp.eq.s32.totalorder %s49, 3
      %p334 = por %p332, %p333
      %p336 = scmp.ne.s32.totalorder %s321, %s335
      %p337 = scmp.eq.s32.totalorder %s49, 0
      %p338 = por %p336, %p337
      %s340 = sadd.s32 %s339, 1
      %p343 = scmp.eq.s32.totalorder %s43, 3
      %p344 = scmp.ne.s32.totalorder %s339, %s341
      %p345 = scmp.eq.s32.totalorder %s43, 0
      %p346 = por %p344, %p345
      %p347 = scmp.ne.s32.totalorder %s339, %s341
      %p348 = scmp.eq.s32.totalorder %s48, 3
      %p349 = por %p347, %p348
      %p350 = scmp.ne.s32.totalorder %s341, %s342
      %p351 = scmp.eq.s32.totalorder %s48, 0
      %p352 = por %p350, %p351
      %p353 = scmp.ne.s32.totalorder %s341, %s342
      %p354 = scmp.eq.s32.totalorder %s49, 3
      %p355 = por %p353, %p354
      %p357 = scmp.ne.s32.totalorder %s342, %s356
      %p358 = scmp.eq.s32.totalorder %s49, 0
      %p359 = por %p357, %p358
      %s361 = sadd.s32 %s360, 1
      %p364 = scmp.eq.s32.totalorder %s43, 3
      %p365 = scmp.ne.s32.totalorder %s360, %s362
      %p366 = scmp.eq.s32.totalorder %s43, 0
      %p367 = por %p365, %p366
      %p368 = scmp.ne.s32.totalorder %s360, %s362
      %p369 = scmp.eq.s32.totalorder %s48, 3
      %p370 = por %p368, %p369
      %p371 = scmp.ne.s32.totalorder %s362, %s363
      %p372 = scmp.eq.s32.totalorder %s48, 0
      %p373 = por %p371, %p372
      %p374 = scmp.ne.s32.totalorder %s362, %s363
      %p375 = scmp.eq.s32.totalorder %s49, 3
      %p376 = por %p374, %p375
      %p378 = scmp.ne.s32.totalorder %s363, %s377
      %p379 = scmp.eq.s32.totalorder %s49, 0
      %p380 = por %p378, %p379
      %s382 = sadd.s32 %s381, 1
      %p385 = scmp.eq.s32.totalorder %s43, 3
      %p386 = scmp.ne.s32.totalorder %s381, %s383
      %p387 = scmp.eq.s32.totalorder %s43, 0
      %p388 = por %p386, %p387
      %p389 = scmp.ne.s32.totalorder %s381, %s383
      %p390 = scmp.eq.s32.totalorder %s48, 3
      %p391 = por %p389, %p390
      %p392 = scmp.ne.s32.totalorder %s383, %s384
      %p393 = scmp.eq.s32.totalorder %s48, 0
      %p394 = por %p392, %p393
      %p395 = scmp.ne.s32.totalorder %s383, %s384
      %p396 = scmp.eq.s32.totalorder %s49, 3
      %p397 = por %p395, %p396
      %p399 = scmp.ne.s32.totalorder %s384, %s398
      %p400 = scmp.eq.s32.totalorder %s49, 0
      %p401 = por %p399, %p400
      %s403 = sadd.s32 %s402, 1
      %p406 = scmp.eq.s32.totalorder %s43, 3
      %p407 = scmp.ne.s32.totalorder %s402, %s404
      %p408 = scmp.eq.s32.totalorder %s43, 0
      %p409 = por %p407, %p408
      %p410 = scmp.ne.s32.totalorder %s402, %s404
      %p411 = scmp.eq.s32.totalorder %s48, 3
      %p412 = por %p410, %p411
      %p413 = scmp.ne.s32.totalorder %s404, %s405
      %p414 = scmp.eq.s32.totalorder %s48, 0
      %p415 = por %p413, %p414
      %p416 = scmp.ne.s32.totalorder %s404, %s405
      %p417 = scmp.eq.s32.totalorder %s49, 3
      %p418 = por %p416, %p417
      %p420 = scmp.ne.s32.totalorder %s405, %s419
      %p421 = scmp.eq.s32.totalorder %s49, 0
      %p422 = por %p420, %p421
      %s424 = sadd.s32 %s423, 1
      %p427 = scmp.eq.s32.totalorder %s43, 3
      %p428 = scmp.ne.s32.totalorder %s423, %s425
      %p429 = scmp.eq.s32.totalorder %s43, 0
      %p430 = por %p428, %p429
      %p431 = scmp.ne.s32.totalorder %s423, %s425
      %p432 = scmp.eq.s32.totalorder %s48, 3
      %p433 = por %p431, %p432
      %p434 = scmp.ne.s32.totalorder %s425, %s426
      %p435 = scmp.eq.s32.totalorder %s48, 0
      %p436 = por %p434, %p435
      %p437 = scmp.ne.s32.totalorder %s425, %s426
      %p438 = scmp.eq.s32.totalorder %s49, 3
      %p439 = por %p437, %p438
      %p441 = scmp.ne.s32.totalorder %s426, %s440
      %p442 = scmp.eq.s32.totalorder %s49, 0
      %p443 = por %p441, %p442
      %s444 = ssub.s32 %s50, %s62
      %p445 = scmp.eq.s32.totalorder %s444, 0
      %s447 = sadd.s32 %s446, 1
      %s448 = scalar_select %p445, %s446, %s447
      %p451 = pneg %p445
      %p452 = scmp.eq.s32.totalorder %s43, 3
      %p453 = por %p451, %p452
      %p454 = scmp.ne.s32.totalorder %s446, %s449
      %p455 = scmp.eq.s32.totalorder %s43, 0
      %p456 = por %p454, %p455
      %p457 = scmp.ne.s32.totalorder %s446, %s449
      %p458 = scmp.eq.s32.totalorder %s48, 3
      %p459 = por %p457, %p458
      %p460 = scmp.ne.s32.totalorder %s449, %s450
      %p461 = scmp.eq.s32.totalorder %s48, 0
      %p462 = por %p460, %p461
      %p463 = scmp.ne.s32.totalorder %s449, %s450
      %p464 = scmp.eq.s32.totalorder %s49, 3
      %p465 = por %p463, %p464
      %p467 = scmp.ne.s32.totalorder %s450, %s466
      %p468 = scmp.eq.s32.totalorder %s49, 0
      %p469 = por %p467, %p468
      %p470 = scmp.le.s32.totalorder 1, %s43
      %p471 = scmp.lt.s32.totalorder %s43, 5
      %p472 = pnand %p470, %p471
      %p473 = pneg %p472
      // Predicated region
      $region9: #{qwen3_forward.1} parent=5 // pred_check
        _
      $region10: #{qwen3_forward.1} parent=5 // pred_check_branch
        %475 = sbr.rel (%p472) target = $region12
      $region11: #{qwen3_forward.1} parent=5 // pred_region
        %s476 = ssub.s32 %s43, 1
        // Predicated region
        $region13: #{qwen3_forward.1} parent=11 // pred_check
          %p477 = pneg %p310
        $region14: #{qwen3_forward.1} parent=11 // pred_check_branch
          %479 = sbr.rel (%p477) target = $region16
        $region15: #{qwen3_forward.1} parent=11 // pred_region
          _
        $region16: #{qwen3_forward.1} parent=11 // pred_fallthru
          _
        // Predicated region
        $region17: #{qwen3_forward.1} parent=11 // pred_check
          %p480 = pneg %p331
        $region18: #{qwen3_forward.1} parent=11 // pred_check_branch
          %482 = sbr.rel (%p480) target = $region20
        $region19: #{qwen3_forward.1} parent=11 // pred_region
          %s484 = ssub.s32 128, 128
          %485 = vsyncadd [#allocation14], %s484
          %s487 = sshll.u32 [#allocation15], 4
          %s488 = int_to_ptr.vmem [resolvable:$true] %s487
          %490 = dma.hbm_to_vmem [thread:$0]  %s11, 128, %s488, [#allocation14]
        $region20: #{qwen3_forward.1} parent=11 // pred_fallthru
          _
        // Predicated region
        $region21: #{qwen3_forward.1} parent=11 // pred_check
          %p491 = pneg %p352
        $region22: #{qwen3_forward.1} parent=11 // pred_check_branch
          %493 = sbr.rel (%p491) target = $region24
        $region23: #{qwen3_forward.1} parent=11 // pred_region
          %s495 = ssub.s32 128, 128
          %496 = vsyncadd [#allocation17], %s495
          %s498 = sshll.u32 [#allocation16], 4
          %s499 = int_to_ptr.vmem [resolvable:$true] %s498
          %501 = dma.hbm_to_vmem [thread:$0]  %s12, 128, %s499, [#allocation17]
        $region24: #{qwen3_forward.1} parent=11 // pred_fallthru
          _
        // Predicated region
        $region25: #{qwen3_forward.1} parent=11 // pred_check
          %p502 = pneg %p373
        $region26: #{qwen3_forward.1} parent=11 // pred_check_branch
          %504 = sbr.rel (%p502) target = $region28
        $region27: #{qwen3_forward.1} parent=11 // pred_region
          _
        $region28: #{qwen3_forward.1} parent=11 // pred_fallthru
          _
        // Predicated region
        $region29: #{qwen3_forward.1} parent=11 // pred_check
          %p505 = pneg %p394
        $region30: #{qwen3_forward.1} parent=11 // pred_check_branch
          %507 = sbr.rel (%p505) target = $region32
        $region31: #{qwen3_forward.1} parent=11 // pred_region
          %s509 = ssub.s32 16, 16
          %510 = vsyncadd [#allocation17], %s509
          %s512 = sshll.u32 [#allocation18], 4
          %s513 = int_to_ptr.vmem [resolvable:$true] %s512
          %515 = dma.hbm_to_vmem [thread:$0]  %s14, 16, %s513, [#allocation17]
        $region32: #{qwen3_forward.1} parent=11 // pred_fallthru
          _
        // Predicated region
        $region33: #{qwen3_forward.1} parent=11 // pred_check
          %p516 = pneg %p415
        $region34: #{qwen3_forward.1} parent=11 // pred_check_branch
          %518 = sbr.rel (%p516) target = $region36
        $region35: #{qwen3_forward.1} parent=11 // pred_region
          %s520 = ssub.s32 1024, 1024
          %521 = vsyncadd [#allocation20], %s520
          %s522 = sshll.u32 [#allocation19], 4
          %s523 = int_to_ptr.vmem [resolvable:$true] %s522
          %528 = dma.hbm_to_vmem [thread:$0]  %s15, 1024, %s523, [#allocation20], 64, 64, 4
        $region36: #{qwen3_forward.1} parent=11 // pred_fallthru
          _
        // Predicated region
        $region37: #{qwen3_forward.1} parent=11 // pred_check
          %p529 = pneg %p436
        $region38: #{qwen3_forward.1} parent=11 // pred_check_branch
          %531 = sbr.rel (%p529) target = $region40
        $region39: #{qwen3_forward.1} parent=11 // pred_region
          %s533 = ssub.s32 16, 16
          %534 = vsyncadd [#allocation20], %s533
          %s536 = sshll.u32 [#allocation21], 4
          %s537 = int_to_ptr.vmem [resolvable:$true] %s536
          %539 = dma.hbm_to_vmem [thread:$0]  %s16, 16, %s537, [#allocation20]
        $region40: #{qwen3_forward.1} parent=11 // pred_fallthru
          _
      $region12: #{qwen3_forward.1} parent=5 // pred_fallthru
        _
      %p540 = scmp.lt.s32.totalorder %s43, 4
      // Predicated region
      $region41: #{qwen3_forward.1} parent=5 // pred_check
        %p541 = pneg %p540
      $region42: #{qwen3_forward.1} parent=5 // pred_check_branch
        %543 = sbr.rel (%p541) target = $region44
      $region43: #{qwen3_forward.1} parent=5 // pred_region
        // Predicated region
        $region45: #{qwen3_forward.1} parent=43 // pred_check
          %p544 = pneg %p75
        $region46: #{qwen3_forward.1} parent=43 // pred_check_branch
          %546 = sbr.rel (%p544) target = $region48
        $region47: #{qwen3_forward.1} parent=43 // pred_region
          %p547 = scmp.lt.s32.totalorder %s50, 1
          %s548 = scalar_select %p547, %s50, 1
          %s549 = smul.addr %s548, 4
          %s550 = scalar_lea.vmem %s1, %s549
        $region48: #{qwen3_forward.1} parent=43 // pred_fallthru
          _
        // Predicated region
        $region49: #{qwen3_forward.1} parent=43 // pred_check
          %p551 = pneg %p101
        $region50: #{qwen3_forward.1} parent=43 // pred_check_branch
          %553 = sbr.rel (%p551) target = $region52
        $region51: #{qwen3_forward.1} parent=43 // pred_region
          %p554 = scmp.lt.s32.totalorder %s51, 1
          %s555 = scalar_select %p554, %s51, 1
          %s556 = scalar_lea.vmem %s2, %s555
        $region52: #{qwen3_forward.1} parent=43 // pred_fallthru
          _
        // Predicated region
        $region53: #{qwen3_forward.1} parent=43 // pred_check
          %p557 = pneg %p127
        $region54: #{qwen3_forward.1} parent=43 // pred_check_branch
          %559 = sbr.rel (%p557) target = $region56
        $region55: #{qwen3_forward.1} parent=43 // pred_region
          %s560 = sand.u32 %s117, 1
          %s561 = scalar_lea.sflag [#allocation6], %s560
          %s562 = sand.u32 %s117, 1
          %s563 = smul.addr %s562, 192
          %s564 = scalar_lea.vmem [#allocation5], %s563
          %s566 = ssub.s32 3072, 3072
          %567 = vsyncadd %s561, %s566
          %s568 = smul.addr %s51, 48
          %s569 = smul.addr %s568, 64
          %s570 = scalar_lea.hbm %s3, %s569
          %s571 = sshll.u32 %s564, 4
          %s572 = int_to_ptr.vmem [resolvable:$true] %s571
          %577 = dma.hbm_to_vmem [thread:$0]  %s570, 3072, %s572, %s561, 192, 192, 12
        $region56: #{qwen3_forward.1} parent=43 // pred_fallthru
          _
        // Predicated region
        $region57: #{qwen3_forward.1} parent=43 // pred_check
          %p578 = pneg %p153
        $region58: #{qwen3_forward.1} parent=43 // pred_check_branch
          %580 = sbr.rel (%p578) target = $region60
        $region59: #{qwen3_forward.1} parent=43 // pred_region
          %s581 = sand.u32 %s43, 1
          %s582 = scalar_lea.sflag [#allocation8], %s581
          %s583 = sand.u32 %s143, 1
          %s584 = scalar_lea.vmem [#allocation7], %s583
          %s586 = ssub.s32 16, 16
          %587 = vsyncadd %s582, %s586
          %s588 = smul.addr %s51, 16
          %s589 = scalar_lea.hbm %s4, %s588
          %s591 = sshll.u32 %s584, 4
          %s592 = int_to_ptr.vmem [resolvable:$true] %s591
          %594 = dma.hbm_to_vmem [thread:$0]  %s589, 16, %s592, %s582
        $region60: #{qwen3_forward.1} parent=43 // pred_fallthru
          _
        // Predicated region
        $region61: #{qwen3_forward.1} parent=43 // pred_check
          %p595 = pneg %p179
        $region62: #{qwen3_forward.1} parent=43 // pred_check_branch
          %597 = sbr.rel (%p595) target = $region64
        $region63: #{qwen3_forward.1} parent=43 // pred_region
          %s598 = sand.u32 %s43, 1
          %s599 = scalar_lea.sflag [#allocation8], %s598
          %s600 = sand.u32 %s169, 1
          %s601 = scalar_lea.vmem [#allocation9], %s600
          %s603 = ssub.s32 16, 16
          %604 = vsyncadd %s599, %s603
          %s605 = smul.addr %s51, 16
          %s606 = scalar_lea.hbm %s5, %s605
          %s608 = sshll.u32 %s601, 4
          %s609 = int_to_ptr.vmem [resolvable:$true] %s608
          %611 = dma.hbm_to_vmem [thread:$0]  %s606, 16, %s609, %s599
        $region64: #{qwen3_forward.1} parent=43 // pred_fallthru
          _
        // Predicated region
        $region65: #{qwen3_forward.1} parent=43 // pred_check
          %p612 = pneg %p205
        $region66: #{qwen3_forward.1} parent=43 // pred_check_branch
          %614 = sbr.rel (%p612) target = $region68
        $region67: #{qwen3_forward.1} parent=43 // pred_region
          %s615 = sand.u32 %s43, 1
          %s616 = scalar_lea.sflag [#allocation11], %s615
          %s617 = sand.u32 %s195, 1
          %s618 = smul.addr %s617, 64
          %s619 = scalar_lea.vmem [#allocation10], %s618
          %s621 = ssub.s32 1024, 1024
          %622 = vsyncadd %s616, %s621
          %s623 = smul.addr %s51, 16
          %s624 = smul.addr %s623, 64
          %s625 = scalar_lea.hbm %s6, %s624
          %s626 = sshll.u32 %s619, 4
          %s627 = int_to_ptr.vmem [resolvable:$true] %s626
          %632 = dma.hbm_to_vmem [thread:$0]  %s625, 1024, %s627, %s616, 64, 64, 4
        $region68: #{qwen3_forward.1} parent=43 // pred_fallthru
          _
        // Predicated region
        $region69: #{qwen3_forward.1} parent=43 // pred_check
          %p633 = pneg %p231
        $region70: #{qwen3_forward.1} parent=43 // pred_check_branch
          %635 = sbr.rel (%p633) target = $region72
        $region71: #{qwen3_forward.1} parent=43 // pred_region
          %p636 = scmp.lt.s32.totalorder %s51, 1
          %s637 = scalar_select %p636, %s51, 1
          %s638 = scalar_lea.vmem %s7, %s637
        $region72: #{qwen3_forward.1} parent=43 // pred_fallthru
          _
        // Predicated region
        $region73: #{qwen3_forward.1} parent=43 // pred_check
          %p639 = pneg %p257
        $region74: #{qwen3_forward.1} parent=43 // pred_check_branch
          %641 = sbr.rel (%p639) target = $region76
        $region75: #{qwen3_forward.1} parent=43 // pred_region
          %s642 = sand.u32 %s43, 1
          %s643 = scalar_lea.sflag [#allocation11], %s642
          %s644 = sand.u32 %s247, 1
          %s645 = smul.addr %s644, 256
          %s646 = scalar_lea.vmem [#allocation12], %s645
          %s648 = ssub.s32 4096, 4096
          %649 = vsyncadd %s643, %s648
          %s650 = smul.addr %s51, 64
          %s651 = smul.addr %s650, 64
          %s652 = scalar_lea.hbm %s8, %s651
          %s653 = sshll.u32 %s646, 4
          %s654 = int_to_ptr.vmem [resolvable:$true] %s653
          %659 = dma.hbm_to_vmem [thread:$0]  %s652, 4096, %s654, %s643, 256, 256, 16
        $region76: #{qwen3_forward.1} parent=43 // pred_fallthru
          _
        // Predicated region
        $region77: #{qwen3_forward.1} parent=43 // pred_check
          %p660 = pneg %p283
        $region78: #{qwen3_forward.1} parent=43 // pred_check_branch
          %662 = sbr.rel (%p660) target = $region80
        $region79: #{qwen3_forward.1} parent=43 // pred_region
          %s663 = sand.u32 %s43, 1
          %s664 = scalar_lea.sflag [#allocation14], %s663
          %s665 = sand.u32 %s273, 1
          %s666 = smul.addr %s665, 128
          %s667 = scalar_lea.vmem [#allocation13], %s666
          %s669 = ssub.s32 2048, 2048
          %670 = vsyncadd %s664, %s669
          %s671 = smul.addr %s51, 32
          %s672 = smul.addr %s671, 64
          %s673 = scalar_lea.hbm %s9, %s672
          %s674 = sshll.u32 %s667, 4
          %s675 = int_to_ptr.vmem [resolvable:$true] %s674
          %680 = dma.hbm_to_vmem [thread:$0]  %s673, 2048, %s675, %s664, 64, 64, 4
        $region80: #{qwen3_forward.1} parent=43 // pred_fallthru
          _
      $region44: #{qwen3_forward.1} parent=5 // pred_fallthru
        _
      %p681 = scmp.le.s32.totalorder 1, %s43
      %p682 = scmp.lt.s32.totalorder %s43, 5
      %p683 = pnand %p681, %p682
      %p684 = pneg %p683
      // Predicated region
      $region81: #{qwen3_forward.1} parent=5 // pred_check
        _
      $region82: #{qwen3_forward.1} parent=5 // pred_check_branch
        %686 = sbr.rel (%p683) target = $region84
      $region83: #{qwen3_forward.1} parent=5 // pred_region
        %s687 = ssub.s32 %s43, 1
        %s688 = sand.u32 %s120, 1
        %s689 = scalar_lea.sflag [#allocation6], %s688
        %s690 = sand.u32 %s120, 1
        %s691 = smul.addr %s690, 192
        %s692 = scalar_lea.vmem [#allocation5], %s691
        // Predicated region
        $region85: #{qwen3_forward.1} parent=83 // pred_check
          %p693 = pneg %p133
        $region86: #{qwen3_forward.1} parent=83 // pred_check_branch
          %695 = sbr.rel (%p693) target = $region88
        $region87: #{qwen3_forward.1} parent=83 // pred_region
          %696 = dma.done %s689, 3072
        $region88: #{qwen3_forward.1} parent=83 // pred_fallthru
          _
        %s697 = sand.u32 %s48, 1
        %s698 = scalar_lea.sflag [#allocation8], %s697
        %s699 = sand.u32 %s146, 1
        %s700 = scalar_lea.vmem [#allocation7], %s699
        // Predicated region
        $region89: #{qwen3_forward.1} parent=83 // pred_check
          %p701 = pneg %p159
        $region90: #{qwen3_forward.1} parent=83 // pred_check_branch
          %703 = sbr.rel (%p701) target = $region92
        $region91: #{qwen3_forward.1} parent=83 // pred_region
          %704 = dma.done %s698, 16
        $region92: #{qwen3_forward.1} parent=83 // pred_fallthru
          _
        %s705 = sand.u32 %s48, 1
        %s706 = scalar_lea.sflag [#allocation8], %s705
        %s707 = sand.u32 %s172, 1
        %s708 = scalar_lea.vmem [#allocation9], %s707
        // Predicated region
        $region93: #{qwen3_forward.1} parent=83 // pred_check
          %p709 = pneg %p185
        $region94: #{qwen3_forward.1} parent=83 // pred_check_branch
          %711 = sbr.rel (%p709) target = $region96
        $region95: #{qwen3_forward.1} parent=83 // pred_region
          %712 = dma.done %s706, 16
        $region96: #{qwen3_forward.1} parent=83 // pred_fallthru
          _
        %s713 = sand.u32 %s48, 1
        %s714 = scalar_lea.sflag [#allocation11], %s713
        %s715 = sand.u32 %s198, 1
        %s716 = smul.addr %s715, 64
        %s717 = scalar_lea.vmem [#allocation10], %s716
        // Predicated region
        $region97: #{qwen3_forward.1} parent=83 // pred_check
          %p718 = pneg %p211
        $region98: #{qwen3_forward.1} parent=83 // pred_check_branch
          %720 = sbr.rel (%p718) target = $region100
        $region99: #{qwen3_forward.1} parent=83 // pred_region
          %721 = dma.done %s714, 1024
        $region100: #{qwen3_forward.1} parent=83 // pred_fallthru
          _
        %s722 = sand.u32 %s48, 1
        %s723 = scalar_lea.sflag [#allocation11], %s722
        %s724 = sand.u32 %s250, 1
        %s725 = smul.addr %s724, 256
        %s726 = scalar_lea.vmem [#allocation12], %s725
        // Predicated region
        $region101: #{qwen3_forward.1} parent=83 // pred_check
          %p727 = pneg %p263
        $region102: #{qwen3_forward.1} parent=83 // pred_check_branch
          %729 = sbr.rel (%p727) target = $region104
        $region103: #{qwen3_forward.1} parent=83 // pred_region
          %730 = dma.done %s723, 4096
        $region104: #{qwen3_forward.1} parent=83 // pred_fallthru
          _
        %s731 = sand.u32 %s48, 1
        %s732 = scalar_lea.sflag [#allocation14], %s731
        %s733 = sand.u32 %s276, 1
        %s734 = smul.addr %s733, 128
        %s735 = scalar_lea.vmem [#allocation13], %s734
        // Predicated region
        $region105: #{qwen3_forward.1} parent=83 // pred_check
          %p736 = pneg %p289
        $region106: #{qwen3_forward.1} parent=83 // pred_check_branch
          %738 = sbr.rel (%p736) target = $region108
        $region107: #{qwen3_forward.1} parent=83 // pred_region
          %739 = dma.done %s732, 2048
        $region108: #{qwen3_forward.1} parent=83 // pred_fallthru
          _
        // Predicated region
        $region109: #{qwen3_forward.1} parent=83 // pred_check
          %p740 = pneg %p331
        $region110: #{qwen3_forward.1} parent=83 // pred_check_branch
          %742 = sbr.rel (%p740) target = $region112
        $region111: #{qwen3_forward.1} parent=83 // pred_region
          %743 = dma.done [#allocation14], 128
        $region112: #{qwen3_forward.1} parent=83 // pred_fallthru
          _
        // Predicated region
        $region113: #{qwen3_forward.1} parent=83 // pred_check
          %p744 = pneg %p352
        $region114: #{qwen3_forward.1} parent=83 // pred_check_branch
          %746 = sbr.rel (%p744) target = $region116
        $region115: #{qwen3_forward.1} parent=83 // pred_region
          %747 = dma.done [#allocation17], 128
        $region116: #{qwen3_forward.1} parent=83 // pred_fallthru
          _
        // Predicated region
        $region117: #{qwen3_forward.1} parent=83 // pred_check
          %p748 = pneg %p394
        $region118: #{qwen3_forward.1} parent=83 // pred_check_branch
          %750 = sbr.rel (%p748) target = $region120
        $region119: #{qwen3_forward.1} parent=83 // pred_region
          %751 = dma.done [#allocation17], 16
        $region120: #{qwen3_forward.1} parent=83 // pred_fallthru
          _
        // Predicated region
        $region121: #{qwen3_forward.1} parent=83 // pred_check
          %p752 = pneg %p415
        $region122: #{qwen3_forward.1} parent=83 // pred_check_branch
          %754 = sbr.rel (%p752) target = $region124
        $region123: #{qwen3_forward.1} parent=83 // pred_region
          %755 = dma.done [#allocation20], 1024
        $region124: #{qwen3_forward.1} parent=83 // pred_fallthru
          _
        // Predicated region
        $region125: #{qwen3_forward.1} parent=83 // pred_check
          %p756 = pneg %p436
        $region126: #{qwen3_forward.1} parent=83 // pred_check_branch
          %758 = sbr.rel (%p756) target = $region128
        $region127: #{qwen3_forward.1} parent=83 // pred_region
          %759 = dma.done [#allocation20], 16
        $region128: #{qwen3_forward.1} parent=83 // pred_fallthru
          _
        %p760 = scmp.lt.s32.totalorder %s52, 1
        %s761 = scalar_select %p760, %s52, 1
        %s762 = smul.addr %s761, 4
        %s763 = scalar_lea.vmem %s1, %s762
        %p764 = pneg %p81
        %p765 = pneg %p78
        %p766 = scmp.lt.s32.totalorder %s53, 1
        %s767 = scalar_select %p766, %s53, 1
        %s768 = scalar_lea.vmem %s2, %s767
        %p769 = pneg %p107
        %p770 = pneg %p104
        %s771 = sand.u32 %s120, 1
        %s772 = scalar_lea.sflag [#allocation6], %s771
        %s773 = sand.u32 %s120, 1
        %s774 = smul.addr %s773, 192
        %s775 = scalar_lea.vmem [#allocation5], %s774
        %p776 = pneg %p133
        %p777 = pneg %p130
        %s778 = sand.u32 %s48, 1
        %s779 = scalar_lea.sflag [#allocation8], %s778
        %s780 = sand.u32 %s146, 1
        %s781 = scalar_lea.vmem [#allocation7], %s780
        %p782 = pneg %p159
        %p783 = pneg %p156
        %s784 = sand.u32 %s48, 1
        %s785 = scalar_lea.sflag [#allocation8], %s784
        %s786 = sand.u32 %s172, 1
        %s787 = scalar_lea.vmem [#allocation9], %s786
        %p788 = pneg %p185
        %p789 = pneg %p182
        %s790 = sand.u32 %s48, 1
        %s791 = scalar_lea.sflag [#allocation11], %s790
        %s792 = sand.u32 %s198, 1
        %s793 = smul.addr %s792, 64
        %s794 = scalar_lea.vmem [#allocation10], %s793
        %p795 = pneg %p211
        %p796 = pneg %p208
        %p797 = scmp.lt.s32.totalorder %s53, 1
        %s798 = scalar_select %p797, %s53, 1
        %s799 = scalar_lea.vmem %s7, %s798
        %p800 = pneg %p237
        %p801 = pneg %p234
        %s802 = sand.u32 %s48, 1
        %s803 = scalar_lea.sflag [#allocation11], %s802
        %s804 = sand.u32 %s250, 1
        %s805 = smul.addr %s804, 256
        %s806 = scalar_lea.vmem [#allocation12], %s805
        %p807 = pneg %p263
        %p808 = pneg %p260
        %s809 = sand.u32 %s48, 1
        %s810 = scalar_lea.sflag [#allocation14], %s809
        %s811 = sand.u32 %s276, 1
        %s812 = smul.addr %s811, 128
        %s813 = scalar_lea.vmem [#allocation13], %s812
        %p814 = pneg %p289
        %p815 = pneg %p286
        %p816 = pneg %p310
        %p817 = pneg %p307
        %p818 = pneg %p331
        %p819 = pneg %p328
        %p820 = pneg %p352
        %p821 = pneg %p349
        %p822 = pneg %p373
        %p823 = pneg %p370
        %p824 = pneg %p394
        %p825 = pneg %p391
        %p826 = pneg %p415
        %p827 = pneg %p412
        %p828 = pneg %p436
        %p829 = pneg %p433
        %p830 = pneg %p462
        %p831 = pneg %p459
        %p832 = scmp.lt.s32.totalorder %s52, 1
        %s833 = scalar_select %p832, %s52, 1
        %s834 = scalar_lea.vmem %s17, %s833
        %p835 = scmp.lt.s32.totalorder %s52, 1
        %s836 = scalar_select %p835, %s52, 1
        %s837 = smul.addr %s836, 4
        %s838 = scalar_lea.vmem %s1, %s837
        %p839 = scmp.lt.s32.totalorder %s53, 1
        %s840 = scalar_select %p839, %s53, 1
        %s841 = scalar_lea.vmem %s2, %s840
        %p842 = scmp.lt.s32.totalorder %s53, 1
        %s843 = scalar_select %p842, %s53, 1
        %s844 = scalar_lea.vmem %s7, %s843
        %p845 = scmp.lt.s32.totalorder %s52, 1
        %s846 = scalar_select %p845, %s52, 1
        %s847 = scalar_lea.vmem %s17, %s846
        %p849 = scmp.eq.s32.totalorder %s53, 0
        // Predicated region
        $region129: #{qwen3_forward.1} parent=83 // pred_check
          %p850 = pneg %p849
        $region130: #{qwen3_forward.1} parent=83 // pred_check_branch
          %852 = sbr.rel (%p850) target = $region132
        $region131: #{qwen3_forward.1} parent=83 // pred_region
          %v853 = vld [vmem:[%s838] sm:$0xf]
          %v854 = vunpack.c.l.bf16 %v853
          %855 = vst [vmem:[#allocation2] sm:$0xff] %v854
        $region132: #{qwen3_forward.1} parent=83 // pred_fallthru
          _
        %v856 = vld [vmem:[#allocation2] sm:$0xff]
        %v857 = vld [vmem:[%s841] sm:$0x1]
        %v858 = vunpack.c.l.bf16 %v857
        %v859 = vmul.f32 %v856, %v856
        %860 = vadd.xlane.f32.xlu0 %v859
        %v861 = vpop.xlane.xlu0 %860
        %v862 = vrcp.pop 128.0
        %v863 = vmul.f32 %v861, %v862
        %v864 = vadd.f32 %v863, 1e-06
        %v865 = vrsqrt.pop %v864
        %v866 = vmul.f32 %v856, %v865
        %v867 = vlaneseq
        %v868 = vshrl.u32 %v867, 7
        %v869 = vsub.s32 0, %v868
        %v870 = vrot.slane %v858, %v869
        %v871 = vmul.f32 %v866, %v870
        %v872 = vpack.c.bf16 %v871, %v871
        %v873 = vld [vmem:[%s692] sm:$0xff]
        %v874 = vld [vmem:[%s692 + $0x8] sm:$0xf]
        %v875 = vld [vmem:[%s692 + $0xc] sm:$0xff]
        %v876 = vld [vmem:[%s692 + $0x14] sm:$0xf]
        %v877 = vld [vmem:[%s692 + $0x18] sm:$0xff]
        %v878 = vld [vmem:[%s692 + $0x20] sm:$0xf]
        %v879 = vld [vmem:[%s692 + $0x24] sm:$0xff]
        %v880 = vld [vmem:[%s692 + $0x2c] sm:$0xf]
        %v881 = vld [vmem:[%s692 + $0x30] sm:$0xff]
        %v882 = vld [vmem:[%s692 + $0x38] sm:$0xf]
        %v883 = vld [vmem:[%s692 + $0x3c] sm:$0xff]
        %v884 = vld [vmem:[%s692 + $0x44] sm:$0xf]
        %v885 = vld [vmem:[%s692 + $0x48] sm:$0xff]
        %v886 = vld [vmem:[%s692 + $0x50] sm:$0xf]
        %v887 = vld [vmem:[%s692 + $0x54] sm:$0xff]
        %v888 = vld [vmem:[%s692 + $0x5c] sm:$0xf]
        %v889 = vld [vmem:[%s692 + $0x60] sm:$0xff]
        %v890 = vld [vmem:[%s692 + $0x68] sm:$0xf]
        %v891 = vld [vmem:[%s692 + $0x6c] sm:$0xff]
        %v892 = vld [vmem:[%s692 + $0x74] sm:$0xf]
        %v893 = vld [vmem:[%s692 + $0x78] sm:$0xff]
        %v894 = vld [vmem:[%s692 + $0x80] sm:$0xf]
        %v895 = vld [vmem:[%s692 + $0x84] sm:$0xff]
        %v896 = vld [vmem:[%s692 + $0x8c] sm:$0xf]
        %v897 = vld [vmem:[%s692 + $0x90] sm:$0xff]
        %v898 = vld [vmem:[%s692 + $0x98] sm:$0xf]
        %v899 = vld [vmem:[%s692 + $0x9c] sm:$0xff]
        %v900 = vld [vmem:[%s692 + $0xa4] sm:$0xf]
        %v901 = vld [vmem:[%s692 + $0xa8] sm:$0xff]
        %v902 = vld [vmem:[%s692 + $0xb0] sm:$0xf]
        %v903 = vld [vmem:[%s692 + $0xb4] sm:$0xff]
        %v904 = vld [vmem:[%s692 + $0xbc] sm:$0xf]
        %v937 = vunpack.c.l.b16 %v873
        %v938 = vunpack.c.h.b16 %v873
        %v939 = vunpack.c.l.b16 %v874
        %v940 = vunpack.c.l.b16 %v875
        %v941 = vunpack.c.h.b16 %v875
        %v942 = vunpack.c.l.b16 %v876
        %v943 = vunpack.c.l.b16 %v877
        %v944 = vunpack.c.h.b16 %v877
        %v945 = vunpack.c.l.b16 %v878
        %v946 = vunpack.c.l.b16 %v879
        %v947 = vunpack.c.h.b16 %v879
        %v948 = vunpack.c.l.b16 %v880
        %v949 = vunpack.c.l.b16 %v881
        %v950 = vunpack.c.h.b16 %v881
        %v951 = vunpack.c.l.b16 %v882
        %v952 = vunpack.c.l.b16 %v883
        %v953 = vunpack.c.h.b16 %v883
        %v954 = vunpack.c.l.b16 %v884
        %v955 = vunpack.c.l.b16 %v885
        %v956 = vunpack.c.h.b16 %v885
        %v957 = vunpack.c.l.b16 %v886
        %v958 = vunpack.c.l.b16 %v887
        %v959 = vunpack.c.h.b16 %v887
        %v960 = vunpack.c.l.b16 %v888
        %v961 = vunpack.c.l.b16 %v889
        %v962 = vunpack.c.h.b16 %v889
        %v963 = vunpack.c.l.b16 %v890
        %v964 = vunpack.c.l.b16 %v891
        %v965 = vunpack.c.h.b16 %v891
        %v966 = vunpack.c.l.b16 %v892
        %v967 = vunpack.c.l.b16 %v893
        %v968 = vunpack.c.h.b16 %v893
        %v969 = vunpack.c.l.b16 %v894
        %v970 = vunpack.c.l.b16 %v895
        %v971 = vunpack.c.h.b16 %v895
        %v972 = vunpack.c.l.b16 %v896
        %v973 = vunpack.c.l.b16 %v897
        %v974 = vunpack.c.h.b16 %v897
        %v975 = vunpack.c.l.b16 %v898
        %v976 = vunpack.c.l.b16 %v899
        %v977 = vunpack.c.h.b16 %v899
        %v978 = vunpack.c.l.b16 %v900
        %v979 = vunpack.c.l.b16 %v901
        %v980 = vunpack.c.h.b16 %v901
        %v981 = vunpack.c.l.b16 %v902
        %v982 = vunpack.c.l.b16 %v903
        %v983 = vunpack.c.h.b16 %v903
        %v984 = vunpack.c.l.b16 %v904
        %v985 = vpack.c.b16 %v940, %v937
        %v986 = vpack.c.b16 %v941, %v938
        %v987 = vpack.c.b16 %v942, %v939
        %v988 = vpack.c.b16 %v946, %v943
        %v989 = vpack.c.b16 %v947, %v944
        %v990 = vpack.c.b16 %v948, %v945
        %v991 = vpack.c.b16 %v952, %v949
        %v992 = vpack.c.b16 %v953, %v950
        %v993 = vpack.c.b16 %v954, %v951
        %v994 = vpack.c.b16 %v958, %v955
        %v995 = vpack.c.b16 %v959, %v956
        %v996 = vpack.c.b16 %v960, %v957
        %v997 = vpack.c.b16 %v964, %v961
        %v998 = vpack.c.b16 %v965, %v962
        %v999 = vpack.c.b16 %v966, %v963
        %v1000 = vpack.c.b16 %v970, %v967
        %v1001 = vpack.c.b16 %v971, %v968
        %v1002 = vpack.c.b16 %v972, %v969
        %v1003 = vpack.c.b16 %v976, %v973
        %v1004 = vpack.c.b16 %v977, %v974
        %v1005 = vpack.c.b16 %v978, %v975
        %v1006 = vpack.c.b16 %v982, %v979
        %v1007 = vpack.c.b16 %v983, %v980
        %v1008 = vpack.c.b16 %v984, %v981
        %1033 = vmatprep.subr.bf16.mxu0 %v1007
        %1034 = vmatpush1.bf16.msra.mxu0 %v1006
        %1035 = vmatprep.subr.bf16.mxu0 %v1004
        %1036 = vmatpush1.bf16.msra.mxu0 %v1003
        %1037 = vmatprep.subr.bf16.mxu0 %v1001
        %1038 = vmatpush1.bf16.msra.mxu0 %v1000
        %1039 = vmatprep.subr.bf16.mxu0 %v998
        %1040 = vmatpush1.bf16.msra.mxu0 %v997
        %1041 = vmatprep.subr.bf16.mxu0 %v995
        %1042 = vmatpush1.bf16.msra.mxu0 %v994
        %1043 = vmatprep.subr.bf16.mxu0 %v992
        %1044 = vmatpush1.bf16.msra.mxu0 %v991
        %1045 = vmatprep.subr.bf16.mxu0 %v989
        %1046 = vmatpush1.bf16.msra.mxu0 %v988
        %1047 = vmatprep.subr.bf16.mxu0 %v986
        %1048 = vmatpush1.bf16.msra.mxu0 %v985
        %1049 = vmatprep.subr.bf16.mxu0 0
        %1050 = vmatpush2.bf16.msra.mxu0 0
        %1051 = vmatprep.subr.bf16.mxu0 0
        %1052 = vmatpush2.bf16.msra.mxu0 0
        %1053 = vmatprep.subr.bf16.mxu0 0
        %1054 = vmatpush2.bf16.msra.mxu0 0
        %1055 = vmatprep.subr.bf16.mxu0 0
        %1056 = vmatpush2.bf16.msra.mxu0 0
        %1057 = vmatprep.subr.bf16.mxu0 0
        %1058 = vmatpush2.bf16.msra.mxu0 0
        %1059 = vmatprep.subr.bf16.mxu0 0
        %1060 = vmatpush2.bf16.msra.mxu0 0
        %1061 = vmatprep.subr.bf16.mxu0 0
        %1062 = vmatpush2.bf16.msra.mxu0 0
        %1063 = vmatprep.subr.bf16.mxu0 0
        %1064 = vmatpush2.bf16.msra.mxu0 0
        %1065 = vmatprep.mubr.bf16.mxu0 0
        %1066 = vmatmul.mubr.bf16.gmra.mxu0 %v872
        %v1067 = vpop.f32.mrf.mxu0
        %v1068 = vadd.f32 0.0, %v1067
        %v1069 = vpop.f32.mrf.mxu0
        %v1070 = vadd.f32 0.0, %v1069
        %v1071 = vpop.f32.mrf.mxu0
        %v1072 = vpop.f32.mrf.mxu0
        %1073 = vdwg.mxu0
        %1074 = vmatprep.subr.bf16.mxu0 0
        %1075 = vmatpush1.bf16.msra.mxu0 %v1008
        %1076 = vmatprep.subr.bf16.mxu0 0
        %1077 = vmatpush1.bf16.msra.mxu0 %v1005
        %1078 = vmatprep.subr.bf16.mxu0 0
        %1079 = vmatpush1.bf16.msra.mxu0 %v1002
        %1080 = vmatprep.subr.bf16.mxu0 0
        %1081 = vmatpush1.bf16.msra.mxu0 %v999
        %1082 = vmatprep.subr.bf16.mxu0 0
        %1083 = vmatpush1.bf16.msra.mxu0 %v996
        %1084 = vmatprep.subr.bf16.mxu0 0
        %1085 = vmatpush1.bf16.msra.mxu0 %v993
        %1086 = vmatprep.subr.bf16.mxu0 0
        %1087 = vmatpush1.bf16.msra.mxu0 %v990
        %1088 = vmatprep.subr.bf16.mxu0 0
        %1089 = vmatpush1.bf16.msra.mxu0 %v987
        %1090 = vmatprep.subr.bf16.mxu0 0
        %1091 = vmatpush2.bf16.msra.mxu0 0
        %1092 = vmatprep.subr.bf16.mxu0 0
        %1093 = vmatpush2.bf16.msra.mxu0 0
        %1094 = vmatprep.subr.bf16.mxu0 0
        %1095 = vmatpush2.bf16.msra.mxu0 0
        %1096 = vmatprep.subr.bf16.mxu0 0
        %1097 = vmatpush2.bf16.msra.mxu0 0
        %1098 = vmatprep.subr.bf16.mxu0 0
        %1099 = vmatpush2.bf16.msra.mxu0 0
        %1100 = vmatprep.subr.bf16.mxu0 0
        %1101 = vmatpush2.bf16.msra.mxu0 0
        %1102 = vmatprep.subr.bf16.mxu0 0
        %1103 = vmatpush2.bf16.msra.mxu0 0
        %1104 = vmatprep.subr.bf16.mxu0 0
        %1105 = vmatpush2.bf16.msra.mxu0 0
        %1106 = vmatprep.mubr.bf16.mxu0 0
        %1107 = vmatmul.mubr.bf16.gmra.mxu0 %v872
        %v1108 = vpop.f32.mrf.mxu0
        %v1109 = vadd.f32 0.0, %v1108
        %v1110 = vpop.f32.mrf.mxu0
        %v1111 = vpop.f32.mrf.mxu0
        %v1112 = vpop.f32.mrf.mxu0
        %1113 = vdwg.mxu0
        %v1114 = vld [vmem:[%s13] sm:$0xff]
        %v1115 = vld [vmem:[%s13 + $0x8] sm:$0xff]
        %v1116 = vld [vmem:[%s13 + $0x10] sm:$0xff]
        %v1117 = vld [vmem:[%s13 + $0x18] sm:$0xff]
        %v1118 = vld [vmem:[%s13 + $0x20] sm:$0xff]
        %v1119 = vld [vmem:[%s13 + $0x28] sm:$0xff]
        %v1120 = vld [vmem:[%s13 + $0x30] sm:$0xff]
        %v1121 = vld [vmem:[%s13 + $0x38] sm:$0xff]
        %v1122 = vld [vmem:[%s13 + $0x40] sm:$0xff]
        %v1123 = vld [vmem:[%s13 + $0x48] sm:$0xff]
        %v1124 = vld [vmem:[%s13 + $0x50] sm:$0xff]
        %v1125 = vld [vmem:[%s13 + $0x58] sm:$0xff]
        %v1126 = vld [vmem:[%s13 + $0x60] sm:$0xff]
        %v1127 = vld [vmem:[%s13 + $0x68] sm:$0xff]
        %v1128 = vld [vmem:[%s13 + $0x70] sm:$0xff]
        %v1129 = vld [vmem:[%s13 + $0x78] sm:$0xff]
        %v1130 = vmul.f32 %v1068, %v1068
        %v1131 = vmul.f32 %v1070, %v1070
        %v1132 = vld [vmem:[%s700] sm:$0x1]
        %v1133 = vld [vmem:[%s708] sm:$0x1]
        %1134 = vmatprep.subr.mxu0 0.0
        %1135 = vmatpush1.msra.mxu0 %v1129
        %1136 = vmatprep.subr.mxu0 0.0
        %1137 = vmatpush1.msra.mxu0 %v1128
        %1138 = vmatprep.subr.mxu0 0.0
        %1139 = vmatpush1.msra.mxu0 %v1127
        %1140 = vmatprep.subr.mxu0 0.0
        %1141 = vmatpush1.msra.mxu0 %v1126
        %1142 = vmatprep.subr.mxu0 0.0
        %1143 = vmatpush1.msra.mxu0 %v1125
        %1144 = vmatprep.subr.mxu0 0.0
        %1145 = vmatpush1.msra.mxu0 %v1124
        %1146 = vmatprep.subr.mxu0 0.0
        %1147 = vmatpush1.msra.mxu0 %v1123
        %1148 = vmatprep.subr.mxu0 0.0
        %1149 = vmatpush1.msra.mxu0 %v1122
        %1150 = vmatprep.subr.mxu0 0.0
        %1151 = vmatpush1.msra.mxu0 %v1121
        %1152 = vmatprep.subr.mxu0 0.0
        %1153 = vmatpush1.msra.mxu0 %v1120
        %1154 = vmatprep.subr.mxu0 0.0
        %1155 = vmatpush1.msra.mxu0 %v1119
        %1156 = vmatprep.subr.mxu0 0.0
        %1157 = vmatpush1.msra.mxu0 %v1118
        %1158 = vmatprep.subr.mxu0 0.0
        %1159 = vmatpush1.msra.mxu0 %v1117
        %1160 = vmatprep.subr.mxu0 0.0
        %1161 = vmatpush1.msra.mxu0 %v1116
        %1162 = vmatprep.subr.mxu0 0.0
        %1163 = vmatpush1.msra.mxu0 %v1115
        %1164 = vmatprep.subr.mxu0 0.0
        %1165 = vmatpush1.msra.mxu0 %v1114
        %1166 = vmatprep.subr.mxu0 0.0
        %1167 = vmatpush2.msra.mxu0 0.0
        %1168 = vmatprep.subr.mxu0 0.0
        %1169 = vmatpush2.msra.mxu0 0.0
        %1170 = vmatprep.subr.mxu0 0.0
        %1171 = vmatpush2.msra.mxu0 0.0
        %1172 = vmatprep.subr.mxu0 0.0
        %1173 = vmatpush2.msra.mxu0 0.0
        %1174 = vmatprep.subr.mxu0 0.0
        %1175 = vmatpush2.msra.mxu0 0.0
        %1176 = vmatprep.subr.mxu0 0.0
        %1177 = vmatpush2.msra.mxu0 0.0
        %1178 = vmatprep.subr.mxu0 0.0
        %1179 = vmatpush2.msra.mxu0 0.0
        %1180 = vmatprep.subr.mxu0 0.0
        %1181 = vmatpush2.msra.mxu0 0.0
        %1182 = vmatprep.subr.mxu0 0.0
        %1183 = vmatpush2.msra.mxu0 0.0
        %1184 = vmatprep.subr.mxu0 0.0
        %1185 = vmatpush2.msra.mxu0 0.0
        %1186 = vmatprep.subr.mxu0 0.0
        %1187 = vmatpush2.msra.mxu0 0.0
        %1188 = vmatprep.subr.mxu0 0.0
        %1189 = vmatpush2.msra.mxu0 0.0
        %1190 = vmatprep.subr.mxu0 0.0
        %1191 = vmatpush2.msra.mxu0 0.0
        %1192 = vmatprep.subr.mxu0 0.0
        %1193 = vmatpush2.msra.mxu0 0.0
        %1194 = vmatprep.subr.mxu0 0.0
        %1195 = vmatpush2.msra.mxu0 0.0
        %1196 = vmatprep.subr.mxu0 0.0
        %1197 = vmatpush2.msra.mxu0 0.0
        %1198 = vmatprep.mubr.f32.mxu0 0.0
        %1199 = vmatmul.mubr.f32.gmra.mxu0 %v1130
        %v1200 = vpop.f32.mrf.mxu0
        %v1201 = vadd.f32 1e-06, %v1200
        %v1202 = vpop.f32.mrf.mxu0
        %1203 = vdwg.mxu0
        %v1204 = vrsqrt.pop %v1201
        %v1205 = vmul.f32 %v1068, %v1204
        %v1207 = vlaneseq
        %v1208 = vshrl.u32 %v1207, 7
        %v1209 = vsub.s32 0, %v1208
        %v1210 = vrot.slane %v1132, %v1209
        %v1212 = vmul.f32 %v1205, %v1210
        %1213 = vmatprep.subr.mxu0 0.0
        %1214 = vmatpush1.msra.mxu0 %v1129
        %1215 = vmatprep.subr.mxu0 0.0
        %1216 = vmatpush1.msra.mxu0 %v1128
        %1217 = vmatprep.subr.mxu0 0.0
        %1218 = vmatpush1.msra.mxu0 %v1127
        %1219 = vmatprep.subr.mxu0 0.0
        %1220 = vmatpush1.msra.mxu0 %v1126
        %1221 = vmatprep.subr.mxu0 0.0
        %1222 = vmatpush1.msra.mxu0 %v1125
        %1223 = vmatprep.subr.mxu0 0.0
        %1224 = vmatpush1.msra.mxu0 %v1124
        %1225 = vmatprep.subr.mxu0 0.0
        %1226 = vmatpush1.msra.mxu0 %v1123
        %1227 = vmatprep.subr.mxu0 0.0
        %1228 = vmatpush1.msra.mxu0 %v1122
        %1229 = vmatprep.subr.mxu0 0.0
        %1230 = vmatpush1.msra.mxu0 %v1121
        %1231 = vmatprep.subr.mxu0 0.0
        %1232 = vmatpush1.msra.mxu0 %v1120
        %1233 = vmatprep.subr.mxu0 0.0
        %1234 = vmatpush1.msra.mxu0 %v1119
        %1235 = vmatprep.subr.mxu0 0.0
        %1236 = vmatpush1.msra.mxu0 %v1118
        %1237 = vmatprep.subr.mxu0 0.0
        %1238 = vmatpush1.msra.mxu0 %v1117
        %1239 = vmatprep.subr.mxu0 0.0
        %1240 = vmatpush1.msra.mxu0 %v1116
        %1241 = vmatprep.subr.mxu0 0.0
        %1242 = vmatpush1.msra.mxu0 %v1115
        %1243 = vmatprep.subr.mxu0 0.0
        %1244 = vmatpush1.msra.mxu0 %v1114
        %1245 = vmatprep.subr.mxu0 0.0
        %1246 = vmatpush2.msra.mxu0 0.0
        %1247 = vmatprep.subr.mxu0 0.0
        %1248 = vmatpush2.msra.mxu0 0.0
        %1249 = vmatprep.subr.mxu0 0.0
        %1250 = vmatpush2.msra.mxu0 0.0
        %1251 = vmatprep.subr.mxu0 0.0
        %1252 = vmatpush2.msra.mxu0 0.0
        %1253 = vmatprep.subr.mxu0 0.0
        %1254 = vmatpush2.msra.mxu0 0.0
        %1255 = vmatprep.subr.mxu0 0.0
        %1256 = vmatpush2.msra.mxu0 0.0
        %1257 = vmatprep.subr.mxu0 0.0
        %1258 = vmatpush2.msra.mxu0 0.0
        %1259 = vmatprep.subr.mxu0 0.0
        %1260 = vmatpush2.msra.mxu0 0.0
        %1261 = vmatprep.subr.mxu0 0.0
        %1262 = vmatpush2.msra.mxu0 0.0
        %1263 = vmatprep.subr.mxu0 0.0
        %1264 = vmatpush2.msra.mxu0 0.0
        %1265 = vmatprep.subr.mxu0 0.0
        %1266 = vmatpush2.msra.mxu0 0.0
        %1267 = vmatprep.subr.mxu0 0.0
        %1268 = vmatpush2.msra.mxu0 0.0
        %1269 = vmatprep.subr.mxu0 0.0
        %1270 = vmatpush2.msra.mxu0 0.0
        %1271 = vmatprep.subr.mxu0 0.0
        %1272 = vmatpush2.msra.mxu0 0.0
        %1273 = vmatprep.subr.mxu0 0.0
        %1274 = vmatpush2.msra.mxu0 0.0
        %1275 = vmatprep.subr.mxu0 0.0
        %1276 = vmatpush2.msra.mxu0 0.0
        %1277 = vmatprep.mubr.f32.mxu0 0.0
        %1278 = vmatmul.mubr.f32.gmra.mxu0 %v1131
        %v1279 = vpop.f32.mrf.mxu0
        %v1280 = vadd.f32 1e-06, %v1279
        %v1281 = vpop.f32.mrf.mxu0
        %1282 = vdwg.mxu0
        %v1283 = vrsqrt.pop %v1280
        %v1284 = vmul.f32 %v1070, %v1283
        %v1286 = vlaneseq
        %v1287 = vshrl.u32 %v1286, 7
        %v1288 = vsub.s32 0, %v1287
        %v1289 = vrot.slane %v1133, %v1288
        %v1291 = vmul.f32 %v1284, %v1289
        %v1292 = vld [vmem:[%s10] sm:$0xff]
        %v1293 = vld [vmem:[#allocation15] sm:$0xff]
        %v1294 = vld [vmem:[#allocation16] sm:$0xff]
        %v1295 = vmul.f32 %v1212, %v1292
        %1296 = vrot.lane.b32.xlu0 %v1212, 112
        %v1297 = vpop.permute.xlu0 %1296
        %v1298 = vmul.f32 %v1297, %v1293
        %v1299 = vadd.f32 %v1295, %v1298
        %1300 = vrot.lane.b32.xlu0 %v1212, 16
        %v1301 = vpop.permute.xlu0 %1300
        %v1302 = vmul.f32 %v1301, %v1294
        %v1303 = vadd.f32 %v1299, %v1302
        %v1304 = vmul.f32 %v1291, %v1292
        %1305 = vrot.lane.b32.xlu0 %v1291, 112
        %v1306 = vpop.permute.xlu0 %1305
        %v1307 = vmul.f32 %v1306, %v1293
        %v1308 = vadd.f32 %v1304, %v1307
        %1309 = vrot.lane.b32.xlu0 %v1291, 16
        %v1310 = vpop.permute.xlu0 %1309
        %v1311 = vmul.f32 %v1310, %v1294
        %v1312 = vadd.f32 %v1308, %v1311
        %v1313 = vpack.c.bf16 %v1303, %v1303
        %v1314 = vpack.c.bf16 %v1312, %v1312
        %v1315 = vpack.c.bf16 %v1109, %v1109
        %s1316 = sld [smem:[#allocation4 + %s52]]
        %v1317 = vlaneseq
        %v1318 = vshrl.u32 %v1317, 7
        %v1319 = vlaneseq
        %v1320 = vand.u32 %v1319, 127
        %vm1321 = vcmp.le.s32.totalorder %v1320, %v1318
        %v1322 = vstv %s1316
        %vm1323 = vcmp.lt.s32.totalorder %v1320, %v1322
        %vm1324 = vmand %vm1321, %vm1323
        %v1325 = vsel %vm1324, 0.0, -1e+09
        %vm1326 = vcmask 261120
        %v1328 = vsel %vm1326, %v1313, 0
        %v1331 = vsel %vm1326, %v1314, 0
        %1333 = vmatprep.subr.bf16.mxu0 0
        %1334 = vmatpush1.bf16.xpose.msra.mxu0 0
        %1335 = vmatprep.subr.bf16.mxu0 0
        %1336 = vmatpush1.bf16.xpose.msra.mxu0 0
        %1337 = vmatprep.subr.bf16.mxu0 0
        %1338 = vmatpush1.bf16.xpose.msra.mxu0 0
        %1339 = vmatprep.subr.bf16.mxu0 0
        %1340 = vmatpush1.bf16.xpose.msra.mxu0 0
        %1341 = vmatprep.subr.bf16.mxu0 0
        %1342 = vmatpush1.bf16.xpose.msra.mxu0 0
        %1343 = vmatprep.subr.bf16.mxu0 0
        %1344 = vmatpush1.bf16.xpose.msra.mxu0 0
        %1345 = vmatprep.subr.bf16.mxu0 0
        %1346 = vmatpush1.bf16.xpose.msra.mxu0 0
        %1347 = vmatprep.subr.bf16.mxu0 0
        %1348 = vmatpush1.bf16.xpose.msra.mxu0 %v1331
        %1349 = vmatprep.subr.bf16.mxu0 0
        %1350 = vmatpush2.bf16.xpose.msra.mxu0 0
        %1351 = vmatprep.subr.bf16.mxu0 0
        %1352 = vmatpush2.bf16.xpose.msra.mxu0 0
        %1353 = vmatprep.subr.bf16.mxu0 0
        %1354 = vmatpush2.bf16.xpose.msra.mxu0 0
        %1355 = vmatprep.subr.bf16.mxu0 0
        %1356 = vmatpush2.bf16.xpose.msra.mxu0 0
        %1357 = vmatprep.subr.bf16.mxu0 0
        %1358 = vmatpush2.bf16.xpose.msra.mxu0 0
        %1359 = vmatprep.subr.bf16.mxu0 0
        %1360 = vmatpush2.bf16.xpose.msra.mxu0 0
        %1361 = vmatprep.subr.bf16.mxu0 0
        %1362 = vmatpush2.bf16.xpose.msra.mxu0 0
        %1363 = vmatprep.subr.bf16.mxu0 0
        %1364 = vmatpush2.bf16.xpose.msra.mxu0 0
        %1365 = vmatprep.mubr.bf16.mxu0 0
        %1366 = vmatmul.mubr.bf16.gmra.mxu0 %v1328
        %v1367 = vpop.f32.mrf.mxu0
        %v1368 = vadd.f32 %v1325, %v1367
        %v1369 = vpop.f32.mrf.mxu0
        %v1370 = vpop.f32.mrf.mxu0
        %v1371 = vpop.f32.mrf.mxu0
        %1372 = vdwg.mxu0
        %vm1373 = vcmask 64512
        %v1374 = vsel %vm1373, %v1368, -inf
        %1375 = vmax.xlane.f32.xlu0 %v1374
        %v1376 = vpop.xlane.xlu0 %1375
        %v1377 = vsub.f32 %v1368, %v1376
        %v1378 = vmul.f32 %v1377, 1.442695
        %v1379 = vpow.pop %v1378
        %v1380 = vsel %vm1373, %v1379, 0.0
        %1381 = vadd.xlane.f32.xlu0 %v1380
        %v1382 = vpop.xlane.xlu0 %1381
        %v1383 = vrcp.pop %v1382
        %v1384 = vmul.f32 %v1379, %v1383
        %v1385 = vpack.c.bf16 %v1384, %v1384
        %v1387 = vsel %vm1373, %v1385, 0
        %vm1389 = vcmask 1043456
        %v1391 = vsel %vm1389, %v1315, 0
        %1393 = vmatprep.subr.bf16.mxu0 0
        %1394 = vmatpush1.bf16.msra.mxu0 0
        %1395 = vmatprep.subr.bf16.mxu0 0
        %1396 = vmatpush1.bf16.msra.mxu0 0
        %1397 = vmatprep.subr.bf16.mxu0 0
        %1398 = vmatpush1.bf16.msra.mxu0 0
        %1399 = vmatprep.subr.bf16.mxu0 0
        %1400 = vmatpush1.bf16.msra.mxu0 0
        %1401 = vmatprep.subr.bf16.mxu0 0
        %1402 = vmatpush1.bf16.msra.mxu0 0
        %1403 = vmatprep.subr.bf16.mxu0 0
        %1404 = vmatpush1.bf16.msra.mxu0 0
        %1405 = vmatprep.subr.bf16.mxu0 0
        %1406 = vmatpush1.bf16.msra.mxu0 0
        %1407 = vmatprep.subr.bf16.mxu0 0
        %1408 = vmatpush1.bf16.msra.mxu0 %v1391
        %1409 = vmatprep.subr.bf16.mxu0 0
        %1410 = vmatpush2.bf16.msra.mxu0 0
        %1411 = vmatprep.subr.bf16.mxu0 0
        %1412 = vmatpush2.bf16.msra.mxu0 0
        %1413 = vmatprep.subr.bf16.mxu0 0
        %1414 = vmatpush2.bf16.msra.mxu0 0
        %1415 = vmatprep.subr.bf16.mxu0 0
        %1416 = vmatpush2.bf16.msra.mxu0 0
        %1417 = vmatprep.subr.bf16.mxu0 0
        %1418 = vmatpush2.bf16.msra.mxu0 0
        %1419 = vmatprep.subr.bf16.mxu0 0
        %1420 = vmatpush2.bf16.msra.mxu0 0
        %1421 = vmatprep.subr.bf16.mxu0 0
        %1422 = vmatpush2.bf16.msra.mxu0 0
        %1423 = vmatprep.subr.bf16.mxu0 0
        %1424 = vmatpush2.bf16.msra.mxu0 0
        %1425 = vmatprep.mubr.bf16.mxu0 0
        %1426 = vmatmul.mubr.bf16.gmra.mxu0 %v1387
        %v1427 = vpop.f32.mrf.mxu0
        %v1428 = vadd.f32 0.0, %v1427
        %v1429 = vpop.f32.mrf.mxu0
        %v1430 = vpop.f32.mrf.mxu0
        %v1431 = vpop.f32.mrf.mxu0
        %1432 = vdwg.mxu0
        %1434 = vrot.lane.b32.xlu0 %v1313, 96
        %v1435 = vpop.permute.xlu0 %1434
        %1437 = vrot.lane.b32.xlu0 %v1314, 96
        %v1438 = vpop.permute.xlu0 %1437
        %v1440 = vsel %vm1326, %v1435, 0
        %v1443 = vsel %vm1326, %v1438, 0
        %1445 = vmatprep.subr.bf16.mxu0 0
        %1446 = vmatpush1.bf16.xpose.msra.mxu0 0
        %1447 = vmatprep.subr.bf16.mxu0 0
        %1448 = vmatpush1.bf16.xpose.msra.mxu0 0
        %1449 = vmatprep.subr.bf16.mxu0 0
        %1450 = vmatpush1.bf16.xpose.msra.mxu0 0
        %1451 = vmatprep.subr.bf16.mxu0 0
        %1452 = vmatpush1.bf16.xpose.msra.mxu0 0
        %1453 = vmatprep.subr.bf16.mxu0 0
        %1454 = vmatpush1.bf16.xpose.msra.mxu0 0
        %1455 = vmatprep.subr.bf16.mxu0 0
        %1456 = vmatpush1.bf16.xpose.msra.mxu0 0
        %1457 = vmatprep.subr.bf16.mxu0 0
        %1458 = vmatpush1.bf16.xpose.msra.mxu0 0
        %1459 = vmatprep.subr.bf16.mxu0 0
        %1460 = vmatpush1.bf16.xpose.msra.mxu0 %v1443
        %1461 = vmatprep.subr.bf16.mxu0 0
        %1462 = vmatpush2.bf16.xpose.msra.mxu0 0
        %1463 = vmatprep.subr.bf16.mxu0 0
        %1464 = vmatpush2.bf16.xpose.msra.mxu0 0
        %1465 = vmatprep.subr.bf16.mxu0 0
        %1466 = vmatpush2.bf16.xpose.msra.mxu0 0
        %1467 = vmatprep.subr.bf16.mxu0 0
        %1468 = vmatpush2.bf16.xpose.msra.mxu0 0
        %1469 = vmatprep.subr.bf16.mxu0 0
        %1470 = vmatpush2.bf16.xpose.msra.mxu0 0
        %1471 = vmatprep.subr.bf16.mxu0 0
        %1472 = vmatpush2.bf16.xpose.msra.mxu0 0
        %1473 = vmatprep.subr.bf16.mxu0 0
        %1474 = vmatpush2.bf16.xpose.msra.mxu0 0
        %1475 = vmatprep.subr.bf16.mxu0 0
        %1476 = vmatpush2.bf16.xpose.msra.mxu0 0
        %1477 = vmatprep.mubr.bf16.mxu0 0
        %1478 = vmatmul.mubr.bf16.gmra.mxu0 %v1440
        %v1479 = vpop.f32.mrf.mxu0
        %v1480 = vadd.f32 %v1325, %v1479
        %v1481 = vpop.f32.mrf.mxu0
        %v1482 = vpop.f32.mrf.mxu0
        %v1483 = vpop.f32.mrf.mxu0
        %1484 = vdwg.mxu0
        %v1485 = vsel %vm1373, %v1480, -inf
        %1486 = vmax.xlane.f32.xlu0 %v1485
        %v1487 = vpop.xlane.xlu0 %1486
        %v1488 = vsub.f32 %v1480, %v1487
        %v1489 = vmul.f32 %v1488, 1.442695
        %v1490 = vpow.pop %v1489
        %v1491 = vsel %vm1373, %v1490, 0.0
        %1492 = vadd.xlane.f32.xlu0 %v1491
        %v1493 = vpop.xlane.xlu0 %1492
        %v1494 = vrcp.pop %v1493
        %v1495 = vmul.f32 %v1490, %v1494
        %v1496 = vpack.c.bf16 %v1495, %v1495
        %1498 = vrot.lane.b32.xlu0 %v1315, 96
        %v1499 = vpop.permute.xlu0 %1498
        %v1501 = vsel %vm1373, %v1496, 0
        %v1504 = vsel %vm1389, %v1499, 0
        %1506 = vmatprep.subr.bf16.mxu0 0
        %1507 = vmatpush1.bf16.msra.mxu0 0
        %1508 = vmatprep.subr.bf16.mxu0 0
        %1509 = vmatpush1.bf16.msra.mxu0 0
        %1510 = vmatprep.subr.bf16.mxu0 0
        %1511 = vmatpush1.bf16.msra.mxu0 0
        %1512 = vmatprep.subr.bf16.mxu0 0
        %1513 = vmatpush1.bf16.msra.mxu0 0
        %1514 = vmatprep.subr.bf16.mxu0 0
        %1515 = vmatpush1.bf16.msra.mxu0 0
        %1516 = vmatprep.subr.bf16.mxu0 0
        %1517 = vmatpush1.bf16.msra.mxu0 0
        %1518 = vmatprep.subr.bf16.mxu0 0
        %1519 = vmatpush1.bf16.msra.mxu0 0
        %1520 = vmatprep.subr.bf16.mxu0 0
        %1521 = vmatpush1.bf16.msra.mxu0 %v1504
        %1522 = vmatprep.subr.bf16.mxu0 0
        %1523 = vmatpush2.bf16.msra.mxu0 0
        %1524 = vmatprep.subr.bf16.mxu0 0
        %1525 = vmatpush2.bf16.msra.mxu0 0
        %1526 = vmatprep.subr.bf16.mxu0 0
        %1527 = vmatpush2.bf16.msra.mxu0 0
        %1528 = vmatprep.subr.bf16.mxu0 0
        %1529 = vmatpush2.bf16.msra.mxu0 0
        %1530 = vmatprep.subr.bf16.mxu0 0
        %1531 = vmatpush2.bf16.msra.mxu0 0
        %1532 = vmatprep.subr.bf16.mxu0 0
        %1533 = vmatpush2.bf16.msra.mxu0 0
        %1534 = vmatprep.subr.bf16.mxu0 0
        %1535 = vmatpush2.bf16.msra.mxu0 0
        %1536 = vmatprep.subr.bf16.mxu0 0
        %1537 = vmatpush2.bf16.msra.mxu0 0
        %1538 = vmatprep.mubr.bf16.mxu0 0
        %1539 = vmatmul.mubr.bf16.gmra.mxu0 %v1501
        %v1540 = vpop.f32.mrf.mxu0
        %v1541 = vadd.f32 0.0, %v1540
        %v1542 = vpop.f32.mrf.mxu0
        %v1543 = vpop.f32.mrf.mxu0
        %v1544 = vpop.f32.mrf.mxu0
        %1545 = vdwg.mxu0
        %1546 = vrot.lane.b32.xlu0 %v1313, 64
        %v1547 = vpop.permute.xlu0 %1546
        %1548 = vrot.lane.b32.xlu0 %v1314, 64
        %v1549 = vpop.permute.xlu0 %1548
        %v1551 = vsel %vm1326, %v1547, 0
        %v1554 = vsel %vm1326, %v1549, 0
        %1556 = vmatprep.subr.bf16.mxu0 0
        %1557 = vmatpush1.bf16.xpose.msra.mxu0 0
        %1558 = vmatprep.subr.bf16.mxu0 0
        %1559 = vmatpush1.bf16.xpose.msra.mxu0 0
        %1560 = vmatprep.subr.bf16.mxu0 0
        %1561 = vmatpush1.bf16.xpose.msra.mxu0 0
        %1562 = vmatprep.subr.bf16.mxu0 0
        %1563 = vmatpush1.bf16.xpose.msra.mxu0 0
        %1564 = vmatprep.subr.bf16.mxu0 0
        %1565 = vmatpush1.bf16.xpose.msra.mxu0 0
        %1566 = vmatprep.subr.bf16.mxu0 0
        %1567 = vmatpush1.bf16.xpose.msra.mxu0 0
        %1568 = vmatprep.subr.bf16.mxu0 0
        %1569 = vmatpush1.bf16.xpose.msra.mxu0 0
        %1570 = vmatprep.subr.bf16.mxu0 0
        %1571 = vmatpush1.bf16.xpose.msra.mxu0 %v1554
        %1572 = vmatprep.subr.bf16.mxu0 0
        %1573 = vmatpush2.bf16.xpose.msra.mxu0 0
        %1574 = vmatprep.subr.bf16.mxu0 0
        %1575 = vmatpush2.bf16.xpose.msra.mxu0 0
        %1576 = vmatprep.subr.bf16.mxu0 0
        %1577 = vmatpush2.bf16.xpose.msra.mxu0 0
        %1578 = vmatprep.subr.bf16.mxu0 0
        %1579 = vmatpush2.bf16.xpose.msra.mxu0 0
        %1580 = vmatprep.subr.bf16.mxu0 0
        %1581 = vmatpush2.bf16.xpose.msra.mxu0 0
        %1582 = vmatprep.subr.bf16.mxu0 0
        %1583 = vmatpush2.bf16.xpose.msra.mxu0 0
        %1584 = vmatprep.subr.bf16.mxu0 0
        %1585 = vmatpush2.bf16.xpose.msra.mxu0 0
        %1586 = vmatprep.subr.bf16.mxu0 0
        %1587 = vmatpush2.bf16.xpose.msra.mxu0 0
        %1588 = vmatprep.mubr.bf16.mxu0 0
        %1589 = vmatmul.mubr.bf16.gmra.mxu0 %v1551
        %v1590 = vpop.f32.mrf.mxu0
        %v1591 = vadd.f32 %v1325, %v1590
        %v1592 = vpop.f32.mrf.mxu0
        %v1593 = vpop.f32.mrf.mxu0
        %v1594 = vpop.f32.mrf.mxu0
        %1595 = vdwg.mxu0
        %v1596 = vsel %vm1373, %v1591, -inf
        %1597 = vmax.xlane.f32.xlu0 %v1596
        %v1598 = vpop.xlane.xlu0 %1597
        %v1599 = vsub.f32 %v1591, %v1598
        %v1600 = vmul.f32 %v1599, 1.442695
        %v1601 = vpow.pop %v1600
        %v1602 = vsel %vm1373, %v1601, 0.0
        %1603 = vadd.xlane.f32.xlu0 %v1602
        %v1604 = vpop.xlane.xlu0 %1603
        %v1605 = vrcp.pop %v1604
        %v1606 = vmul.f32 %v1601, %v1605
        %v1607 = vpack.c.bf16 %v1606, %v1606
        %1608 = vrot.lane.b32.xlu0 %v1315, 64
        %v1609 = vpop.permute.xlu0 %1608
        %v1611 = vsel %vm1373, %v1607, 0
        %v1614 = vsel %vm1389, %v1609, 0
        %1616 = vmatprep.subr.bf16.mxu0 0
        %1617 = vmatpush1.bf16.msra.mxu0 0
        %1618 = vmatprep.subr.bf16.mxu0 0
        %1619 = vmatpush1.bf16.msra.mxu0 0
        %1620 = vmatprep.subr.bf16.mxu0 0
        %1621 = vmatpush1.bf16.msra.mxu0 0
        %1622 = vmatprep.subr.bf16.mxu0 0
        %1623 = vmatpush1.bf16.msra.mxu0 0
        %1624 = vmatprep.subr.bf16.mxu0 0
        %1625 = vmatpush1.bf16.msra.mxu0 0
        %1626 = vmatprep.subr.bf16.mxu0 0
        %1627 = vmatpush1.bf16.msra.mxu0 0
        %1628 = vmatprep.subr.bf16.mxu0 0
        %1629 = vmatpush1.bf16.msra.mxu0 0
        %1630 = vmatprep.subr.bf16.mxu0 0
        %1631 = vmatpush1.bf16.msra.mxu0 %v1614
        %1632 = vmatprep.subr.bf16.mxu0 0
        %1633 = vmatpush2.bf16.msra.mxu0 0
        %1634 = vmatprep.subr.bf16.mxu0 0
        %1635 = vmatpush2.bf16.msra.mxu0 0
        %1636 = vmatprep.subr.bf16.mxu0 0
        %1637 = vmatpush2.bf16.msra.mxu0 0
        %1638 = vmatprep.subr.bf16.mxu0 0
        %1639 = vmatpush2.bf16.msra.mxu0 0
        %1640 = vmatprep.subr.bf16.mxu0 0
        %1641 = vmatpush2.bf16.msra.mxu0 0
        %1642 = vmatprep.subr.bf16.mxu0 0
        %1643 = vmatpush2.bf16.msra.mxu0 0
        %1644 = vmatprep.subr.bf16.mxu0 0
        %1645 = vmatpush2.bf16.msra.mxu0 0
        %1646 = vmatprep.subr.bf16.mxu0 0
        %1647 = vmatpush2.bf16.msra.mxu0 0
        %1648 = vmatprep.mubr.bf16.mxu0 0
        %1649 = vmatmul.mubr.bf16.gmra.mxu0 %v1611
        %v1650 = vpop.f32.mrf.mxu0
        %v1651 = vadd.f32 0.0, %v1650
        %v1652 = vpop.f32.mrf.mxu0
        %v1653 = vpop.f32.mrf.mxu0
        %v1654 = vpop.f32.mrf.mxu0
        %1655 = vdwg.mxu0
        %1656 = vrot.lane.b32.xlu0 %v1313, 32
        %v1657 = vpop.permute.xlu0 %1656
        %1658 = vrot.lane.b32.xlu0 %v1314, 32
        %v1659 = vpop.permute.xlu0 %1658
        %v1661 = vsel %vm1326, %v1657, 0
        %v1664 = vsel %vm1326, %v1659, 0
        %1666 = vmatprep.subr.bf16.mxu0 0
        %1667 = vmatpush1.bf16.xpose.msra.mxu0 0
        %1668 = vmatprep.subr.bf16.mxu0 0
        %1669 = vmatpush1.bf16.xpose.msra.mxu0 0
        %1670 = vmatprep.subr.bf16.mxu0 0
        %1671 = vmatpush1.bf16.xpose.msra.mxu0 0
        %1672 = vmatprep.subr.bf16.mxu0 0
        %1673 = vmatpush1.bf16.xpose.msra.mxu0 0
        %1674 = vmatprep.subr.bf16.mxu0 0
        %1675 = vmatpush1.bf16.xpose.msra.mxu0 0
        %1676 = vmatprep.subr.bf16.mxu0 0
        %1677 = vmatpush1.bf16.xpose.msra.mxu0 0
        %1678 = vmatprep.subr.bf16.mxu0 0
        %1679 = vmatpush1.bf16.xpose.msra.mxu0 0
        %1680 = vmatprep.subr.bf16.mxu0 0
        %1681 = vmatpush1.bf16.xpose.msra.mxu0 %v1664
        %1682 = vmatprep.subr.bf16.mxu0 0
        %1683 = vmatpush2.bf16.xpose.msra.mxu0 0
        %1684 = vmatprep.subr.bf16.mxu0 0
        %1685 = vmatpush2.bf16.xpose.msra.mxu0 0
        %1686 = vmatprep.subr.bf16.mxu0 0
        %1687 = vmatpush2.bf16.xpose.msra.mxu0 0
        %1688 = vmatprep.subr.bf16.mxu0 0
        %1689 = vmatpush2.bf16.xpose.msra.mxu0 0
        %1690 = vmatprep.subr.bf16.mxu0 0
        %1691 = vmatpush2.bf16.xpose.msra.mxu0 0
        %1692 = vmatprep.subr.bf16.mxu0 0
        %1693 = vmatpush2.bf16.xpose.msra.mxu0 0
        %1694 = vmatprep.subr.bf16.mxu0 0
        %1695 = vmatpush2.bf16.xpose.msra.mxu0 0
        %1696 = vmatprep.subr.bf16.mxu0 0
        %1697 = vmatpush2.bf16.xpose.msra.mxu0 0
        %1698 = vmatprep.mubr.bf16.mxu0 0
        %1699 = vmatmul.mubr.bf16.gmra.mxu0 %v1661
        %v1700 = vpop.f32.mrf.mxu0
        %v1701 = vadd.f32 %v1325, %v1700
        %v1702 = vpop.f32.mrf.mxu0
        %v1703 = vpop.f32.mrf.mxu0
        %v1704 = vpop.f32.mrf.mxu0
        %1705 = vdwg.mxu0
        %v1706 = vsel %vm1373, %v1701, -inf
        %1707 = vmax.xlane.f32.xlu0 %v1706
        %v1708 = vpop.xlane.xlu0 %1707
        %v1709 = vsub.f32 %v1701, %v1708
        %v1710 = vmul.f32 %v1709, 1.442695
        %v1711 = vpow.pop %v1710
        %v1712 = vsel %vm1373, %v1711, 0.0
        %1713 = vadd.xlane.f32.xlu0 %v1712
        %v1714 = vpop.xlane.xlu0 %1713
        %v1715 = vrcp.pop %v1714
        %v1716 = vmul.f32 %v1711, %v1715
        %v1717 = vpack.c.bf16 %v1716, %v1716
        %1718 = vrot.lane.b32.xlu0 %v1315, 32
        %v1719 = vpop.permute.xlu0 %1718
        %v1721 = vsel %vm1373, %v1717, 0
        %v1724 = vsel %vm1389, %v1719, 0
        %1726 = vmatprep.subr.bf16.mxu0 0
        %1727 = vmatpush1.bf16.msra.mxu0 0
        %1728 = vmatprep.subr.bf16.mxu0 0
        %1729 = vmatpush1.bf16.msra.mxu0 0
        %1730 = vmatprep.subr.bf16.mxu0 0
        %1731 = vmatpush1.bf16.msra.mxu0 0
        %1732 = vmatprep.subr.bf16.mxu0 0
        %1733 = vmatpush1.bf16.msra.mxu0 0
        %1734 = vmatprep.subr.bf16.mxu0 0
        %1735 = vmatpush1.bf16.msra.mxu0 0
        %1736 = vmatprep.subr.bf16.mxu0 0
        %1737 = vmatpush1.bf16.msra.mxu0 0
        %1738 = vmatprep.subr.bf16.mxu0 0
        %1739 = vmatpush1.bf16.msra.mxu0 0
        %1740 = vmatprep.subr.bf16.mxu0 0
        %1741 = vmatpush1.bf16.msra.mxu0 %v1724
        %1742 = vmatprep.subr.bf16.mxu0 0
        %1743 = vmatpush2.bf16.msra.mxu0 0
        %1744 = vmatprep.subr.bf16.mxu0 0
        %1745 = vmatpush2.bf16.msra.mxu0 0
        %1746 = vmatprep.subr.bf16.mxu0 0
        %1747 = vmatpush2.bf16.msra.mxu0 0
        %1748 = vmatprep.subr.bf16.mxu0 0
        %1749 = vmatpush2.bf16.msra.mxu0 0
        %1750 = vmatprep.subr.bf16.mxu0 0
        %1751 = vmatpush2.bf16.msra.mxu0 0
        %1752 = vmatprep.subr.bf16.mxu0 0
        %1753 = vmatpush2.bf16.msra.mxu0 0
        %1754 = vmatprep.subr.bf16.mxu0 0
        %1755 = vmatpush2.bf16.msra.mxu0 0
        %1756 = vmatprep.subr.bf16.mxu0 0
        %1757 = vmatpush2.bf16.msra.mxu0 0
        %1758 = vmatprep.mubr.bf16.mxu0 0
        %1759 = vmatmul.mubr.bf16.gmra.mxu0 %v1721
        %v1760 = vpop.f32.mrf.mxu0
        %v1761 = vadd.f32 0.0, %v1760
        %v1762 = vpop.f32.mrf.mxu0
        %v1763 = vpop.f32.mrf.mxu0
        %v1764 = vpop.f32.mrf.mxu0
        %1765 = vdwg.mxu0
        %1767 = vrot.lane.b32.xlu0 %v1541, 32
        %v1768 = vpop.permute.xlu0 %1767
        %1771 = vrot.lane.b32.xlu0 %v1651, 64
        %v1772 = vpop.permute.xlu0 %1771
        %1775 = vrot.lane.b32.xlu0 %v1761, 96
        %v1776 = vpop.permute.xlu0 %1775
        %v1778 = vsel %vm1326, %v1428, %v1768
        %vm1779 = vcmask 523264
        %v1780 = vsel %vm1779, %v1778, %v1772
        %vm1781 = vcmask 785408
        %v1782 = vsel %vm1781, %v1780, %v1776
        %v1783 = vpack.c.bf16 %v1782, %v1782
        %v1784 = vld [vmem:[%s717] sm:$0xf]
        %v1785 = vld [vmem:[%s717 + $0x4] sm:$0xf]
        %v1786 = vld [vmem:[%s717 + $0x8] sm:$0xf]
        %v1787 = vld [vmem:[%s717 + $0xc] sm:$0xf]
        %v1788 = vld [vmem:[%s717 + $0x10] sm:$0xf]
        %v1789 = vld [vmem:[%s717 + $0x14] sm:$0xf]
        %v1790 = vld [vmem:[%s717 + $0x18] sm:$0xf]
        %v1791 = vld [vmem:[%s717 + $0x1c] sm:$0xf]
        %v1792 = vld [vmem:[%s717 + $0x20] sm:$0xf]
        %v1793 = vld [vmem:[%s717 + $0x24] sm:$0xf]
        %v1794 = vld [vmem:[%s717 + $0x28] sm:$0xf]
        %v1795 = vld [vmem:[%s717 + $0x2c] sm:$0xf]
        %v1796 = vld [vmem:[%s717 + $0x30] sm:$0xf]
        %v1797 = vld [vmem:[%s717 + $0x34] sm:$0xf]
        %v1798 = vld [vmem:[%s717 + $0x38] sm:$0xf]
        %v1799 = vld [vmem:[%s717 + $0x3c] sm:$0xf]
        %v1816 = vunpack.c.l.b16 %v1784
        %v1817 = vunpack.c.l.b16 %v1785
        %v1818 = vunpack.c.l.b16 %v1786
        %v1819 = vunpack.c.l.b16 %v1787
        %v1820 = vunpack.c.l.b16 %v1788
        %v1821 = vunpack.c.l.b16 %v1789
        %v1822 = vunpack.c.l.b16 %v1790
        %v1823 = vunpack.c.l.b16 %v1791
        %v1824 = vunpack.c.l.b16 %v1792
        %v1825 = vunpack.c.l.b16 %v1793
        %v1826 = vunpack.c.l.b16 %v1794
        %v1827 = vunpack.c.l.b16 %v1795
        %v1828 = vunpack.c.l.b16 %v1796
        %v1829 = vunpack.c.l.b16 %v1797
        %v1830 = vunpack.c.l.b16 %v1798
        %v1831 = vunpack.c.l.b16 %v1799
        %v1832 = vpack.c.b16 %v1817, %v1816
        %v1833 = vpack.c.b16 %v1819, %v1818
        %v1834 = vpack.c.b16 %v1821, %v1820
        %v1835 = vpack.c.b16 %v1823, %v1822
        %v1836 = vpack.c.b16 %v1825, %v1824
        %v1837 = vpack.c.b16 %v1827, %v1826
        %v1838 = vpack.c.b16 %v1829, %v1828
        %v1839 = vpack.c.b16 %v1831, %v1830
        %1848 = vmatprep.subr.bf16.mxu0 0
        %1849 = vmatpush1.bf16.msra.mxu0 %v1839
        %1850 = vmatprep.subr.bf16.mxu0 0
        %1851 = vmatpush1.bf16.msra.mxu0 %v1838
        %1852 = vmatprep.subr.bf16.mxu0 0
        %1853 = vmatpush1.bf16.msra.mxu0 %v1837
        %1854 = vmatprep.subr.bf16.mxu0 0
        %1855 = vmatpush1.bf16.msra.mxu0 %v1836
        %1856 = vmatprep.subr.bf16.mxu0 0
        %1857 = vmatpush1.bf16.msra.mxu0 %v1835
        %1858 = vmatprep.subr.bf16.mxu0 0
        %1859 = vmatpush1.bf16.msra.mxu0 %v1834
        %1860 = vmatprep.subr.bf16.mxu0 0
        %1861 = vmatpush1.bf16.msra.mxu0 %v1833
        %1862 = vmatprep.subr.bf16.mxu0 0
        %1863 = vmatpush1.bf16.msra.mxu0 %v1832
        %1864 = vmatprep.subr.bf16.mxu0 0
        %1865 = vmatpush2.bf16.msra.mxu0 0
        %1866 = vmatprep.subr.bf16.mxu0 0
        %1867 = vmatpush2.bf16.msra.mxu0 0
        %1868 = vmatprep.subr.bf16.mxu0 0
        %1869 = vmatpush2.bf16.msra.mxu0 0
        %1870 = vmatprep.subr.bf16.mxu0 0
        %1871 = vmatpush2.bf16.msra.mxu0 0
        %1872 = vmatprep.subr.bf16.mxu0 0
        %1873 = vmatpush2.bf16.msra.mxu0 0
        %1874 = vmatprep.subr.bf16.mxu0 0
        %1875 = vmatpush2.bf16.msra.mxu0 0
        %1876 = vmatprep.subr.bf16.mxu0 0
        %1877 = vmatpush2.bf16.msra.mxu0 0
        %1878 = vmatprep.subr.bf16.mxu0 0
        %1879 = vmatpush2.bf16.msra.mxu0 0
        %1880 = vmatprep.mubr.bf16.mxu0 0
        %1881 = vmatmul.mubr.bf16.gmra.mxu0 %v1783
        %v1882 = vpop.f32.mrf.mxu0
        %v1883 = vadd.f32 0.0, %v1882
        %v1884 = vpop.f32.mrf.mxu0
        %v1885 = vpop.f32.mrf.mxu0
        %v1886 = vpop.f32.mrf.mxu0
        %1887 = vdwg.mxu0
        %v1888 = vadd.f32 %v856, %v1883
        %v1889 = vld [vmem:[%s844] sm:$0x1]
        %v1890 = vunpack.c.l.bf16 %v1889
        %v1891 = vmul.f32 %v1888, %v1888
        %1892 = vadd.xlane.f32.xlu0 %v1891
        %v1893 = vpop.xlane.xlu0 %1892
        %v1894 = vmul.f32 %v1893, %v862
        %v1895 = vadd.f32 %v1894, 1e-06
        %v1896 = vrsqrt.pop %v1895
        %v1897 = vmul.f32 %v1888, %v1896
        %v1898 = vlaneseq
        %v1899 = vshrl.u32 %v1898, 7
        %v1900 = vsub.s32 0, %v1899
        %v1901 = vrot.slane %v1890, %v1900
        %v1902 = vmul.f32 %v1897, %v1901
        %v1903 = vpack.c.bf16 %v1902, %v1902
        %v1904 = vld [vmem:[%s726] sm:$0xff]
        %v1905 = vld [vmem:[%s726 + $0x8] sm:$0xff]
        %v1906 = vld [vmem:[%s726 + $0x10] sm:$0xff]
        %v1907 = vld [vmem:[%s726 + $0x18] sm:$0xff]
        %v1908 = vld [vmem:[%s726 + $0x20] sm:$0xff]
        %v1909 = vld [vmem:[%s726 + $0x28] sm:$0xff]
        %v1910 = vld [vmem:[%s726 + $0x30] sm:$0xff]
        %v1911 = vld [vmem:[%s726 + $0x38] sm:$0xff]
        %v1912 = vld [vmem:[%s726 + $0x40] sm:$0xff]
        %v1913 = vld [vmem:[%s726 + $0x48] sm:$0xff]
        %v1914 = vld [vmem:[%s726 + $0x50] sm:$0xff]
        %v1915 = vld [vmem:[%s726 + $0x58] sm:$0xff]
        %v1916 = vld [vmem:[%s726 + $0x60] sm:$0xff]
        %v1917 = vld [vmem:[%s726 + $0x68] sm:$0xff]
        %v1918 = vld [vmem:[%s726 + $0x70] sm:$0xff]
        %v1919 = vld [vmem:[%s726 + $0x78] sm:$0xff]
        %v1920 = vld [vmem:[%s726 + $0x80] sm:$0xff]
        %v1921 = vld [vmem:[%s726 + $0x88] sm:$0xff]
        %v1922 = vld [vmem:[%s726 + $0x90] sm:$0xff]
        %v1923 = vld [vmem:[%s726 + $0x98] sm:$0xff]
        %v1924 = vld [vmem:[%s726 + $0xa0] sm:$0xff]
        %v1925 = vld [vmem:[%s726 + $0xa8] sm:$0xff]
        %v1926 = vld [vmem:[%s726 + $0xb0] sm:$0xff]
        %v1927 = vld [vmem:[%s726 + $0xb8] sm:$0xff]
        %v1928 = vld [vmem:[%s726 + $0xc0] sm:$0xff]
        %v1929 = vld [vmem:[%s726 + $0xc8] sm:$0xff]
        %v1930 = vld [vmem:[%s726 + $0xd0] sm:$0xff]
        %v1931 = vld [vmem:[%s726 + $0xd8] sm:$0xff]
        %v1932 = vld [vmem:[%s726 + $0xe0] sm:$0xff]
        %v1933 = vld [vmem:[%s726 + $0xe8] sm:$0xff]
        %v1934 = vld [vmem:[%s726 + $0xf0] sm:$0xff]
        %v1935 = vld [vmem:[%s726 + $0xf8] sm:$0xff]
        %v1968 = vunpack.c.l.b16 %v1904
        %v1969 = vunpack.c.h.b16 %v1904
        %v1970 = vunpack.c.l.b16 %v1905
        %v1971 = vunpack.c.h.b16 %v1905
        %v1972 = vunpack.c.l.b16 %v1906
        %v1973 = vunpack.c.h.b16 %v1906
        %v1974 = vunpack.c.l.b16 %v1907
        %v1975 = vunpack.c.h.b16 %v1907
        %v1976 = vunpack.c.l.b16 %v1908
        %v1977 = vunpack.c.h.b16 %v1908
        %v1978 = vunpack.c.l.b16 %v1909
        %v1979 = vunpack.c.h.b16 %v1909
        %v1980 = vunpack.c.l.b16 %v1910
        %v1981 = vunpack.c.h.b16 %v1910
        %v1982 = vunpack.c.l.b16 %v1911
        %v1983 = vunpack.c.h.b16 %v1911
        %v1984 = vunpack.c.l.b16 %v1912
        %v1985 = vunpack.c.h.b16 %v1912
        %v1986 = vunpack.c.l.b16 %v1913
        %v1987 = vunpack.c.h.b16 %v1913
        %v1988 = vunpack.c.l.b16 %v1914
        %v1989 = vunpack.c.h.b16 %v1914
        %v1990 = vunpack.c.l.b16 %v1915
        %v1991 = vunpack.c.h.b16 %v1915
        %v1992 = vunpack.c.l.b16 %v1916
        %v1993 = vunpack.c.h.b16 %v1916
        %v1994 = vunpack.c.l.b16 %v1917
        %v1995 = vunpack.c.h.b16 %v1917
        %v1996 = vunpack.c.l.b16 %v1918
        %v1997 = vunpack.c.h.b16 %v1918
        %v1998 = vunpack.c.l.b16 %v1919
        %v1999 = vunpack.c.h.b16 %v1919
        %v2000 = vunpack.c.l.b16 %v1920
        %v2001 = vunpack.c.h.b16 %v1920
        %v2002 = vunpack.c.l.b16 %v1921
        %v2003 = vunpack.c.h.b16 %v1921
        %v2004 = vunpack.c.l.b16 %v1922
        %v2005 = vunpack.c.h.b16 %v1922
        %v2006 = vunpack.c.l.b16 %v1923
        %v2007 = vunpack.c.h.b16 %v1923
        %v2008 = vunpack.c.l.b16 %v1924
        %v2009 = vunpack.c.h.b16 %v1924
        %v2010 = vunpack.c.l.b16 %v1925
        %v2011 = vunpack.c.h.b16 %v1925
        %v2012 = vunpack.c.l.b16 %v1926
        %v2013 = vunpack.c.h.b16 %v1926
        %v2014 = vunpack.c.l.b16 %v1927
        %v2015 = vunpack.c.h.b16 %v1927
        %v2016 = vunpack.c.l.b16 %v1928
        %v2017 = vunpack.c.h.b16 %v1928
        %v2018 = vunpack.c.l.b16 %v1929
        %v2019 = vunpack.c.h.b16 %v1929
        %v2020 = vunpack.c.l.b16 %v1930
        %v2021 = vunpack.c.h.b16 %v1930
        %v2022 = vunpack.c.l.b16 %v1931
        %v2023 = vunpack.c.h.b16 %v1931
        %v2024 = vunpack.c.l.b16 %v1932
        %v2025 = vunpack.c.h.b16 %v1932
        %v2026 = vunpack.c.l.b16 %v1933
        %v2027 = vunpack.c.h.b16 %v1933
        %v2028 = vunpack.c.l.b16 %v1934
        %v2029 = vunpack.c.h.b16 %v1934
        %v2030 = vunpack.c.l.b16 %v1935
        %v2031 = vunpack.c.h.b16 %v1935
        %v2032 = vpack.c.b16 %v1972, %v1968
        %v2033 = vpack.c.b16 %v1973, %v1969
        %v2034 = vpack.c.b16 %v1974, %v1970
        %v2035 = vpack.c.b16 %v1975, %v1971
        %v2036 = vpack.c.b16 %v1980, %v1976
        %v2037 = vpack.c.b16 %v1981, %v1977
        %v2038 = vpack.c.b16 %v1982, %v1978
        %v2039 = vpack.c.b16 %v1983, %v1979
        %v2040 = vpack.c.b16 %v1988, %v1984
        %v2041 = vpack.c.b16 %v1989, %v1985
        %v2042 = vpack.c.b16 %v1990, %v1986
        %v2043 = vpack.c.b16 %v1991, %v1987
        %v2044 = vpack.c.b16 %v1996, %v1992
        %v2045 = vpack.c.b16 %v1997, %v1993
        %v2046 = vpack.c.b16 %v1998, %v1994
        %v2047 = vpack.c.b16 %v1999, %v1995
        %v2048 = vpack.c.b16 %v2004, %v2000
        %v2049 = vpack.c.b16 %v2005, %v2001
        %v2050 = vpack.c.b16 %v2006, %v2002
        %v2051 = vpack.c.b16 %v2007, %v2003
        %v2052 = vpack.c.b16 %v2012, %v2008
        %v2053 = vpack.c.b16 %v2013, %v2009
        %v2054 = vpack.c.b16 %v2014, %v2010
        %v2055 = vpack.c.b16 %v2015, %v2011
        %v2056 = vpack.c.b16 %v2020, %v2016
        %v2057 = vpack.c.b16 %v2021, %v2017
        %v2058 = vpack.c.b16 %v2022, %v2018
        %v2059 = vpack.c.b16 %v2023, %v2019
        %v2060 = vpack.c.b16 %v2028, %v2024
        %v2061 = vpack.c.b16 %v2029, %v2025
        %v2062 = vpack.c.b16 %v2030, %v2026
        %v2063 = vpack.c.b16 %v2031, %v2027
        %2096 = vmatprep.subr.bf16.mxu0 %v2061
        %2097 = vmatpush1.bf16.msra.mxu0 %v2060
        %2098 = vmatprep.subr.bf16.mxu0 %v2057
        %2099 = vmatpush1.bf16.msra.mxu0 %v2056
        %2100 = vmatprep.subr.bf16.mxu0 %v2053
        %2101 = vmatpush1.bf16.msra.mxu0 %v2052
        %2102 = vmatprep.subr.bf16.mxu0 %v2049
        %2103 = vmatpush1.bf16.msra.mxu0 %v2048
        %2104 = vmatprep.subr.bf16.mxu0 %v2045
        %2105 = vmatpush1.bf16.msra.mxu0 %v2044
        %2106 = vmatprep.subr.bf16.mxu0 %v2041
        %2107 = vmatpush1.bf16.msra.mxu0 %v2040
        %2108 = vmatprep.subr.bf16.mxu0 %v2037
        %2109 = vmatpush1.bf16.msra.mxu0 %v2036
        %2110 = vmatprep.subr.bf16.mxu0 %v2033
        %2111 = vmatpush1.bf16.msra.mxu0 %v2032
        %2112 = vmatprep.subr.bf16.mxu0 0
        %2113 = vmatpush2.bf16.msra.mxu0 0
        %2114 = vmatprep.subr.bf16.mxu0 0
        %2115 = vmatpush2.bf16.msra.mxu0 0
        %2116 = vmatprep.subr.bf16.mxu0 0
        %2117 = vmatpush2.bf16.msra.mxu0 0
        %2118 = vmatprep.subr.bf16.mxu0 0
        %2119 = vmatpush2.bf16.msra.mxu0 0
        %2120 = vmatprep.subr.bf16.mxu0 0
        %2121 = vmatpush2.bf16.msra.mxu0 0
        %2122 = vmatprep.subr.bf16.mxu0 0
        %2123 = vmatpush2.bf16.msra.mxu0 0
        %2124 = vmatprep.subr.bf16.mxu0 0
        %2125 = vmatpush2.bf16.msra.mxu0 0
        %2126 = vmatprep.subr.bf16.mxu0 0
        %2127 = vmatpush2.bf16.msra.mxu0 0
        %2128 = vmatprep.mubr.bf16.mxu0 0
        %2129 = vmatmul.mubr.bf16.gmra.mxu0 %v1903
        %v2130 = vpop.f32.mrf.mxu0
        %v2131 = vadd.f32 0.0, %v2130
        %v2132 = vpop.f32.mrf.mxu0
        %v2133 = vadd.f32 0.0, %v2132
        %v2134 = vpop.f32.mrf.mxu0
        %v2135 = vpop.f32.mrf.mxu0
        %2136 = vdwg.mxu0
        %2137 = vmatprep.subr.bf16.mxu0 %v2063
        %2138 = vmatpush1.bf16.msra.mxu0 %v2062
        %2139 = vmatprep.subr.bf16.mxu0 %v2059
        %2140 = vmatpush1.bf16.msra.mxu0 %v2058
        %2141 = vmatprep.subr.bf16.mxu0 %v2055
        %2142 = vmatpush1.bf16.msra.mxu0 %v2054
        %2143 = vmatprep.subr.bf16.mxu0 %v2051
        %2144 = vmatpush1.bf16.msra.mxu0 %v2050
        %2145 = vmatprep.subr.bf16.mxu0 %v2047
        %2146 = vmatpush1.bf16.msra.mxu0 %v2046
        %2147 = vmatprep.subr.bf16.mxu0 %v2043
        %2148 = vmatpush1.bf16.msra.mxu0 %v2042
        %2149 = vmatprep.subr.bf16.mxu0 %v2039
        %2150 = vmatpush1.bf16.msra.mxu0 %v2038
        %2151 = vmatprep.subr.bf16.mxu0 %v2035
        %2152 = vmatpush1.bf16.msra.mxu0 %v2034
        %2153 = vmatprep.subr.bf16.mxu0 0
        %2154 = vmatpush2.bf16.msra.mxu0 0
        %2155 = vmatprep.subr.bf16.mxu0 0
        %2156 = vmatpush2.bf16.msra.mxu0 0
        %2157 = vmatprep.subr.bf16.mxu0 0
        %2158 = vmatpush2.bf16.msra.mxu0 0
        %2159 = vmatprep.subr.bf16.mxu0 0
        %2160 = vmatpush2.bf16.msra.mxu0 0
        %2161 = vmatprep.subr.bf16.mxu0 0
        %2162 = vmatpush2.bf16.msra.mxu0 0
        %2163 = vmatprep.subr.bf16.mxu0 0
        %2164 = vmatpush2.bf16.msra.mxu0 0
        %2165 = vmatprep.subr.bf16.mxu0 0
        %2166 = vmatpush2.bf16.msra.mxu0 0
        %2167 = vmatprep.subr.bf16.mxu0 0
        %2168 = vmatpush2.bf16.msra.mxu0 0
        %2169 = vmatprep.mubr.bf16.mxu0 0
        %2170 = vmatmul.mubr.bf16.gmra.mxu0 %v1903
        %v2171 = vpop.f32.mrf.mxu0
        %v2172 = vadd.f32 0.0, %v2171
        %v2173 = vpop.f32.mrf.mxu0
        %v2174 = vadd.f32 0.0, %v2173
        %v2175 = vpop.f32.mrf.mxu0
        %v2176 = vpop.f32.mrf.mxu0
        %2177 = vdwg.mxu0
        %v2178 = vxor.u32 %v2131, 2147483648
        %v2179 = vxor.u32 %v2133, 2147483648
        %v2180 = vmul.f32 %v2178, 1.442695
        %v2181 = vpow.pop %v2180
        %v2182 = vmul.f32 %v2179, 1.442695
        %v2183 = vpow.pop %v2182
        %v2184 = vadd.f32 %v2181, 1.0
        %v2185 = vadd.f32 %v2183, 1.0
        %v2186 = vrcp.pop %v2184
        %v2187 = vmul.f32 1.0, %v2186
        %v2188 = vrcp.pop %v2185
        %v2189 = vmul.f32 1.0, %v2188
        %v2190 = vmul.f32 %v2131, %v2187
        %v2191 = vmul.f32 %v2133, %v2189
        %v2192 = vmul.f32 %v2190, %v2172
        %v2193 = vmul.f32 %v2191, %v2174
        %v2194 = vpack.c.bf16 %v2192, %v2192
        %v2195 = vpack.c.bf16 %v2193, %v2193
        %v2196 = vld [vmem:[%s735] sm:$0xf]
        %v2197 = vld [vmem:[%s735 + $0x4] sm:$0xf]
        %v2198 = vld [vmem:[%s735 + $0x8] sm:$0xf]
        %v2199 = vld [vmem:[%s735 + $0xc] sm:$0xf]
        %v2200 = vld [vmem:[%s735 + $0x10] sm:$0xf]
        %v2201 = vld [vmem:[%s735 + $0x14] sm:$0xf]
        %v2202 = vld [vmem:[%s735 + $0x18] sm:$0xf]
        %v2203 = vld [vmem:[%s735 + $0x1c] sm:$0xf]
        %v2204 = vld [vmem:[%s735 + $0x20] sm:$0xf]
        %v2205 = vld [vmem:[%s735 + $0x24] sm:$0xf]
        %v2206 = vld [vmem:[%s735 + $0x28] sm:$0xf]
        %v2207 = vld [vmem:[%s735 + $0x2c] sm:$0xf]
        %v2208 = vld [vmem:[%s735 + $0x30] sm:$0xf]
        %v2209 = vld [vmem:[%s735 + $0x34] sm:$0xf]
        %v2210 = vld [vmem:[%s735 + $0x38] sm:$0xf]
        %v2211 = vld [vmem:[%s735 + $0x3c] sm:$0xf]
        %v2212 = vld [vmem:[%s735 + $0x40] sm:$0xf]
        %v2213 = vld [vmem:[%s735 + $0x44] sm:$0xf]
        %v2214 = vld [vmem:[%s735 + $0x48] sm:$0xf]
        %v2215 = vld [vmem:[%s735 + $0x4c] sm:$0xf]
        %v2216 = vld [vmem:[%s735 + $0x50] sm:$0xf]
        %v2217 = vld [vmem:[%s735 + $0x54] sm:$0xf]
        %v2218 = vld [vmem:[%s735 + $0x58] sm:$0xf]
        %v2219 = vld [vmem:[%s735 + $0x5c] sm:$0xf]
        %v2220 = vld [vmem:[%s735 + $0x60] sm:$0xf]
        %v2221 = vld [vmem:[%s735 + $0x64] sm:$0xf]
        %v2222 = vld [vmem:[%s735 + $0x68] sm:$0xf]
        %v2223 = vld [vmem:[%s735 + $0x6c] sm:$0xf]
        %v2224 = vld [vmem:[%s735 + $0x70] sm:$0xf]
        %v2225 = vld [vmem:[%s735 + $0x74] sm:$0xf]
        %v2226 = vld [vmem:[%s735 + $0x78] sm:$0xf]
        %v2227 = vld [vmem:[%s735 + $0x7c] sm:$0xf]
        %v2260 = vunpack.c.l.b16 %v2196
        %v2261 = vunpack.c.l.b16 %v2197
        %v2262 = vunpack.c.l.b16 %v2198
        %v2263 = vunpack.c.l.b16 %v2199
        %v2264 = vunpack.c.l.b16 %v2200
        %v2265 = vunpack.c.l.b16 %v2201
        %v2266 = vunpack.c.l.b16 %v2202
        %v2267 = vunpack.c.l.b16 %v2203
        %v2268 = vunpack.c.l.b16 %v2204
        %v2269 = vunpack.c.l.b16 %v2205
        %v2270 = vunpack.c.l.b16 %v2206
        %v2271 = vunpack.c.l.b16 %v2207
        %v2272 = vunpack.c.l.b16 %v2208
        %v2273 = vunpack.c.l.b16 %v2209
        %v2274 = vunpack.c.l.b16 %v2210
        %v2275 = vunpack.c.l.b16 %v2211
        %v2276 = vunpack.c.l.b16 %v2212
        %v2277 = vunpack.c.l.b16 %v2213
        %v2278 = vunpack.c.l.b16 %v2214
        %v2279 = vunpack.c.l.b16 %v2215
        %v2280 = vunpack.c.l.b16 %v2216
        %v2281 = vunpack.c.l.b16 %v2217
        %v2282 = vunpack.c.l.b16 %v2218
        %v2283 = vunpack.c.l.b16 %v2219
        %v2284 = vunpack.c.l.b16 %v2220
        %v2285 = vunpack.c.l.b16 %v2221
        %v2286 = vunpack.c.l.b16 %v2222
        %v2287 = vunpack.c.l.b16 %v2223
        %v2288 = vunpack.c.l.b16 %v2224
        %v2289 = vunpack.c.l.b16 %v2225
        %v2290 = vunpack.c.l.b16 %v2226
        %v2291 = vunpack.c.l.b16 %v2227
        %v2292 = vpack.c.b16 %v2261, %v2260
        %v2293 = vpack.c.b16 %v2263, %v2262
        %v2294 = vpack.c.b16 %v2265, %v2264
        %v2295 = vpack.c.b16 %v2267, %v2266
        %v2296 = vpack.c.b16 %v2269, %v2268
        %v2297 = vpack.c.b16 %v2271, %v2270
        %v2298 = vpack.c.b16 %v2273, %v2272
        %v2299 = vpack.c.b16 %v2275, %v2274
        %v2300 = vpack.c.b16 %v2277, %v2276
        %v2301 = vpack.c.b16 %v2279, %v2278
        %v2302 = vpack.c.b16 %v2281, %v2280
        %v2303 = vpack.c.b16 %v2283, %v2282
        %v2304 = vpack.c.b16 %v2285, %v2284
        %v2305 = vpack.c.b16 %v2287, %v2286
        %v2306 = vpack.c.b16 %v2289, %v2288
        %v2307 = vpack.c.b16 %v2291, %v2290
        %2324 = vmatprep.subr.bf16.mxu0 0
        %2325 = vmatpush1.bf16.msra.mxu0 %v2299
        %2326 = vmatprep.subr.bf16.mxu0 0
        %2327 = vmatpush1.bf16.msra.mxu0 %v2298
        %2328 = vmatprep.subr.bf16.mxu0 0
        %2329 = vmatpush1.bf16.msra.mxu0 %v2297
        %2330 = vmatprep.subr.bf16.mxu0 0
        %2331 = vmatpush1.bf16.msra.mxu0 %v2296
        %2332 = vmatprep.subr.bf16.mxu0 0
        %2333 = vmatpush1.bf16.msra.mxu0 %v2295
        %2334 = vmatprep.subr.bf16.mxu0 0
        %2335 = vmatpush1.bf16.msra.mxu0 %v2294
        %2336 = vmatprep.subr.bf16.mxu0 0
        %2337 = vmatpush1.bf16.msra.mxu0 %v2293
        %2338 = vmatprep.subr.bf16.mxu0 0
        %2339 = vmatpush1.bf16.msra.mxu0 %v2292
        %2340 = vmatprep.subr.bf16.mxu0 0
        %2341 = vmatpush2.bf16.msra.mxu0 %v2307
        %2342 = vmatprep.subr.bf16.mxu0 0
        %2343 = vmatpush2.bf16.msra.mxu0 %v2306
        %2344 = vmatprep.subr.bf16.mxu0 0
        %2345 = vmatpush2.bf16.msra.mxu0 %v2305
        %2346 = vmatprep.subr.bf16.mxu0 0
        %2347 = vmatpush2.bf16.msra.mxu0 %v2304
        %2348 = vmatprep.subr.bf16.mxu0 0
        %2349 = vmatpush2.bf16.msra.mxu0 %v2303
        %2350 = vmatprep.subr.bf16.mxu0 0
        %2351 = vmatpush2.bf16.msra.mxu0 %v2302
        %2352 = vmatprep.subr.bf16.mxu0 0
        %2353 = vmatpush2.bf16.msra.mxu0 %v2301
        %2354 = vmatprep.subr.bf16.mxu0 0
        %2355 = vmatpush2.bf16.msra.mxu0 %v2300
        %2356 = vmatprep.mubr.bf16.mxu0 %v2195
        %2357 = vmatmul.mubr.bf16.gmra.mxu0 %v2194
        %v2358 = vpop.f32.mrf.mxu0
        %v2359 = vadd.f32 0.0, %v2358
        %v2360 = vpop.f32.mrf.mxu0
        %v2361 = vpop.f32.mrf.mxu0
        %v2362 = vpop.f32.mrf.mxu0
        %2363 = vdwg.mxu0
        %v2364 = vadd.f32 %v1888, %v2359
        %2365 = vst [vmem:[#allocation2] sm:$0xff] %v2364
        %p2366 = scmp.eq.s32.totalorder %s53, 1
        // Predicated region
        $region133: #{qwen3_forward.1} parent=83 // pred_check
          %p2367 = pneg %p2366
        $region134: #{qwen3_forward.1} parent=83 // pred_check_branch
          %2369 = sbr.rel (%p2367) target = $region136
        $region135: #{qwen3_forward.1} parent=83 // pred_region
          %s2370 = ssub.s32 %s1316, 1
          %v2371 = vstv %s2370
          %vm2372 = vcmp.eq.s32.totalorder %v1318, %v2371
          %v2373 = vsel %vm2372, 1, 0
          %v2374 = vcvt.s32.f32 %v2373
          %v2375 = vmul.f32 %v2364, %v2374
          %v2376 = vrot.slane %v2375, 4
          %v2377 = vadd.f32 %v2375, %v2376
          %v2378 = vrot.slane %v2377, 2
          %v2379 = vadd.f32 %v2377, %v2378
          %v2380 = vrot.slane %v2379, 1
          %v2381 = vadd.f32 %v2379, %v2380
          %v2382 = vmul.f32 %v2381, %v2381
          %2383 = vadd.xlane.f32.xlu0 %v2382
          %v2384 = vpop.xlane.xlu0 %2383
          %v2385 = vmul.f32 %v2384, %v862
          %v2386 = vadd.f32 %v2385, 1e-06
          %v2387 = vrsqrt.pop %v2386
          %v2388 = vmul.f32 %v2381, %v2387
          %v2389 = vld [vmem:[#allocation18] sm:$0x1]
          %v2390 = vmul.f32 %v2388, %v2389
          %v2391 = vpack.c.bf16 %v2390, %v2390
          %v2392 = vld [vmem:[#allocation19] sm:$0xf]
          %v2393 = vld [vmem:[#allocation19 + $0x4] sm:$0xf]
          %v2394 = vld [vmem:[#allocation19 + $0x8] sm:$0xf]
          %v2395 = vld [vmem:[#allocation19 + $0xc] sm:$0xf]
          %v2396 = vld [vmem:[#allocation19 + $0x10] sm:$0xf]
          %v2397 = vld [vmem:[#allocation19 + $0x14] sm:$0xf]
          %v2398 = vld [vmem:[#allocation19 + $0x18] sm:$0xf]
          %v2399 = vld [vmem:[#allocation19 + $0x1c] sm:$0xf]
          %v2400 = vld [vmem:[#allocation19 + $0x20] sm:$0xf]
          %v2401 = vld [vmem:[#allocation19 + $0x24] sm:$0xf]
          %v2402 = vld [vmem:[#allocation19 + $0x28] sm:$0xf]
          %v2403 = vld [vmem:[#allocation19 + $0x2c] sm:$0xf]
          %v2404 = vld [vmem:[#allocation19 + $0x30] sm:$0xf]
          %v2405 = vld [vmem:[#allocation19 + $0x34] sm:$0xf]
          %v2406 = vld [vmem:[#allocation19 + $0x38] sm:$0xf]
          %v2407 = vld [vmem:[#allocation19 + $0x3c] sm:$0xf]
          %v2408 = vld [vmem:[#allocation21] sm:$0x1]
          %v2425 = vunpack.c.l.b16 %v2392
          %v2426 = vunpack.c.l.b16 %v2393
          %v2427 = vunpack.c.l.b16 %v2394
          %v2428 = vunpack.c.l.b16 %v2395
          %v2429 = vunpack.c.l.b16 %v2396
          %v2430 = vunpack.c.l.b16 %v2397
          %v2431 = vunpack.c.l.b16 %v2398
          %v2432 = vunpack.c.l.b16 %v2399
          %v2433 = vunpack.c.l.b16 %v2400
          %v2434 = vunpack.c.l.b16 %v2401
          %v2435 = vunpack.c.l.b16 %v2402
          %v2436 = vunpack.c.l.b16 %v2403
          %v2437 = vunpack.c.l.b16 %v2404
          %v2438 = vunpack.c.l.b16 %v2405
          %v2439 = vunpack.c.l.b16 %v2406
          %v2440 = vunpack.c.l.b16 %v2407
          %v2441 = vpack.c.b16 %v2426, %v2425
          %v2442 = vpack.c.b16 %v2428, %v2427
          %v2443 = vpack.c.b16 %v2430, %v2429
          %v2444 = vpack.c.b16 %v2432, %v2431
          %v2445 = vpack.c.b16 %v2434, %v2433
          %v2446 = vpack.c.b16 %v2436, %v2435
          %v2447 = vpack.c.b16 %v2438, %v2437
          %v2448 = vpack.c.b16 %v2440, %v2439
          %2457 = vmatprep.subr.bf16.mxu0 0
          %2458 = vmatpush1.bf16.msra.mxu0 %v2448
          %2459 = vmatprep.subr.bf16.mxu0 0
          %2460 = vmatpush1.bf16.msra.mxu0 %v2447
          %2461 = vmatprep.subr.bf16.mxu0 0
          %2462 = vmatpush1.bf16.msra.mxu0 %v2446
          %2463 = vmatprep.subr.bf16.mxu0 0
          %2464 = vmatpush1.bf16.msra.mxu0 %v2445
          %2465 = vmatprep.subr.bf16.mxu0 0
          %2466 = vmatpush1.bf16.msra.mxu0 %v2444
          %2467 = vmatprep.subr.bf16.mxu0 0
          %2468 = vmatpush1.bf16.msra.mxu0 %v2443
          %2469 = vmatprep.subr.bf16.mxu0 0
          %2470 = vmatpush1.bf16.msra.mxu0 %v2442
          %2471 = vmatprep.subr.bf16.mxu0 0
          %2472 = vmatpush1.bf16.msra.mxu0 %v2441
          %2473 = vmatprep.subr.bf16.mxu0 0
          %2474 = vmatpush2.bf16.msra.mxu0 0
          %2475 = vmatprep.subr.bf16.mxu0 0
          %2476 = vmatpush2.bf16.msra.mxu0 0
          %2477 = vmatprep.subr.bf16.mxu0 0
          %2478 = vmatpush2.bf16.msra.mxu0 0
          %2479 = vmatprep.subr.bf16.mxu0 0
          %2480 = vmatpush2.bf16.msra.mxu0 0
          %2481 = vmatprep.subr.bf16.mxu0 0
          %2482 = vmatpush2.bf16.msra.mxu0 0
          %2483 = vmatprep.subr.bf16.mxu0 0
          %2484 = vmatpush2.bf16.msra.mxu0 0
          %2485 = vmatprep.subr.bf16.mxu0 0
          %2486 = vmatpush2.bf16.msra.mxu0 0
          %2487 = vmatprep.subr.bf16.mxu0 0
          %2488 = vmatpush2.bf16.msra.mxu0 0
          %2489 = vmatprep.mubr.bf16.mxu0 0
          %2490 = vmatmul.mubr.bf16.gmra.mxu0 %v2391
          %v2491 = vpop.f32.mrf.mxu0
          %v2492 = vadd.f32 %v2408, %v2491
          %v2493 = vpop.f32.mrf.mxu0
          %v2494 = vpop.f32.mrf.mxu0
          %v2495 = vpop.f32.mrf.mxu0
          %2496 = vdwg.mxu0
          %2497 = vst [vmem:[%s847] sm:$0x1] %v2492
        $region136: #{qwen3_forward.1} parent=83 // pred_fallthru
          _
        %p2498 = scmp.lt.s32.totalorder %s52, 1
        %s2499 = scalar_select %p2498, %s52, 1
        %s2500 = scalar_lea.vmem %s17, %s2499
        // Predicated region
        $region137: #{qwen3_forward.1} parent=83 // pred_check
          %p2501 = pneg %p459
        $region138: #{qwen3_forward.1} parent=83 // pred_check_branch
          %2503 = sbr.rel (%p2501) target = $region140
        $region139: #{qwen3_forward.1} parent=83 // pred_region
          _
        $region140: #{qwen3_forward.1} parent=83 // pred_fallthru
          _
      $region84: #{qwen3_forward.1} parent=5 // pred_fallthru
        _
      %p2504 = scmp.le.s32.totalorder 2, %s43
      // Predicated region
      $region141: #{qwen3_forward.1} parent=5 // pred_check
        %p2505 = pneg %p2504
      $region142: #{qwen3_forward.1} parent=5 // pred_check_branch
        %2507 = sbr.rel (%p2505) target = $region144
      $region143: #{qwen3_forward.1} parent=5 // pred_region
        %s2508 = ssub.s32 %s43, 2
        // Predicated region
        $region145: #{qwen3_forward.1} parent=143 // pred_check
          %p2509 = pneg %p465
        $region146: #{qwen3_forward.1} parent=143 // pred_check_branch
          %2511 = sbr.rel (%p2509) target = $region148
        $region147: #{qwen3_forward.1} parent=143 // pred_region
          %p2512 = scmp.lt.s32.totalorder %s54, 1
          %s2513 = scalar_select %p2512, %s54, 1
          %s2514 = scalar_lea.vmem %s17, %s2513
        $region148: #{qwen3_forward.1} parent=143 // pred_fallthru
          _
      $region144: #{qwen3_forward.1} parent=5 // pred_fallthru
        _
    $region6: #{qwen3_forward.1} parent=1 // loop_footer
      %s47 = sadd.s32 1, %s43
    $region7: #{qwen3_forward.1} parent=1 // loop_footer_branch
      %42 = sbr.rel target = $region3
    $region8: #{qwen3_forward.1} parent=1 // loop_exit
      _
    %2515 = vsyncpa [#allocation6], 1
    %s2516 = scalar_lea.sflag [#allocation6], 1
    %2517 = vsyncpa %s2516, 1
    %2518 = vsyncpa [#allocation8], 1
    %s2519 = scalar_lea.sflag [#allocation8], 1
    %2520 = vsyncpa %s2519, 1
    %2521 = vsyncpa [#allocation11], 1
    %s2522 = scalar_lea.sflag [#allocation11], 1
    %2523 = vsyncpa %s2522, 1
    %2524 = vsyncpa [#allocation14], 1
    %s2525 = scalar_lea.sflag [#allocation14], 1
    %2526 = vsyncpa %s2525, 1
    %2527 = vsyncpa [#allocation17], 1
    %2528 = vsyncpa [#allocation20], 1

</llo_original>
